<compile_context>
chip_gen: v7x
topology: tpu7x:2x2x1
jax: 0.10.0
libtpu: 0.0.40
codegen_flags: <defaults>
</compile_context>

<pallas_src>
import functools

import jax
import jax.numpy as jnp
from jax import lax
from jax.experimental import pallas as pl
from jax.experimental.pallas import tpu as pltpu

EPS = 1e-5                      # nn.BatchNorm2d default
ACT_DTYPE = jnp.bfloat16        # inter-layer activation / MXU operand dtype


def _row_tile(h, cap=8):
    """Largest row tile <= cap that divides h and keeps blocks (8,128)-legal
    (a multiple of 8, or the full extent)."""
    for t in range(min(cap, h), 0, -1):
        if h % t == 0 and (t % 8 == 0 or t == h):
            return t
    return h


# ----------------------------- Pallas kernels -----------------------------

def _conv3x3_kernel(*refs, stride, fuse_bn_relu):
    """[optional fused BN-apply + ReLU prologue] -> 3x3 conv (pad=1, stride)
    as ONE im2col MXU matmul (K = 9*Cin, bf16 operands, f32 accumulation)
    -> per-channel sum / sum-of-squares epilogue for the following BatchNorm.

    Grid = (N, Ho // row_tile).  The padded input image is staged once per
    batch element in a VMEM scratch (r == 0), then each step computes one
    tile of output rows.  Stats are per-n (reduced over N on the host)."""
    if fuse_bn_relu:
        x_ref, scale_ref, shift_ref, w_ref, o_ref, stats_ref, xpad_ref = refs
    else:
        x_ref, w_ref, o_ref, stats_ref, xpad_ref = refs
        scale_ref = shift_ref = None

    _, hin, win, cin = x_ref.shape
    _, tho, wo, cout = o_ref.shape
    r = pl.program_id(1)

    @pl.when(r == 0)
    def _per_image_setup():
        # zero per-n stats accumulator; build padded (and optionally
        # BN+ReLU'd) input image in VMEM scratch -- no HBM pad round trip.
        stats_ref[...] = jnp.zeros_like(stats_ref)
        xv = x_ref[0].astype(jnp.float32)                      # (hin, win, cin)
        if fuse_bn_relu:
            # fused BN1-apply + ReLU prologue (per-channel scale/shift, f32)
            xv = jnp.maximum(xv * scale_ref[0] + shift_ref[0], 0.0)
        xv = xv.astype(xpad_ref.dtype)
        zr = jnp.zeros((1, win, cin), xpad_ref.dtype)
        zc = jnp.zeros((hin + 2, 1, cin), xpad_ref.dtype)
        xp = jnp.concatenate([zr, xv, zr], axis=0)             # pad rows
        xp = jnp.concatenate([zc, xp, zc], axis=1)             # pad cols
        xpad_ref[...] = xp

    # padded-input row window needed for this output-row tile
    rows = stride * tho + 2
    start = pl.multiple_of(r * (tho * stride), tho * stride)
    xw = xpad_ref[pl.ds(start, rows), :, :]                    # (rows, win+2, cin)

    # im2col: one (tho*wo, 9*cin) operand -> single MXU matmul.
    cols = []
    for dy in range(3):
        for dx in range(3):
            if stride == 1:
                p = xw[dy:dy + tho, dx:dx + wo, :]
            else:
                # in-kernel strided gather (reshape/slice only; no HBM copies)
                p = xw[dy:dy + stride * tho].reshape(tho, stride, win + 2, cin)[:, 0]
                p = p[:, dx:dx + stride * wo, :].reshape(tho, wo, stride, cin)[:, :, 0, :]
            cols.append(p.reshape(tho * wo, cin))
    patches = jnp.concatenate(cols, axis=-1)                   # (tho*wo, 9*cin) bf16
    acc = jnp.dot(patches, w_ref[...],
                  preferred_element_type=jnp.float32)          # (tho*wo, cout) f32

    # BN statistics epilogue on the f32 accumulator already in VMEM.
    stats_ref[0] = stats_ref[0] + jnp.concatenate(
        [jnp.sum(acc, axis=0, keepdims=True),
         jnp.sum(acc * acc, axis=0, keepdims=True)], axis=0)

    o_ref[0] = acc.reshape(tho, wo, cout).astype(o_ref.dtype)


def _conv1x1_kernel(x_ref, w_ref, o_ref, stats_ref, *, stride):
    """Projection shortcut: 1x1 conv (no bias) + BN statistics epilogue.
    Stride handled in-kernel by subsampling the loaded row block."""
    r = pl.program_id(1)

    @pl.when(r == 0)
    def _():
        stats_ref[...] = jnp.zeros_like(stats_ref)

    _, _, win, cin = x_ref.shape
    _, tho, wo, cout = o_ref.shape

    xv = x_ref[0]
    if stride != 1:
        xv = xv.reshape(tho, stride, win, cin)[:, 0]           # row subsample
        xv = xv.reshape(tho, wo, stride, cin)[:, :, 0, :]      # col subsample
    xb = xv.reshape(tho * wo, cin).astype(ACT_DTYPE)
    acc = jnp.dot(xb, w_ref[...], preferred_element_type=jnp.float32)

    stats_ref[0] = stats_ref[0] + jnp.concatenate(
        [jnp.sum(acc, axis=0, keepdims=True),
         jnp.sum(acc * acc, axis=0, keepdims=True)], axis=0)

    o_ref[0] = acc.reshape(tho, wo, cout).astype(o_ref.dtype)


def _bn_add_relu_kernel(y_ref, s_ref, b_ref, res_ref, o_ref):
    # out = relu(y*scale + shift + residual)   -- identity shortcut
    y = (y_ref[0].astype(jnp.float32) * s_ref[...] + b_ref[...]
         + res_ref[0].astype(jnp.float32))
    o_ref[0] = jnp.maximum(y, 0.0).astype(o_ref.dtype)


def _bn_bn_add_relu_kernel(y_ref, s2_ref, b2_ref, res_ref, ssc_ref, bsc_ref, o_ref):
    # out = relu(bn2(y) + bn_sc(shortcut))     -- projection shortcut
    y = y_ref[0].astype(jnp.float32) * s2_ref[...] + b2_ref[...]
    s = res_ref[0].astype(jnp.float32) * ssc_ref[...] + bsc_ref[...]
    o_ref[0] = jnp.maximum(y + s, 0.0).astype(o_ref.dtype)


# ------------------------------- wrappers ---------------------------------

def conv3x3_stats(x, w_flat, *, cout, stride=1, bn_scale=None, bn_shift=None):
    """3x3 conv (pad=1, no bias) on NHWC input.  Returns
    (y bf16 (N,Ho,Wo,cout), stats f32 (2,cout) = [sum, sum-of-squares] of the
    raw f32 conv output).  If bn_scale/bn_shift are given, the prologue
    relu(x*scale + shift) is applied to the input (BN1+ReLU fused into conv2)."""
    n_batch, hin, win, cin = x.shape
    assert hin % stride == 0 and win % stride == 0
    ho, wo = hin // stride, win // stride
    tho = _row_tile(ho)
    fuse = bn_scale is not None

    img_spec = pl.BlockSpec((1, hin, win, cin), lambda n, r: (n, 0, 0, 0))
    vec_spec = pl.BlockSpec((1, cin), lambda n, r: (0, 0))
    w_spec = pl.BlockSpec((9 * cin, cout), lambda n, r: (0, 0))
    in_specs = [img_spec] + ([vec_spec, vec_spec] if fuse else []) + [w_spec]
    args = [x] + ([bn_scale, bn_shift] if fuse else []) + [w_flat]

    kern = functools.partial(_conv3x3_kernel, stride=stride, fuse_bn_relu=fuse)
    y, stats = pl.pallas_call(
        kern,
        grid=(n_batch, ho // tho),
        in_specs=in_specs,
        out_specs=(pl.BlockSpec((1, tho, wo, cout), lambda n, r: (n, r, 0, 0)),
                   pl.BlockSpec((1, 2, cout), lambda n, r: (n, 0, 0))),
        out_shape=(jax.ShapeDtypeStruct((n_batch, ho, wo, cout), ACT_DTYPE),
                   jax.ShapeDtypeStruct((n_batch, 2, cout), jnp.float32)),
        scratch_shapes=[pltpu.VMEM((hin + 2, win + 2, cin), ACT_DTYPE)],
        compiler_params=pltpu.CompilerParams(
            dimension_semantics=("parallel", "arbitrary")),
    )(*args)
    # TODO(synk): for very large feature maps, switch the full-image VMEM
    # staging to true row-halo blocked DMA and re-derive tiles for v7x 64MiB.
    return y, jnp.sum(stats, axis=0)


def conv1x1_stats(x, w, *, cout, stride=1):
    """1x1 conv (downsample shortcut, no bias) + BN statistics."""
    n_batch, hin, win, cin = x.shape
    assert hin % stride == 0 and win % stride == 0
    ho, wo = hin // stride, win // stride
    tho = _row_tile(ho)
    kern = functools.partial(_conv1x1_kernel, stride=stride)
    y, stats = pl.pallas_call(
        kern,
        grid=(n_batch, ho // tho),
        in_specs=[pl.BlockSpec((1, tho * stride, win, cin), lambda n, r: (n, r, 0, 0)),
                  pl.BlockSpec((cin, cout), lambda n, r: (0, 0))],
        out_specs=(pl.BlockSpec((1, tho, wo, cout), lambda n, r: (n, r, 0, 0)),
                   pl.BlockSpec((1, 2, cout), lambda n, r: (n, 0, 0))),
        out_shape=(jax.ShapeDtypeStruct((n_batch, ho, wo, cout), ACT_DTYPE),
                   jax.ShapeDtypeStruct((n_batch, 2, cout), jnp.float32)),
        compiler_params=pltpu.CompilerParams(
            dimension_semantics=("parallel", "arbitrary")),
    )(x, w)
    return y, jnp.sum(stats, axis=0)


def bn_residual_relu(y, scale, shift, residual, *, sc_scale=None, sc_shift=None):
    """Final fused pass on the lane-dense flattened (N, H, W*C) layout:
    out = relu(bn2(conv2_out) + shortcut), where the shortcut is either the
    raw input (identity) or bn_sc(conv1x1_out) (projection)."""
    n_batch, h, wc = y.shape
    th = _row_tile(h)
    row_spec = pl.BlockSpec((1, th, wc), lambda n, r: (n, r, 0))
    vec_spec = pl.BlockSpec((1, wc), lambda n, r: (0, 0))
    if sc_scale is None:
        kern = _bn_add_relu_kernel
        in_specs = [row_spec, vec_spec, vec_spec, row_spec]
        args = (y, scale, shift, residual)
    else:
        kern = _bn_bn_add_relu_kernel
        in_specs = [row_spec, vec_spec, vec_spec, row_spec, vec_spec, vec_spec]
        args = (y, scale, shift, residual, sc_scale, sc_shift)
    return pl.pallas_call(
        kern,
        grid=(n_batch, h // th),
        in_specs=in_specs,
        out_specs=row_spec,
        out_shape=jax.ShapeDtypeStruct((n_batch, h, wc), jnp.float32),
        compiler_params=pltpu.CompilerParams(
            dimension_semantics=("parallel", "parallel")),
    )(*args)


def _bn_fold(stats, count, gamma, beta):
    """Fold train-mode BatchNorm (batch stats, eps=1e-5) into per-channel
    scale/shift (f32): y = x*scale + shift."""
    mean = stats[0] / count
    # TODO(synk): E[x^2]-E[x]^2 in f32 is fine at these scales; use a two-pass
    # or Welford-style stats kernel for very large activations.
    var = stats[1] / count - mean * mean
    inv = gamma.astype(jnp.float32) * lax.rsqrt(var + EPS)
    return inv, beta.astype(jnp.float32) - mean * inv


def basic_block_forward(x_nchw, params, stride=1):
    """Equivalent of BasicBlock.forward (train-mode BatchNorm). NCHW in/out."""
    n, cin, h, w = x_nchw.shape
    planes = params["g1"].shape[0]
    h1, w1 = h // stride, w // stride

    x = jnp.transpose(x_nchw, (0, 2, 3, 1)).astype(jnp.float32)       # NHWC
    w1_flat = params["w1"].reshape(9 * cin, planes).astype(ACT_DTYPE)  # HWIO -> (9*Cin, Cout)
    w2_flat = params["w2"].reshape(9 * planes, planes).astype(ACT_DTYPE)

    # conv1 (+ BN1 batch statistics fused in the epilogue)
    out1, st1 = conv3x3_stats(x, w1_flat, cout=planes, stride=stride)
    s1, b1 = _bn_fold(st1, n * h1 * w1, params["g1"], params["b1"])

    # BN1-apply + ReLU fused as conv2's prologue; conv2 (+ BN2 statistics)
    out2, st2 = conv3x3_stats(out1, w2_flat, cout=planes, stride=1,
                              bn_scale=s1[None, :], bn_shift=b1[None, :])
    s2, b2 = _bn_fold(st2, n * h1 * w1, params["g2"], params["b2"])

    # shortcut path
    if stride != 1 or cin != planes:
        sc, stsc = conv1x1_stats(x, params["w_sc"].astype(ACT_DTYPE),
                                 cout=planes, stride=stride)
        ssc, bsc = _bn_fold(stsc, n * h1 * w1, params["g_sc"], params["b_sc"])
        res = sc.reshape(n, h1, w1 * planes)
        sc_scale = jnp.tile(ssc, w1)[None, :]
        sc_shift = jnp.tile(bsc, w1)[None, :]
    else:
        res = x.reshape(n, h1, w1 * planes)
        sc_scale = sc_shift = None

    # fused BN2 (+ shortcut BN) + residual + ReLU, lane-dense layout
    out = bn_residual_relu(out2.reshape(n, h1, w1 * planes),
                           jnp.tile(s2, w1)[None, :], jnp.tile(b2, w1)[None, :],
                           res, sc_scale=sc_scale, sc_shift=sc_shift)

    return jnp.transpose(out.reshape(n, h1, w1, planes), (0, 3, 1, 2))


# ------------------------- pure-JAX reference ------------------------------

def _ref_forward(x_nchw, params, stride=1):
    x = jnp.transpose(x_nchw, (0, 2, 3, 1)).astype(jnp.float32)

    def conv(a, wgt, s, pad):
        return lax.conv_general_dilated(
            a, wgt, (s, s), pad, dimension_numbers=("NHWC", "HWIO", "NHWC"))

    def bn(a, g, b):
        m = a.mean(axis=(0, 1, 2))
        v = a.var(axis=(0, 1, 2))
        return (a - m) / jnp.sqrt(v + EPS) * g + b

    out = jax.nn.relu(bn(conv(x, params["w1"], stride, ((1, 1), (1, 1))),
                         params["g1"], params["b1"]))
    out = bn(conv(out, params["w2"], 1, ((1, 1), (1, 1))),
             params["g2"], params["b2"])
    if stride != 1 or x.shape[-1] != params["w1"].shape[-1]:
        sc = bn(conv(x, params["w_sc"][None, None], stride, ((0, 0), (0, 0))),
                params["g_sc"], params["b_sc"])
    else:
        sc = x
    out = jax.nn.relu(out + sc)
    return jnp.transpose(out, (0, 3, 1, 2))


# --------------------------------- main -------------------------------------

if __name__ == "__main__":
    def make_params(key, cin, planes):
        ks = jax.random.split(key, 9)
        p = {
            "w1": 0.1 * jax.random.normal(ks[0], (3, 3, cin, planes), jnp.float32),
            "w2": 0.1 * jax.random.normal(ks[1], (3, 3, planes, planes), jnp.float32),
            "g1": 1.0 + 0.1 * jax.random.normal(ks[2], (planes,), jnp.float32),
            "b1": 0.1 * jax.random.normal(ks[3], (planes,), jnp.float32),
            "g2": 1.0 + 0.1 * jax.random.normal(ks[4], (planes,), jnp.float32),
            "b2": 0.1 * jax.random.normal(ks[5], (planes,), jnp.float32),
        }
        if cin != planes:
            p["w_sc"] = 0.1 * jax.random.normal(ks[6], (cin, planes), jnp.float32)
            p["g_sc"] = 1.0 + 0.1 * jax.random.normal(ks[7], (planes,), jnp.float32)
            p["b_sc"] = 0.1 * jax.random.normal(ks[8], (planes,), jnp.float32)
        return p

    fwd = jax.jit(basic_block_forward, static_argnames="stride")

    key = jax.random.PRNGKey(0)
    kx, kp1, kp2 = jax.random.split(key, 3)
    N, H, W = 2, 16, 16
    x = jax.random.normal(kx, (N, 8, H, W), jnp.float32)       # NCHW input

    # Tolerances reflect bf16 matmul operands + bf16 inter-layer activations
    # (f32 accumulation, f32 BN math) vs. the pure-f32 reference.
    MAX_TOL, MEAN_TOL = 8e-2, 1.5e-2

    # config 1: identity shortcut (stride=1, in_planes == planes)
    params1 = make_params(kp1, 8, 8)
    out_a = jax.block_until_ready(fwd(x, params1, stride=1))
    ref_a = _ref_forward(x, params1, stride=1)
    assert out_a.shape == (N, 8, H, W)
    err_a = jnp.abs(out_a - ref_a)
    assert float(jnp.max(err_a)) < MAX_TOL and float(jnp.mean(err_a)) < MEAN_TOL

    # config 2: projection shortcut (in_planes != planes -> conv1x1 + BN path)
    params2 = make_params(kp2, 8, 16)
    out_b = jax.block_until_ready(fwd(x, params2, stride=1))
    ref_b = _ref_forward(x, params2, stride=1)
    assert out_b.shape == (N, 16, H, W)
    err_b = jnp.abs(out_b - ref_b)
    assert float(jnp.max(err_b)) < MAX_TOL and float(jnp.mean(err_b)) < MEAN_TOL

    print("KERNEL_OK")
</pallas_src>

<mosaic_0001>
module attributes {stable_mosaic.version = 11 : i64} {
  func.func @_conv3x3_kernel(%arg0: i32, %arg1: i32, %arg2: memref<1x16x16x8xf32, #tpu.memory_space<vmem>>, %arg3: memref<72x8xbf16, #tpu.memory_space<vmem>>, %arg4: memref<1x8x16x8xbf16, #tpu.memory_space<vmem>>, %arg5: memref<1x2x8xf32, #tpu.memory_space<vmem>>, %arg6: memref<18x18x8xbf16, #tpu.memory_space<vmem>>) attributes {dimension_semantics = [#tpu.dimension_semantics<parallel>, #tpu.dimension_semantics<arbitrary>], iteration_bounds = array<i64: 2, 2>, scalar_prefetch = 0 : i64, scratch_operands = 1 : i64, tpu.core_type = #tpu.core_type<tc>, window_params = [{transform_indices = @transform_0, window_bounds = array<i64: 1, 16, 16, 8>}, {pipeline_mode = #tpu.pipeline_mode<synchronous>, transform_indices = @transform_1, window_bounds = array<i64: 72, 8>}, {transform_indices = @transform_2, window_bounds = array<i64: 1, 8, 16, 8>}, {transform_indices = @transform_3, window_bounds = array<i64: 1, 2, 8>}]} {
    %c0_i32 = arith.constant 0 : i32
    %0 = arith.cmpi eq, %arg1, %c0_i32 : i32
    %1 = arith.extui %0 : i1 to i32
    %c0_i32_0 = arith.constant 0 : i32
    %2 = arith.cmpi ne, %1, %c0_i32_0 : i32
    scf.if %2 {
      %cst_16 = arith.constant 0.000000e+00 : f32
      %45 = vector.broadcast %cst_16 : f32 to vector<1x2x8xf32>
      %c0_17 = arith.constant 0 : index
      %c0_18 = arith.constant 0 : index
      %c0_19 = arith.constant 0 : index
      %46 = vector.load %arg5[%c0_17, %c0_18, %c0_19] : memref<1x2x8xf32, #tpu.memory_space<vmem>>, vector<1x2x8xf32>
      tpu.vector_store %arg5[%c0_17, %c0_18, %c0_19], %45 {strides = array<i32>} : memref<1x2x8xf32, #tpu.memory_space<vmem>>, vector<1x2x8xf32>,
      %c0_20 = arith.constant 0 : index
      %c0_21 = arith.constant 0 : index
      %c0_22 = arith.constant 0 : index
      %c0_23 = arith.constant 0 : index
      %47 = vector.load %arg2[%c0_20, %c0_21, %c0_22, %c0_23] : memref<1x16x16x8xf32, #tpu.memory_space<vmem>>, vector<1x16x16x8xf32>
      %48 = vector.shape_cast %47 : vector<1x16x16x8xf32> to vector<16x16x8xf32>
      %49 = arith.truncf %48 : vector<16x16x8xf32> to vector<16x16x8xbf16>
      %cst_24 = arith.constant 0.000000e+00 : bf16
      %50 = vector.broadcast %cst_24 : bf16 to vector<1x16x8xbf16>
      %cst_25 = arith.constant 0.000000e+00 : bf16
      %51 = vector.broadcast %cst_25 : bf16 to vector<18x1x8xbf16>
      %52 = tpu.concatenate %50, %49, %50 in 0 : vector<1x16x8xbf16>, vector<16x16x8xbf16>, vector<1x16x8xbf16> -> vector<18x16x8xbf16>
      %53 = tpu.concatenate %51, %52, %51 in 1 : vector<18x1x8xbf16>, vector<18x16x8xbf16>, vector<18x1x8xbf16> -> vector<18x18x8xbf16>
      %c0_26 = arith.constant 0 : index
      %c0_27 = arith.constant 0 : index
      %c0_28 = arith.constant 0 : index
      %54 = vector.load %arg6[%c0_26, %c0_27, %c0_28] : memref<18x18x8xbf16, #tpu.memory_space<vmem>>, vector<18x18x8xbf16>
      tpu.vector_store %arg6[%c0_26, %c0_27, %c0_28], %53 {strides = array<i32>} : memref<18x18x8xbf16, #tpu.memory_space<vmem>>, vector<18x18x8xbf16>,
    } else {
    }
    %c8_i32 = arith.constant 8 : i32
    %3 = arith.muli %arg1, %c8_i32 : i32
    %4 = tpu.assume_multiple %3, 8 : i32
    %5 = arith.index_cast %4 : i32 to index
    %c0 = arith.constant 0 : index
    %c0_1 = arith.constant 0 : index
    %6 = vector.load %arg6[%5, %c0, %c0_1] : memref<18x18x8xbf16, #tpu.memory_space<vmem>>, vector<10x18x8xbf16>
    %7 = vector.extract_strided_slice %6 {offsets = [0, 0, 0], sizes = [8, 16, 8], strides = [1, 1, 1]} : vector<10x18x8xbf16> to vector<8x16x8xbf16>
    %8 = vector.shape_cast %7 : vector<8x16x8xbf16> to vector<128x8xbf16>
    %9 = vector.extract_strided_slice %6 {offsets = [0, 1, 0], sizes = [8, 16, 8], strides = [1, 1, 1]} : vector<10x18x8xbf16> to vector<8x16x8xbf16>
    %10 = vector.shape_cast %9 : vector<8x16x8xbf16> to vector<128x8xbf16>
    %11 = vector.extract_strided_slice %6 {offsets = [0, 2, 0], sizes = [8, 16, 8], strides = [1, 1, 1]} : vector<10x18x8xbf16> to vector<8x16x8xbf16>
    %12 = vector.shape_cast %11 : vector<8x16x8xbf16> to vector<128x8xbf16>
    %13 = vector.extract_strided_slice %6 {offsets = [1, 0, 0], sizes = [8, 16, 8], strides = [1, 1, 1]} : vector<10x18x8xbf16> to vector<8x16x8xbf16>
    %14 = vector.shape_cast %13 : vector<8x16x8xbf16> to vector<128x8xbf16>
    %15 = vector.extract_strided_slice %6 {offsets = [1, 1, 0], sizes = [8, 16, 8], strides = [1, 1, 1]} : vector<10x18x8xbf16> to vector<8x16x8xbf16>
    %16 = vector.shape_cast %15 : vector<8x16x8xbf16> to vector<128x8xbf16>
    %17 = vector.extract_strided_slice %6 {offsets = [1, 2, 0], sizes = [8, 16, 8], strides = [1, 1, 1]} : vector<10x18x8xbf16> to vector<8x16x8xbf16>
    %18 = vector.shape_cast %17 : vector<8x16x8xbf16> to vector<128x8xbf16>
    %19 = vector.extract_strided_slice %6 {offsets = [2, 0, 0], sizes = [8, 16, 8], strides = [1, 1, 1]} : vector<10x18x8xbf16> to vector<8x16x8xbf16>
    %20 = vector.shape_cast %19 : vector<8x16x8xbf16> to vector<128x8xbf16>
    %21 = vector.extract_strided_slice %6 {offsets = [2, 1, 0], sizes = [8, 16, 8], strides = [1, 1, 1]} : vector<10x18x8xbf16> to vector<8x16x8xbf16>
    %22 = vector.shape_cast %21 : vector<8x16x8xbf16> to vector<128x8xbf16>
    %23 = vector.extract_strided_slice %6 {offsets = [2, 2, 0], sizes = [8, 16, 8], strides = [1, 1, 1]} : vector<10x18x8xbf16> to vector<8x16x8xbf16>
    %24 = vector.shape_cast %23 : vector<8x16x8xbf16> to vector<128x8xbf16>
    %25 = tpu.concatenate %8, %10, %12, %14, %16, %18, %20, %22, %24 in 1 : vector<128x8xbf16>, vector<128x8xbf16>, vector<128x8xbf16>, vector<128x8xbf16>, vector<128x8xbf16>, vector<128x8xbf16>, vector<128x8xbf16>, vector<128x8xbf16>, vector<128x8xbf16> -> vector<128x72xbf16>
    %c0_2 = arith.constant 0 : index
    %c0_3 = arith.constant 0 : index
    %26 = vector.load %arg3[%c0_2, %c0_3] : memref<72x8xbf16, #tpu.memory_space<vmem>>, vector<72x8xbf16>
    %cst = arith.constant dense<0.000000e+00> : vector<128x8xf32>
    %27 = tpu.matmul %25, %26, %cst {dimension_numbers = #tpu.dot_dimension_numbers<[1], [0], [0], [1], [0, 0, 1, 1], [], []>} : vector<128x72xbf16>, vector<72x8xbf16>, vector<128x8xf32> -> vector<128x8xf32>
    %c0_4 = arith.constant 0 : index
    %c0_5 = arith.constant 0 : index
    %c0_6 = arith.constant 0 : index
    %28 = vector.load %arg5[%c0_4, %c0_5, %c0_6] : memref<1x2x8xf32, #tpu.memory_space<vmem>>, vector<1x2x8xf32>
    %29 = vector.shape_cast %28 : vector<1x2x8xf32> to vector<2x8xf32>
    %cst_7 = arith.constant dense<0.000000e+00> : vector<8xf32>
    %30 = vector.multi_reduction <add>, %27, %cst_7 [0] : vector<128x8xf32> to vector<8xf32>
    %31 = vector.shape_cast %30 : vector<8xf32> to vector<1x8xf32>
    %32 = arith.mulf %27, %27 : vector<128x8xf32>
    %cst_8 = arith.constant dense<0.000000e+00> : vector<8xf32>
    %33 = vector.multi_reduction <add>, %32, %cst_8 [0] : vector<128x8xf32> to vector<8xf32>
    %34 = vector.shape_cast %33 : vector<8xf32> to vector<1x8xf32>
    %35 = tpu.concatenate %31, %34 in 0 : vector<1x8xf32>, vector<1x8xf32> -> vector<2x8xf32>
    %36 = arith.addf %29, %35 : vector<2x8xf32>
    %c0_9 = arith.constant 0 : index
    %c0_10 = arith.constant 0 : index
    %c0_11 = arith.constant 0 : index
    %37 = vector.load %arg5[%c0_9, %c0_10, %c0_11] : memref<1x2x8xf32, #tpu.memory_space<vmem>>, vector<1x2x8xf32>
    %38 = vector.shape_cast %37 : vector<1x2x8xf32> to vector<2x8xf32>
    %39 = vector.shape_cast %36 : vector<2x8xf32> to vector<1x2x8xf32>
    tpu.vector_store %arg5[%c0_9, %c0_10, %c0_11], %39 {strides = array<i32>} : memref<1x2x8xf32, #tpu.memory_space<vmem>>, vector<1x2x8xf32>,
    %40 = vector.shape_cast %27 : vector<128x8xf32> to vector<8x16x8xf32>
    %41 = arith.truncf %40 : vector<8x16x8xf32> to vector<8x16x8xbf16>
    %c0_12 = arith.constant 0 : index
    %c0_13 = arith.constant 0 : index
    %c0_14 = arith.constant 0 : index
    %c0_15 = arith.constant 0 : index
    %42 = vector.load %arg4[%c0_12, %c0_13, %c0_14, %c0_15] : memref<1x8x16x8xbf16, #tpu.memory_space<vmem>>, vector<1x8x16x8xbf16>
    %43 = vector.shape_cast %42 : vector<1x8x16x8xbf16> to vector<8x16x8xbf16>
    %44 = vector.shape_cast %41 : vector<8x16x8xbf16> to vector<1x8x16x8xbf16>
    tpu.vector_store %arg4[%c0_12, %c0_13, %c0_14, %c0_15], %44 {strides = array<i32>} : memref<1x8x16x8xbf16, #tpu.memory_space<vmem>>, vector<1x8x16x8xbf16>,
    return
  }
  func.func @transform_0(%arg0: i32, %arg1: i32) -> (i32, i32, i32, i32) {
    %c0_i32 = arith.constant 0 : i32
    %c0_i32_0 = arith.constant 0 : i32
    %c0_i32_1 = arith.constant 0 : i32
    %c0_i32_2 = arith.constant 0 : i32
    return %arg0, %c0_i32, %c0_i32_0, %c0_i32_1 : i32, i32, i32, i32
  }
  func.func @transform_1(%arg0: i32, %arg1: i32) -> (i32, i32) {
    %c0_i32 = arith.constant 0 : i32
    %c0_i32_0 = arith.constant 0 : i32
    %c0_i32_1 = arith.constant 0 : i32
    return %c0_i32, %c0_i32_0 : i32, i32
  }
  func.func @transform_2(%arg0: i32, %arg1: i32) -> (i32, i32, i32, i32) {
    %c0_i32 = arith.constant 0 : i32
    %c0_i32_0 = arith.constant 0 : i32
    %c0_i32_1 = arith.constant 0 : i32
    return %arg0, %arg1, %c0_i32, %c0_i32_0 : i32, i32, i32, i32
  }
  func.func @transform_3(%arg0: i32, %arg1: i32) -> (i32, i32, i32) {
    %c0_i32 = arith.constant 0 : i32
    %c0_i32_0 = arith.constant 0 : i32
    %c0_i32_1 = arith.constant 0 : i32
    return %arg0, %c0_i32, %c0_i32_0 : i32, i32, i32
  }
}

module attributes {stable_mosaic.version = 11 : i64} {
  func.func @_conv3x3_kernel(%arg0: i32, %arg1: i32, %arg2: memref<1x16x16x8xbf16, #tpu.memory_space<vmem>>, %arg3: memref<1x8xf32, #tpu.memory_space<vmem>>, %arg4: memref<1x8xf32, #tpu.memory_space<vmem>>, %arg5: memref<72x8xbf16, #tpu.memory_space<vmem>>, %arg6: memref<1x8x16x8xbf16, #tpu.memory_space<vmem>>, %arg7: memref<1x2x8xf32, #tpu.memory_space<vmem>>, %arg8: memref<18x18x8xbf16, #tpu.memory_space<vmem>>) attributes {dimension_semantics = [#tpu.dimension_semantics<parallel>, #tpu.dimension_semantics<arbitrary>], iteration_bounds = array<i64: 2, 2>, scalar_prefetch = 0 : i64, scratch_operands = 1 : i64, tpu.core_type = #tpu.core_type<tc>, window_params = [{transform_indices = @transform_0, window_bounds = array<i64: 1, 16, 16, 8>}, {pipeline_mode = #tpu.pipeline_mode<synchronous>, transform_indices = @transform_1, window_bounds = array<i64: 1, 8>}, {pipeline_mode = #tpu.pipeline_mode<synchronous>, transform_indices = @transform_2, window_bounds = array<i64: 1, 8>}, {pipeline_mode = #tpu.pipeline_mode<synchronous>, transform_indices = @transform_3, window_bounds = array<i64: 72, 8>}, {transform_indices = @transform_4, window_bounds = array<i64: 1, 8, 16, 8>}, {transform_indices = @transform_5, window_bounds = array<i64: 1, 2, 8>}]} {
    %c0_i32 = arith.constant 0 : i32
    %0 = arith.cmpi eq, %arg1, %c0_i32 : i32
    %1 = arith.extui %0 : i1 to i32
    %c0_i32_0 = arith.constant 0 : i32
    %2 = arith.cmpi ne, %1, %c0_i32_0 : i32
    scf.if %2 {
      %cst_16 = arith.constant 0.000000e+00 : f32
      %45 = vector.broadcast %cst_16 : f32 to vector<1x2x8xf32>
      %c0_17 = arith.constant 0 : index
      %c0_18 = arith.constant 0 : index
      %c0_19 = arith.constant 0 : index
      %46 = vector.load %arg7[%c0_17, %c0_18, %c0_19] : memref<1x2x8xf32, #tpu.memory_space<vmem>>, vector<1x2x8xf32>
      tpu.vector_store %arg7[%c0_17, %c0_18, %c0_19], %45 {strides = array<i32>} : memref<1x2x8xf32, #tpu.memory_space<vmem>>, vector<1x2x8xf32>,
      %c0_20 = arith.constant 0 : index
      %c0_21 = arith.constant 0 : index
      %c0_22 = arith.constant 0 : index
      %c0_23 = arith.constant 0 : index
      %47 = vector.load %arg2[%c0_20, %c0_21, %c0_22, %c0_23] : memref<1x16x16x8xbf16, #tpu.memory_space<vmem>>, vector<1x16x16x8xbf16>
      %48 = vector.shape_cast %47 : vector<1x16x16x8xbf16> to vector<16x16x8xbf16>
      %49 = arith.extf %48 : vector<16x16x8xbf16> to vector<16x16x8xf32>
      %c0_24 = arith.constant 0 : index
      %c0_25 = arith.constant 0 : index
      %50 = vector.load %arg3[%c0_24, %c0_25] : memref<1x8xf32, #tpu.memory_space<vmem>>, vector<1x8xf32>
      %51 = vector.shape_cast %50 : vector<1x8xf32> to vector<8xf32>
      %52 = vector.shape_cast %51 : vector<8xf32> to vector<1x1x8xf32>
      %53 = vector.broadcast %52 : vector<1x1x8xf32> to vector<16x16x8xf32>
      %54 = arith.mulf %49, %53 : vector<16x16x8xf32>
      %c0_26 = arith.constant 0 : index
      %c0_27 = arith.constant 0 : index
      %55 = vector.load %arg4[%c0_26, %c0_27] : memref<1x8xf32, #tpu.memory_space<vmem>>, vector<1x8xf32>
      %56 = vector.shape_cast %55 : vector<1x8xf32> to vector<8xf32>
      %57 = vector.shape_cast %56 : vector<8xf32> to vector<1x1x8xf32>
      %58 = vector.broadcast %57 : vector<1x1x8xf32> to vector<16x16x8xf32>
      %59 = arith.addf %54, %58 : vector<16x16x8xf32>
      %cst_28 = arith.constant 0.000000e+00 : f32
      %60 = vector.broadcast %cst_28 : f32 to vector<16x16x8xf32>
      %61 = arith.maximumf %59, %60 : vector<16x16x8xf32>
      %62 = arith.truncf %61 : vector<16x16x8xf32> to vector<16x16x8xbf16>
      %cst_29 = arith.constant 0.000000e+00 : bf16
      %63 = vector.broadcast %cst_29 : bf16 to vector<1x16x8xbf16>
      %cst_30 = arith.constant 0.000000e+00 : bf16
      %64 = vector.broadcast %cst_30 : bf16 to vector<18x1x8xbf16>
      %65 = tpu.concatenate %63, %62, %63 in 0 : vector<1x16x8xbf16>, vector<16x16x8xbf16>, vector<1x16x8xbf16> -> vector<18x16x8xbf16>
      %66 = tpu.concatenate %64, %65, %64 in 1 : vector<18x1x8xbf16>, vector<18x16x8xbf16>, vector<18x1x8xbf16> -> vector<18x18x8xbf16>
      %c0_31 = arith.constant 0 : index
      %c0_32 = arith.constant 0 : index
      %c0_33 = arith.constant 0 : index
      %67 = vector.load %arg8[%c0_31, %c0_32, %c0_33] : memref<18x18x8xbf16, #tpu.memory_space<vmem>>, vector<18x18x8xbf16>
      tpu.vector_store %arg8[%c0_31, %c0_32, %c0_33], %66 {strides = array<i32>} : memref<18x18x8xbf16, #tpu.memory_space<vmem>>, vector<18x18x8xbf16>,
    } else {
    }
    %c8_i32 = arith.constant 8 : i32
    %3 = arith.muli %arg1, %c8_i32 : i32
    %4 = tpu.assume_multiple %3, 8 : i32
    %5 = arith.index_cast %4 : i32 to index
    %c0 = arith.constant 0 : index
    %c0_1 = arith.constant 0 : index
    %6 = vector.load %arg8[%5, %c0, %c0_1] : memref<18x18x8xbf16, #tpu.memory_space<vmem>>, vector<10x18x8xbf16>
    %7 = vector.extract_strided_slice %6 {offsets = [0, 0, 0], sizes = [8, 16, 8], strides = [1, 1, 1]} : vector<10x18x8xbf16> to vector<8x16x8xbf16>
    %8 = vector.shape_cast %7 : vector<8x16x8xbf16> to vector<128x8xbf16>
    %9 = vector.extract_strided_slice %6 {offsets = [0, 1, 0], sizes = [8, 16, 8], strides = [1, 1, 1]} : vector<10x18x8xbf16> to vector<8x16x8xbf16>
    %10 = vector.shape_cast %9 : vector<8x16x8xbf16> to vector<128x8xbf16>
    %11 = vector.extract_strided_slice %6 {offsets = [0, 2, 0], sizes = [8, 16, 8], strides = [1, 1, 1]} : vector<10x18x8xbf16> to vector<8x16x8xbf16>
    %12 = vector.shape_cast %11 : vector<8x16x8xbf16> to vector<128x8xbf16>
    %13 = vector.extract_strided_slice %6 {offsets = [1, 0, 0], sizes = [8, 16, 8], strides = [1, 1, 1]} : vector<10x18x8xbf16> to vector<8x16x8xbf16>
    %14 = vector.shape_cast %13 : vector<8x16x8xbf16> to vector<128x8xbf16>
    %15 = vector.extract_strided_slice %6 {offsets = [1, 1, 0], sizes = [8, 16, 8], strides = [1, 1, 1]} : vector<10x18x8xbf16> to vector<8x16x8xbf16>
    %16 = vector.shape_cast %15 : vector<8x16x8xbf16> to vector<128x8xbf16>
    %17 = vector.extract_strided_slice %6 {offsets = [1, 2, 0], sizes = [8, 16, 8], strides = [1, 1, 1]} : vector<10x18x8xbf16> to vector<8x16x8xbf16>
    %18 = vector.shape_cast %17 : vector<8x16x8xbf16> to vector<128x8xbf16>
    %19 = vector.extract_strided_slice %6 {offsets = [2, 0, 0], sizes = [8, 16, 8], strides = [1, 1, 1]} : vector<10x18x8xbf16> to vector<8x16x8xbf16>
    %20 = vector.shape_cast %19 : vector<8x16x8xbf16> to vector<128x8xbf16>
    %21 = vector.extract_strided_slice %6 {offsets = [2, 1, 0], sizes = [8, 16, 8], strides = [1, 1, 1]} : vector<10x18x8xbf16> to vector<8x16x8xbf16>
    %22 = vector.shape_cast %21 : vector<8x16x8xbf16> to vector<128x8xbf16>
    %23 = vector.extract_strided_slice %6 {offsets = [2, 2, 0], sizes = [8, 16, 8], strides = [1, 1, 1]} : vector<10x18x8xbf16> to vector<8x16x8xbf16>
    %24 = vector.shape_cast %23 : vector<8x16x8xbf16> to vector<128x8xbf16>
    %25 = tpu.concatenate %8, %10, %12, %14, %16, %18, %20, %22, %24 in 1 : vector<128x8xbf16>, vector<128x8xbf16>, vector<128x8xbf16>, vector<128x8xbf16>, vector<128x8xbf16>, vector<128x8xbf16>, vector<128x8xbf16>, vector<128x8xbf16>, vector<128x8xbf16> -> vector<128x72xbf16>
    %c0_2 = arith.constant 0 : index
    %c0_3 = arith.constant 0 : index
    %26 = vector.load %arg5[%c0_2, %c0_3] : memref<72x8xbf16, #tpu.memory_space<vmem>>, vector<72x8xbf16>
    %cst = arith.constant dense<0.000000e+00> : vector<128x8xf32>
    %27 = tpu.matmul %25, %26, %cst {dimension_numbers = #tpu.dot_dimension_numbers<[1], [0], [0], [1], [0, 0, 1, 1], [], []>} : vector<128x72xbf16>, vector<72x8xbf16>, vector<128x8xf32> -> vector<128x8xf32>
    %c0_4 = arith.constant 0 : index
    %c0_5 = arith.constant 0 : index
    %c0_6 = arith.constant 0 : index
    %28 = vector.load %arg7[%c0_4, %c0_5, %c0_6] : memref<1x2x8xf32, #tpu.memory_space<vmem>>, vector<1x2x8xf32>
    %29 = vector.shape_cast %28 : vector<1x2x8xf32> to vector<2x8xf32>
    %cst_7 = arith.constant dense<0.000000e+00> : vector<8xf32>
    %30 = vector.multi_reduction <add>, %27, %cst_7 [0] : vector<128x8xf32> to vector<8xf32>
    %31 = vector.shape_cast %30 : vector<8xf32> to vector<1x8xf32>
    %32 = arith.mulf %27, %27 : vector<128x8xf32>
    %cst_8 = arith.constant dense<0.000000e+00> : vector<8xf32>
    %33 = vector.multi_reduction <add>, %32, %cst_8 [0] : vector<128x8xf32> to vector<8xf32>
    %34 = vector.shape_cast %33 : vector<8xf32> to vector<1x8xf32>
    %35 = tpu.concatenate %31, %34 in 0 : vector<1x8xf32>, vector<1x8xf32> -> vector<2x8xf32>
    %36 = arith.addf %29, %35 : vector<2x8xf32>
    %c0_9 = arith.constant 0 : index
    %c0_10 = arith.constant 0 : index
    %c0_11 = arith.constant 0 : index
    %37 = vector.load %arg7[%c0_9, %c0_10, %c0_11] : memref<1x2x8xf32, #tpu.memory_space<vmem>>, vector<1x2x8xf32>
    %38 = vector.shape_cast %37 : vector<1x2x8xf32> to vector<2x8xf32>
    %39 = vector.shape_cast %36 : vector<2x8xf32> to vector<1x2x8xf32>
    tpu.vector_store %arg7[%c0_9, %c0_10, %c0_11], %39 {strides = array<i32>} : memref<1x2x8xf32, #tpu.memory_space<vmem>>, vector<1x2x8xf32>,
    %40 = vector.shape_cast %27 : vector<128x8xf32> to vector<8x16x8xf32>
    %41 = arith.truncf %40 : vector<8x16x8xf32> to vector<8x16x8xbf16>
    %c0_12 = arith.constant 0 : index
    %c0_13 = arith.constant 0 : index
    %c0_14 = arith.constant 0 : index
    %c0_15 = arith.constant 0 : index
    %42 = vector.load %arg6[%c0_12, %c0_13, %c0_14, %c0_15] : memref<1x8x16x8xbf16, #tpu.memory_space<vmem>>, vector<1x8x16x8xbf16>
    %43 = vector.shape_cast %42 : vector<1x8x16x8xbf16> to vector<8x16x8xbf16>
    %44 = vector.shape_cast %41 : vector<8x16x8xbf16> to vector<1x8x16x8xbf16>
    tpu.vector_store %arg6[%c0_12, %c0_13, %c0_14, %c0_15], %44 {strides = array<i32>} : memref<1x8x16x8xbf16, #tpu.memory_space<vmem>>, vector<1x8x16x8xbf16>,
    return
  }
  func.func @transform_0(%arg0: i32, %arg1: i32) -> (i32, i32, i32, i32) {
    %c0_i32 = arith.constant 0 : i32
    %c0_i32_0 = arith.constant 0 : i32
    %c0_i32_1 = arith.constant 0 : i32
    %c0_i32_2 = arith.constant 0 : i32
    return %arg0, %c0_i32, %c0_i32_0, %c0_i32_1 : i32, i32, i32, i32
  }
  func.func @transform_1(%arg0: i32, %arg1: i32) -> (i32, i32) {
    %c0_i32 = arith.constant 0 : i32
    %c0_i32_0 = arith.constant 0 : i32
    %c0_i32_1 = arith.constant 0 : i32
    return %c0_i32, %c0_i32_0 : i32, i32
  }
  func.func @transform_2(%arg0: i32, %arg1: i32) -> (i32, i32) {
    %c0_i32 = arith.constant 0 : i32
    %c0_i32_0 = arith.constant 0 : i32
    %c0_i32_1 = arith.constant 0 : i32
    return %c0_i32, %c0_i32_0 : i32, i32
  }
  func.func @transform_3(%arg0: i32, %arg1: i32) -> (i32, i32) {
    %c0_i32 = arith.constant 0 : i32
    %c0_i32_0 = arith.constant 0 : i32
    %c0_i32_1 = arith.constant 0 : i32
    return %c0_i32, %c0_i32_0 : i32, i32
  }
  func.func @transform_4(%arg0: i32, %arg1: i32) -> (i32, i32, i32, i32) {
    %c0_i32 = arith.constant 0 : i32
    %c0_i32_0 = arith.constant 0 : i32
    %c0_i32_1 = arith.constant 0 : i32
    return %arg0, %arg1, %c0_i32, %c0_i32_0 : i32, i32, i32, i32
  }
  func.func @transform_5(%arg0: i32, %arg1: i32) -> (i32, i32, i32) {
    %c0_i32 = arith.constant 0 : i32
    %c0_i32_0 = arith.constant 0 : i32
    %c0_i32_1 = arith.constant 0 : i32
    return %arg0, %c0_i32, %c0_i32_0 : i32, i32, i32
  }
}

module attributes {stable_mosaic.version = 11 : i64} {
  func.func @_bn_add_relu_kernel(%arg0: i32, %arg1: i32, %arg2: memref<1x8x128xbf16, #tpu.memory_space<vmem>>, %arg3: memref<1x128xf32, #tpu.memory_space<vmem>>, %arg4: memref<1x128xf32, #tpu.memory_space<vmem>>, %arg5: memref<1x8x128xf32, #tpu.memory_space<vmem>>, %arg6: memref<1x8x128xf32, #tpu.memory_space<vmem>>) attributes {dimension_semantics = [#tpu.dimension_semantics<parallel>, #tpu.dimension_semantics<parallel>], iteration_bounds = array<i64: 2, 2>, scalar_prefetch = 0 : i64, scratch_operands = 0 : i64, tpu.core_type = #tpu.core_type<tc>, window_params = [{transform_indices = @transform_0, window_bounds = array<i64: 1, 8, 128>}, {pipeline_mode = #tpu.pipeline_mode<synchronous>, transform_indices = @transform_1, window_bounds = array<i64: 1, 128>}, {pipeline_mode = #tpu.pipeline_mode<synchronous>, transform_indices = @transform_2, window_bounds = array<i64: 1, 128>}, {transform_indices = @transform_3, window_bounds = array<i64: 1, 8, 128>}, {transform_indices = @transform_4, window_bounds = array<i64: 1, 8, 128>}]} {
    %c0 = arith.constant 0 : index
    %c0_0 = arith.constant 0 : index
    %c0_1 = arith.constant 0 : index
    %0 = vector.load %arg2[%c0, %c0_0, %c0_1] : memref<1x8x128xbf16, #tpu.memory_space<vmem>>, vector<1x8x128xbf16>
    %1 = vector.shape_cast %0 : vector<1x8x128xbf16> to vector<8x128xbf16>
    %2 = arith.extf %1 : vector<8x128xbf16> to vector<8x128xf32>
    %c0_2 = arith.constant 0 : index
    %c0_3 = arith.constant 0 : index
    %3 = vector.load %arg3[%c0_2, %c0_3] : memref<1x128xf32, #tpu.memory_space<vmem>>, vector<1x128xf32>
    %4 = vector.broadcast %3 : vector<1x128xf32> to vector<8x128xf32>
    %5 = arith.mulf %2, %4 : vector<8x128xf32>
    %c0_4 = arith.constant 0 : index
    %c0_5 = arith.constant 0 : index
    %6 = vector.load %arg4[%c0_4, %c0_5] : memref<1x128xf32, #tpu.memory_space<vmem>>, vector<1x128xf32>
    %7 = vector.broadcast %6 : vector<1x128xf32> to vector<8x128xf32>
    %8 = arith.addf %5, %7 : vector<8x128xf32>
    %c0_6 = arith.constant 0 : index
    %c0_7 = arith.constant 0 : index
    %c0_8 = arith.constant 0 : index
    %9 = vector.load %arg5[%c0_6, %c0_7, %c0_8] : memref<1x8x128xf32, #tpu.memory_space<vmem>>, vector<1x8x128xf32>
    %10 = vector.shape_cast %9 : vector<1x8x128xf32> to vector<8x128xf32>
    %11 = arith.addf %8, %10 : vector<8x128xf32>
    %cst = arith.constant 0.000000e+00 : f32
    %12 = vector.broadcast %cst : f32 to vector<8x128xf32>
    %13 = arith.maximumf %11, %12 : vector<8x128xf32>
    %c0_9 = arith.constant 0 : index
    %c0_10 = arith.constant 0 : index
    %c0_11 = arith.constant 0 : index
    %14 = vector.load %arg6[%c0_9, %c0_10, %c0_11] : memref<1x8x128xf32, #tpu.memory_space<vmem>>, vector<1x8x128xf32>
    %15 = vector.shape_cast %14 : vector<1x8x128xf32> to vector<8x128xf32>
    %16 = vector.shape_cast %13 : vector<8x128xf32> to vector<1x8x128xf32>
    tpu.vector_store %arg6[%c0_9, %c0_10, %c0_11], %16 {strides = array<i32>} : memref<1x8x128xf32, #tpu.memory_space<vmem>>, vector<1x8x128xf32>,
    return
  }
  func.func @transform_0(%arg0: i32, %arg1: i32) -> (i32, i32, i32) {
    %c0_i32 = arith.constant 0 : i32
    %c0_i32_0 = arith.constant 0 : i32
    return %arg0, %arg1, %c0_i32 : i32, i32, i32
  }
  func.func @transform_1(%arg0: i32, %arg1: i32) -> (i32, i32) {
    %c0_i32 = arith.constant 0 : i32
    %c0_i32_0 = arith.constant 0 : i32
    %c0_i32_1 = arith.constant 0 : i32
    return %c0_i32, %c0_i32_0 : i32, i32
  }
  func.func @transform_2(%arg0: i32, %arg1: i32) -> (i32, i32) {
    %c0_i32 = arith.constant 0 : i32
    %c0_i32_0 = arith.constant 0 : i32
    %c0_i32_1 = arith.constant 0 : i32
    return %c0_i32, %c0_i32_0 : i32, i32
  }
  func.func @transform_3(%arg0: i32, %arg1: i32) -> (i32, i32, i32) {
    %c0_i32 = arith.constant 0 : i32
    %c0_i32_0 = arith.constant 0 : i32
    return %arg0, %arg1, %c0_i32 : i32, i32, i32
  }
  func.func @transform_4(%arg0: i32, %arg1: i32) -> (i32, i32, i32) {
    %c0_i32 = arith.constant 0 : i32
    %c0_i32_0 = arith.constant 0 : i32
    return %arg0, %arg1, %c0_i32 : i32, i32, i32
  }
}

</mosaic_0001>

<llo_original>
// kernel: tile.13
$region0: #{tile.13}
  #allocation0 [shape = 's32[1]{0}', space=sflag, size = 0x4, scoped, tag = 'scoped memory for tile.13']
  %s0 = inlined_call_operand.vmem [shape: f32[8], index: 0, kind: input, shape index: {}]
  %s1 = inlined_call_operand.vmem [shape: f32[16,8], index: 1, kind: output, shape index: {}]
  // Predicated region
  $region2: #{tile.13} parent=0 // pred_check
    _
  $region3: #{tile.13} parent=0 // pred_check_branch
    %3 = sbr.rel (0) target = $region5
  $region4: #{tile.13} parent=0 // pred_region
    _
  $region5: #{tile.13} parent=0 // pred_fallthru
    _
  %v4 = vld [vmem:[%s0] ss:$0 sm:$0xff]
  %5 = vst [vmem:[%s1] sm:$0xff] %v4
  %s6 = scalar_lea.vmem %s1, 8
  %7 = vst [vmem:[%s6] sm:$0xff] %v4

// kernel: tile.14
$region0: #{tile.14}
  %s0 = inlined_call_operand.vmem [shape: f32[16,8], index: 0, kind: input, shape index: {}]
  %s1 = inlined_call_operand.vmem [shape: f32[1,128], index: 1, kind: output, shape index: {}]
  $region1: #{tile.14} parent=0
    #allocation0 [shape = 'u8[4096]{0}', space=vmem, size = 0x1000, scoped, tag = 'scoped mem for output reshape']
    %v2 = vld [vmem:[%s0] sm:$0x1]
    %vm3 = vcmask 64512
    %4 = vst.msk [vmem:[#allocation0] sm:$0x1] %vm3, %v2
    %s5 = scalar_lea.vmem %s0, 15
    %v6 = vld [vmem:[%s5] sm:$0x1]
    %7 = vrot.lane.b32.xlu0 %v6, 120
    %v8 = vpop.permute.xlu0 %7
    %vm9 = vcmask 1048512
    %10 = vst.msk [vmem:[#allocation0] sm:$0x1] %vm9, %v8
    %s11 = scalar_lea.vmem %s0, 14
    %v12 = vld [vmem:[%s11] sm:$0x1]
    %13 = vrot.lane.b32.xlu0 %v12, 112
    %v14 = vpop.permute.xlu0 %13
    %vm15 = vcmask 982912
    %16 = vst.msk [vmem:[#allocation0] sm:$0x1] %vm15, %v14
    %s17 = scalar_lea.vmem %s0, 13
    %v18 = vld [vmem:[%s17] sm:$0x1]
    %19 = vrot.lane.b32.xlu0 %v18, 104
    %v20 = vpop.permute.xlu0 %19
    %vm21 = vcmask 917312
    %22 = vst.msk [vmem:[#allocation0] sm:$0x1] %vm21, %v20
    %s23 = scalar_lea.vmem %s0, 12
    %v24 = vld [vmem:[%s23] sm:$0x1]
    %25 = vrot.lane.b32.xlu0 %v24, 96
    %v26 = vpop.permute.xlu0 %25
    %vm27 = vcmask 851712
    %28 = vst.msk [vmem:[#allocation0] sm:$0x1] %vm27, %v26
    %s29 = scalar_lea.vmem %s0, 11
    %v30 = vld [vmem:[%s29] sm:$0x1]
    %31 = vrot.lane.b32.xlu0 %v30, 88
    %v32 = vpop.permute.xlu0 %31
    %vm33 = vcmask 786112
    %34 = vst.msk [vmem:[#allocation0] sm:$0x1] %vm33, %v32
    %s35 = scalar_lea.vmem %s0, 10
    %v36 = vld [vmem:[%s35] sm:$0x1]
    %37 = vrot.lane.b32.xlu0 %v36, 80
    %v38 = vpop.permute.xlu0 %37
    %vm39 = vcmask 720512
    %40 = vst.msk [vmem:[#allocation0] sm:$0x1] %vm39, %v38
    %s41 = scalar_lea.vmem %s0, 9
    %v42 = vld [vmem:[%s41] sm:$0x1]
    %43 = vrot.lane.b32.xlu0 %v42, 72
    %v44 = vpop.permute.xlu0 %43
    %vm45 = vcmask 654912
    %46 = vst.msk [vmem:[#allocation0] sm:$0x1] %vm45, %v44
    %s47 = scalar_lea.vmem %s0, 8
    %v48 = vld [vmem:[%s47] sm:$0x1]
    %49 = vrot.lane.b32.xlu0 %v48, 64
    %v50 = vpop.permute.xlu0 %49
    %vm51 = vcmask 589312
    %52 = vst.msk [vmem:[#allocation0] sm:$0x1] %vm51, %v50
    %s53 = scalar_lea.vmem %s0, 7
    %v54 = vld [vmem:[%s53] sm:$0x1]
    %55 = vrot.lane.b32.xlu0 %v54, 56
    %v56 = vpop.permute.xlu0 %55
    %vm57 = vcmask 523712
    %58 = vst.msk [vmem:[#allocation0] sm:$0x1] %vm57, %v56
    %s59 = scalar_lea.vmem %s0, 6
    %v60 = vld [vmem:[%s59] sm:$0x1]
    %61 = vrot.lane.b32.xlu0 %v60, 48
    %v62 = vpop.permute.xlu0 %61
    %vm63 = vcmask 458112
    %64 = vst.msk [vmem:[#allocation0] sm:$0x1] %vm63, %v62
    %s65 = scalar_lea.vmem %s0, 5
    %v66 = vld [vmem:[%s65] sm:$0x1]
    %67 = vrot.lane.b32.xlu0 %v66, 40
    %v68 = vpop.permute.xlu0 %67
    %vm69 = vcmask 392512
    %70 = vst.msk [vmem:[#allocation0] sm:$0x1] %vm69, %v68
    %s71 = scalar_lea.vmem %s0, 4
    %v72 = vld [vmem:[%s71] sm:$0x1]
    %73 = vrot.lane.b32.xlu0 %v72, 32
    %v74 = vpop.permute.xlu0 %73
    %vm75 = vcmask 326912
    %76 = vst.msk [vmem:[#allocation0] sm:$0x1] %vm75, %v74
    %s77 = scalar_lea.vmem %s0, 3
    %v78 = vld [vmem:[%s77] sm:$0x1]
    %79 = vrot.lane.b32.xlu0 %v78, 24
    %v80 = vpop.permute.xlu0 %79
    %vm81 = vcmask 261312
    %82 = vst.msk [vmem:[#allocation0] sm:$0x1] %vm81, %v80
    %s83 = scalar_lea.vmem %s0, 2
    %v84 = vld [vmem:[%s83] sm:$0x1]
    %85 = vrot.lane.b32.xlu0 %v84, 16
    %v86 = vpop.permute.xlu0 %85
    %vm87 = vcmask 195712
    %88 = vst.msk [vmem:[#allocation0] sm:$0x1] %vm87, %v86
    %s89 = scalar_lea.vmem %s0, 1
    %v90 = vld [vmem:[%s89] sm:$0x1]
    %91 = vrot.lane.b32.xlu0 %v90, 8
    %v92 = vpop.permute.xlu0 %91
    %vm93 = vcmask 130112
    %94 = vst.msk [vmem:[#allocation0] sm:$0x1] %vm93, %v92
    %s96 = sshllo.u32 0, 1
    %v98 = vld [vmem:[#allocation0] sm:%s96]
    %s99 = sshllo.u32 0, 1
    %100 = vst [vmem:[%s1] sm:%s99] %v98

// kernel: basic_block_forward.5
$region0: #{basic_block_forward.5}
  #allocation0 [shape = 'u32[]', space=smem, size = 0x4, offset = 0x4, fixed_abs, tag = 'smem constant byte address 0x4 - core index']
  #allocation1 [shape = 'u32[144,128]{1,0:T(1,128)}', space=vmem, size = 0x12000, scoped, tag = 'internal scratch']
  %s0 = inlined_call_operand.vmem [shape: bf16[2,16,128], index: 0, kind: input, shape index: {}]
  %s1 = inlined_call_operand.vmem [shape: f32[1,128], index: 1, kind: input, shape index: {}]
  %s2 = inlined_call_operand.vmem [shape: f32[1,128], index: 2, kind: input, shape index: {}]
  %s3 = inlined_call_operand.vmem [shape: f32[2,16,128], index: 3, kind: input, shape index: {}]
  %s4 = inlined_call_operand.vmem [shape: f32[2,16,128], index: 4, kind: output, shape index: {}]
  %s5 = sld [smem:[#allocation0]]
  $region49: #{basic_block_forward.5} parent=0
    _
  %s7 = ssub.s32 1, %s5
  %s8 = scalar_select 0, %s7, %s5
  loop: start=0, step=1, limit=6
  $region2: #{basic_block_forward.5} parent=0 // loop_pre_header
    _
  $region3: #{basic_block_forward.5} parent=0 // loop_header
    %s10 = sphi 0, %s14
    %p11 = scmp.ge.s32.totalorder %s10, 6
    %s17 = sphi 0, %s29
    %s18 = sphi 0, %s25
    %s19 = sphi 0, %s17
    %s20 = sphi 0, %s18
    %s21 = sphi 0, %s19
    %s22 = sphi 0, %s20
    %s34 = sphi 0, %s36
    %s37 = sphi 0, %s34
    %s38 = sphi 0, %s37
    %s54 = sphi 0, %s38
    %s58 = sphi 0, %s58
    %s60 = sphi 0, %s58
    %s61 = sphi 0, %s60
    %s75 = sphi 0, %s61
    %s79 = sphi 0, %s79
    %s81 = sphi 0, %s79
    %s82 = sphi 0, %s81
    %s96 = sphi 0, %s82
    %s104 = sphi 0, %s106
    %s107 = sphi 0, %s104
    %s108 = sphi 0, %s107
    %s124 = sphi 0, %s108
    %s132 = sphi 0, %s134
    %s135 = sphi 0, %s132
    %s136 = sphi 0, %s135
    %s152 = sphi 0, %s136
  $region4: #{basic_block_forward.5} parent=0 // loop_header_branch
    %13 = sbr.rel (%p11) target = $region8
  $region5: #{basic_block_forward.5} parent=0 // loop_body
    %s15 = ssub.s32 %s10, 1
    %s16 = ssub.s32 %s10, 2
    %s23 = sadd.s32 1, %s18
    %p24 = scmp.ge.s32.totalorder %s23, 2
    %s25 = scalar_select %p24, 0, %s23
    %s26 = sadd.s32 1, %s17
    %s27 = scalar_select %p24, %s26, %s17
    %p28 = scmp.ge.s32.totalorder %s27, 2
    %s29 = scalar_select %p28, 0, %s27
    %s30 = ssub.s32 %s17, %s29
    %s31 = ssub.s32 %s18, %s25
    %s32 = sor.u32 %s30, %s31
    %p33 = scmp.eq.s32.totalorder %s32, 0
    %s35 = sadd.s32 %s34, 1
    %s36 = scalar_select %p33, %s34, %s35
    %p39 = pneg %p33
    %p40 = scmp.eq.s32.totalorder %s10, 3
    %p41 = por %p39, %p40
    %p42 = scmp.ne.s32.totalorder %s34, %s37
    %p43 = scmp.eq.s32.totalorder %s10, 0
    %p44 = por %p42, %p43
    %p45 = scmp.ne.s32.totalorder %s34, %s37
    %p46 = scmp.eq.s32.totalorder %s15, 3
    %p47 = por %p45, %p46
    %p48 = scmp.ne.s32.totalorder %s37, %s38
    %p49 = scmp.eq.s32.totalorder %s15, 0
    %p50 = por %p48, %p49
    %p51 = scmp.ne.s32.totalorder %s37, %s38
    %p52 = scmp.eq.s32.totalorder %s16, 3
    %p53 = por %p51, %p52
    %p55 = scmp.ne.s32.totalorder %s38, %s54
    %p56 = scmp.eq.s32.totalorder %s16, 0
    %p57 = por %p55, %p56
    %s59 = sadd.s32 %s58, 1
    %p62 = scmp.eq.s32.totalorder %s10, 3
    %p63 = scmp.ne.s32.totalorder %s58, %s60
    %p64 = scmp.eq.s32.totalorder %s10, 0
    %p65 = por %p63, %p64
    %p66 = scmp.ne.s32.totalorder %s58, %s60
    %p67 = scmp.eq.s32.totalorder %s15, 3
    %p68 = por %p66, %p67
    %p69 = scmp.ne.s32.totalorder %s60, %s61
    %p70 = scmp.eq.s32.totalorder %s15, 0
    %p71 = por %p69, %p70
    %p72 = scmp.ne.s32.totalorder %s60, %s61
    %p73 = scmp.eq.s32.totalorder %s16, 3
    %p74 = por %p72, %p73
    %p76 = scmp.ne.s32.totalorder %s61, %s75
    %p77 = scmp.eq.s32.totalorder %s16, 0
    %p78 = por %p76, %p77
    %s80 = sadd.s32 %s79, 1
    %p83 = scmp.eq.s32.totalorder %s10, 3
    %p84 = scmp.ne.s32.totalorder %s79, %s81
    %p85 = scmp.eq.s32.totalorder %s10, 0
    %p86 = por %p84, %p85
    %p87 = scmp.ne.s32.totalorder %s79, %s81
    %p88 = scmp.eq.s32.totalorder %s15, 3
    %p89 = por %p87, %p88
    %p90 = scmp.ne.s32.totalorder %s81, %s82
    %p91 = scmp.eq.s32.totalorder %s15, 0
    %p92 = por %p90, %p91
    %p93 = scmp.ne.s32.totalorder %s81, %s82
    %p94 = scmp.eq.s32.totalorder %s16, 3
    %p95 = por %p93, %p94
    %p97 = scmp.ne.s32.totalorder %s82, %s96
    %p98 = scmp.eq.s32.totalorder %s16, 0
    %p99 = por %p97, %p98
    %s100 = ssub.s32 %s17, %s29
    %s101 = ssub.s32 %s18, %s25
    %s102 = sor.u32 %s100, %s101
    %p103 = scmp.eq.s32.totalorder %s102, 0
    %s105 = sadd.s32 %s104, 1
    %s106 = scalar_select %p103, %s104, %s105
    %p109 = pneg %p103
    %p110 = scmp.eq.s32.totalorder %s10, 3
    %p111 = por %p109, %p110
    %p112 = scmp.ne.s32.totalorder %s104, %s107
    %p113 = scmp.eq.s32.totalorder %s10, 0
    %p114 = por %p112, %p113
    %p115 = scmp.ne.s32.totalorder %s104, %s107
    %p116 = scmp.eq.s32.totalorder %s15, 3
    %p117 = por %p115, %p116
    %p118 = scmp.ne.s32.totalorder %s107, %s108
    %p119 = scmp.eq.s32.totalorder %s15, 0
    %p120 = por %p118, %p119
    %p121 = scmp.ne.s32.totalorder %s107, %s108
    %p122 = scmp.eq.s32.totalorder %s16, 3
    %p123 = por %p121, %p122
    %p125 = scmp.ne.s32.totalorder %s108, %s124
    %p126 = scmp.eq.s32.totalorder %s16, 0
    %p127 = por %p125, %p126
    %s128 = ssub.s32 %s17, %s29
    %s129 = ssub.s32 %s18, %s25
    %s130 = sor.u32 %s128, %s129
    %p131 = scmp.eq.s32.totalorder %s130, 0
    %s133 = sadd.s32 %s132, 1
    %s134 = scalar_select %p131, %s132, %s133
    %p137 = pneg %p131
    %p138 = scmp.eq.s32.totalorder %s10, 3
    %p139 = por %p137, %p138
    %p140 = scmp.ne.s32.totalorder %s132, %s135
    %p141 = scmp.eq.s32.totalorder %s10, 0
    %p142 = por %p140, %p141
    %p143 = scmp.ne.s32.totalorder %s132, %s135
    %p144 = scmp.eq.s32.totalorder %s15, 3
    %p145 = por %p143, %p144
    %p146 = scmp.ne.s32.totalorder %s135, %s136
    %p147 = scmp.eq.s32.totalorder %s15, 0
    %p148 = por %p146, %p147
    %p149 = scmp.ne.s32.totalorder %s135, %s136
    %p150 = scmp.eq.s32.totalorder %s16, 3
    %p151 = por %p149, %p150
    %p153 = scmp.ne.s32.totalorder %s136, %s152
    %p154 = scmp.eq.s32.totalorder %s16, 0
    %p155 = por %p153, %p154
    %p156 = scmp.le.s32.totalorder 1, %s10
    %p157 = scmp.lt.s32.totalorder %s10, 5
    %p158 = pnand %p156, %p157
    %p159 = pneg %p158
    // Predicated region
    $region9: #{basic_block_forward.5} parent=5 // pred_check
      _
    $region10: #{basic_block_forward.5} parent=5 // pred_check_branch
      %161 = sbr.rel (%p158) target = $region12
    $region11: #{basic_block_forward.5} parent=5 // pred_region
      %s162 = ssub.s32 %s10, 1
      // Predicated region
      $region13: #{basic_block_forward.5} parent=11 // pred_check
        %p163 = pneg %p71
      $region14: #{basic_block_forward.5} parent=11 // pred_check_branch
        %165 = sbr.rel (%p163) target = $region16
      $region15: #{basic_block_forward.5} parent=11 // pred_region
        _
      $region16: #{basic_block_forward.5} parent=11 // pred_fallthru
        _
      // Predicated region
      $region17: #{basic_block_forward.5} parent=11 // pred_check
        %p166 = pneg %p92
      $region18: #{basic_block_forward.5} parent=11 // pred_check_branch
        %168 = sbr.rel (%p166) target = $region20
      $region19: #{basic_block_forward.5} parent=11 // pred_region
        _
      $region20: #{basic_block_forward.5} parent=11 // pred_fallthru
        _
    $region12: #{basic_block_forward.5} parent=5 // pred_fallthru
      _
    %p169 = scmp.lt.s32.totalorder %s10, 4
    // Predicated region
    $region21: #{basic_block_forward.5} parent=5 // pred_check
      %p170 = pneg %p169
    $region22: #{basic_block_forward.5} parent=5 // pred_check_branch
      %172 = sbr.rel (%p170) target = $region24
    $region23: #{basic_block_forward.5} parent=5 // pred_region
      // Predicated region
      $region25: #{basic_block_forward.5} parent=23 // pred_check
        %p173 = pneg %p44
      $region26: #{basic_block_forward.5} parent=23 // pred_check_branch
        %175 = sbr.rel (%p173) target = $region28
      $region27: #{basic_block_forward.5} parent=23 // pred_region
        %p176 = scmp.lt.s32.totalorder %s17, 1
        %s177 = scalar_select %p176, %s17, 1
        %p178 = scmp.lt.s32.totalorder %s18, 1
        %s179 = scalar_select %p178, %s18, 1
        %s180 = smul.addr %s177, 2
        %s181 = sadd.s32 %s179, %s180
        %s182 = smul.addr %s181, 4
        %s183 = scalar_lea.vmem %s0, %s182
      $region28: #{basic_block_forward.5} parent=23 // pred_fallthru
        _
      // Predicated region
      $region29: #{basic_block_forward.5} parent=23 // pred_check
        %p184 = pneg %p114
      $region30: #{basic_block_forward.5} parent=23 // pred_check_branch
        %186 = sbr.rel (%p184) target = $region32
      $region31: #{basic_block_forward.5} parent=23 // pred_region
        %p187 = scmp.lt.s32.totalorder %s17, 1
        %s188 = scalar_select %p187, %s17, 1
        %p189 = scmp.lt.s32.totalorder %s18, 1
        %s190 = scalar_select %p189, %s18, 1
        %s191 = smul.addr %s188, 2
        %s192 = sadd.s32 %s190, %s191
        %s193 = smul.addr %s192, 8
        %s194 = scalar_lea.vmem %s3, %s193
      $region32: #{basic_block_forward.5} parent=23 // pred_fallthru
        _
    $region24: #{basic_block_forward.5} parent=5 // pred_fallthru
      _
    %p195 = scmp.le.s32.totalorder 1, %s10
    %p196 = scmp.lt.s32.totalorder %s10, 5
    %p197 = pnand %p195, %p196
    %p198 = pneg %p197
    // Predicated region
    $region33: #{basic_block_forward.5} parent=5 // pred_check
      _
    $region34: #{basic_block_forward.5} parent=5 // pred_check_branch
      %200 = sbr.rel (%p197) target = $region36
    $region35: #{basic_block_forward.5} parent=5 // pred_region
      %s201 = ssub.s32 %s10, 1
      %p202 = scmp.lt.s32.totalorder %s19, 1
      %s203 = scalar_select %p202, %s19, 1
      %p204 = scmp.lt.s32.totalorder %s20, 1
      %s205 = scalar_select %p204, %s20, 1
      %s206 = smul.addr %s203, 2
      %s207 = sadd.s32 %s205, %s206
      %s208 = smul.addr %s207, 4
      %s209 = scalar_lea.vmem %s0, %s208
      %p210 = pneg %p50
      %p211 = pneg %p47
      %p212 = pneg %p71
      %p213 = pneg %p68
      %p214 = pneg %p92
      %p215 = pneg %p89
      %p216 = scmp.lt.s32.totalorder %s19, 1
      %s217 = scalar_select %p216, %s19, 1
      %p218 = scmp.lt.s32.totalorder %s20, 1
      %s219 = scalar_select %p218, %s20, 1
      %s220 = smul.addr %s217, 2
      %s221 = sadd.s32 %s219, %s220
      %s222 = smul.addr %s221, 8
      %s223 = scalar_lea.vmem %s3, %s222
      %p224 = pneg %p120
      %p225 = pneg %p117
      %p226 = pneg %p148
      %p227 = pneg %p145
      %p228 = scmp.lt.s32.totalorder %s19, 1
      %s229 = scalar_select %p228, %s19, 1
      %p230 = scmp.lt.s32.totalorder %s20, 1
      %s231 = scalar_select %p230, %s20, 1
      %s232 = smul.addr %s229, 2
      %s233 = sadd.s32 %s231, %s232
      %s234 = smul.addr %s233, 8
      %s235 = scalar_lea.vmem %s4, %s234
      %p236 = scmp.lt.s32.totalorder %s19, 1
      %s237 = scalar_select %p236, %s19, 1
      %p238 = scmp.lt.s32.totalorder %s20, 1
      %s239 = scalar_select %p238, %s20, 1
      %s240 = smul.addr %s237, 2
      %s241 = sadd.s32 %s239, %s240
      %s242 = smul.addr %s241, 4
      %s243 = scalar_lea.vmem %s0, %s242
      %p244 = scmp.lt.s32.totalorder %s19, 1
      %s245 = scalar_select %p244, %s19, 1
      %p246 = scmp.lt.s32.totalorder %s20, 1
      %s247 = scalar_select %p246, %s20, 1
      %s248 = smul.addr %s245, 2
      %s249 = sadd.s32 %s247, %s248
      %s250 = smul.addr %s249, 8
      %s251 = scalar_lea.vmem %s3, %s250
      %p252 = scmp.lt.s32.totalorder %s19, 1
      %s253 = scalar_select %p252, %s19, 1
      %p254 = scmp.lt.s32.totalorder %s20, 1
      %s255 = scalar_select %p254, %s20, 1
      %s256 = smul.addr %s253, 2
      %s257 = sadd.s32 %s255, %s256
      %s258 = smul.addr %s257, 8
      %s259 = scalar_lea.vmem %s4, %s258
      %v260 = vld [vmem:[%s243] sm:$0xf]
      %v261 = vunpack.c.l.bf16 %v260
      %v262 = vld [vmem:[%s1] sm:$0x1]
      %v264 = vlaneseq
      %v265 = vshrl.u32 %v264, 7
      %v266 = vsub.s32 0, %v265
      %v267 = vrot.slane %v262, %v266
      %v269 = vmul.f32 %v261, %v267
      %v270 = vld [vmem:[%s2] sm:$0x1]
      %v272 = vlaneseq
      %v273 = vshrl.u32 %v272, 7
      %v274 = vsub.s32 0, %v273
      %v275 = vrot.slane %v270, %v274
      %v277 = vadd.f32 %v269, %v275
      %v278 = vld [vmem:[%s251] sm:$0xff]
      %v279 = vadd.f32 %v277, %v278
      %v280 = vmax.f32 %v279, 0.0
      %281 = vst [vmem:[%s259] sm:$0xff] %v280
      %p282 = scmp.lt.s32.totalorder %s19, 1
      %s283 = scalar_select %p282, %s19, 1
      %p284 = scmp.lt.s32.totalorder %s20, 1
      %s285 = scalar_select %p284, %s20, 1
      %s286 = smul.addr %s283, 2
      %s287 = sadd.s32 %s285, %s286
      %s288 = smul.addr %s287, 8
      %s289 = scalar_lea.vmem %s4, %s288
      // Predicated region
      $region37: #{basic_block_forward.5} parent=35 // pred_check
        %p290 = pneg %p145
      $region38: #{basic_block_forward.5} parent=35 // pred_check_branch
        %292 = sbr.rel (%p290) target = $region40
      $region39: #{basic_block_forward.5} parent=35 // pred_region
        _
      $region40: #{basic_block_forward.5} parent=35 // pred_fallthru
        _
    $region36: #{basic_block_forward.5} parent=5 // pred_fallthru
      _
    %p293 = scmp.le.s32.totalorder 2, %s10
    // Predicated region
    $region41: #{basic_block_forward.5} parent=5 // pred_check
      %p294 = pneg %p293
    $region42: #{basic_block_forward.5} parent=5 // pred_check_branch
      %296 = sbr.rel (%p294) target = $region44
    $region43: #{basic_block_forward.5} parent=5 // pred_region
      %s297 = ssub.s32 %s10, 2
      // Predicated region
      $region45: #{basic_block_forward.5} parent=43 // pred_check
        %p298 = pneg %p151
      $region46: #{basic_block_forward.5} parent=43 // pred_check_branch
        %300 = sbr.rel (%p298) target = $region48
      $region47: #{basic_block_forward.5} parent=43 // pred_region
        %p301 = scmp.lt.s32.totalorder %s21, 1
        %s302 = scalar_select %p301, %s21, 1
        %p303 = scmp.lt.s32.totalorder %s22, 1
        %s304 = scalar_select %p303, %s22, 1
        %s305 = smul.addr %s302, 2
        %s306 = sadd.s32 %s304, %s305
        %s307 = smul.addr %s306, 8
        %s308 = scalar_lea.vmem %s4, %s307
      $region48: #{basic_block_forward.5} parent=43 // pred_fallthru
        _
    $region44: #{basic_block_forward.5} parent=5 // pred_fallthru
      _
  $region6: #{basic_block_forward.5} parent=0 // loop_footer
    %s14 = sadd.s32 1, %s10
  $region7: #{basic_block_forward.5} parent=0 // loop_footer_branch
    %9 = sbr.rel target = $region3
  $region8: #{basic_block_forward.5} parent=0 // loop_exit
    _

// kernel: basic_block_forward.4
$region0: #{basic_block_forward.4}
  #allocation0 [shape = 'u32[]', space=smem, size = 0x4, offset = 0x4, fixed_abs, tag = 'smem constant byte address 0x4 - core index']
  #allocation1 [shape = 'u32[144,128]{1,0:T(1,128)}', space=vmem, size = 0x12000, scoped, tag = 'internal scratch']
  #allocation2 [shape = 'bf16[18,18,8]{2,1,0:T(8,128)(2,1)}', space=vmem, size = 0x1b000, scoped, tag = 'scratch operand']
  %s0 = inlined_call_operand.vmem [shape: bf16[2,16,16,8], index: 0, kind: input, shape index: {}]
  %s1 = inlined_call_operand.vmem [shape: f32[1,8], index: 1, kind: input, shape index: {}]
  %s2 = inlined_call_operand.vmem [shape: f32[1,8], index: 2, kind: input, shape index: {}]
  %s3 = inlined_call_operand.vmem [shape: bf16[72,8], index: 3, kind: input, shape index: {}]
  %s4 = inlined_call_operand.vmem [shape: bf16[2,16,16,8], index: 4, kind: output, shape index: {0}]
  %s5 = inlined_call_operand.vmem [shape: f32[2,2,8], index: 5, kind: output, shape index: {1}]
  %6 = xla_tuple %s4, %s5
  %s7 = sld [smem:[#allocation0]]
  $region61: #{basic_block_forward.4} parent=0
    _
  %s9 = ssub.s32 1, %s7
  %s10 = scalar_select 0, %s9, %s7
  loop: start=0, step=1, limit=6
  $region2: #{basic_block_forward.4} parent=0 // loop_pre_header
    _
  $region3: #{basic_block_forward.4} parent=0 // loop_header
    %s12 = sphi 0, %s16
    %p13 = scmp.ge.s32.totalorder %s12, 6
    %s19 = sphi 0, %s31
    %s20 = sphi 0, %s27
    %s21 = sphi 0, %s19
    %s22 = sphi 0, %s20
    %s23 = sphi 0, %s21
    %s24 = sphi 0, %s22
    %s34 = sphi 0, %s36
    %s37 = sphi 0, %s34
    %s38 = sphi 0, %s37
    %s54 = sphi 0, %s38
    %s58 = sphi 0, %s58
    %s60 = sphi 0, %s58
    %s61 = sphi 0, %s60
    %s75 = sphi 0, %s61
    %s79 = sphi 0, %s79
    %s81 = sphi 0, %s79
    %s82 = sphi 0, %s81
    %s96 = sphi 0, %s82
    %s100 = sphi 0, %s100
    %s102 = sphi 0, %s100
    %s103 = sphi 0, %s102
    %s117 = sphi 0, %s103
    %s125 = sphi 0, %s127
    %s128 = sphi 0, %s125
    %s129 = sphi 0, %s128
    %s145 = sphi 0, %s129
    %s151 = sphi 0, %s153
    %s154 = sphi 0, %s151
    %s155 = sphi 0, %s154
    %s171 = sphi 0, %s155
  $region4: #{basic_block_forward.4} parent=0 // loop_header_branch
    %15 = sbr.rel (%p13) target = $region8
  $region5: #{basic_block_forward.4} parent=0 // loop_body
    %s17 = ssub.s32 %s12, 1
    %s18 = ssub.s32 %s12, 2
    %s25 = sadd.s32 1, %s20
    %p26 = scmp.ge.s32.totalorder %s25, 2
    %s27 = scalar_select %p26, 0, %s25
    %s28 = sadd.s32 1, %s19
    %s29 = scalar_select %p26, %s28, %s19
    %p30 = scmp.ge.s32.totalorder %s29, 2
    %s31 = scalar_select %p30, 0, %s29
    %s32 = ssub.s32 %s19, %s31
    %p33 = scmp.eq.s32.totalorder %s32, 0
    %s35 = sadd.s32 %s34, 1
    %s36 = scalar_select %p33, %s34, %s35
    %p39 = pneg %p33
    %p40 = scmp.eq.s32.totalorder %s12, 3
    %p41 = por %p39, %p40
    %p42 = scmp.ne.s32.totalorder %s34, %s37
    %p43 = scmp.eq.s32.totalorder %s12, 0
    %p44 = por %p42, %p43
    %p45 = scmp.ne.s32.totalorder %s34, %s37
    %p46 = scmp.eq.s32.totalorder %s17, 3
    %p47 = por %p45, %p46
    %p48 = scmp.ne.s32.totalorder %s37, %s38
    %p49 = scmp.eq.s32.totalorder %s17, 0
    %p50 = por %p48, %p49
    %p51 = scmp.ne.s32.totalorder %s37, %s38
    %p52 = scmp.eq.s32.totalorder %s18, 3
    %p53 = por %p51, %p52
    %p55 = scmp.ne.s32.totalorder %s38, %s54
    %p56 = scmp.eq.s32.totalorder %s18, 0
    %p57 = por %p55, %p56
    %s59 = sadd.s32 %s58, 1
    %p62 = scmp.eq.s32.totalorder %s12, 3
    %p63 = scmp.ne.s32.totalorder %s58, %s60
    %p64 = scmp.eq.s32.totalorder %s12, 0
    %p65 = por %p63, %p64
    %p66 = scmp.ne.s32.totalorder %s58, %s60
    %p67 = scmp.eq.s32.totalorder %s17, 3
    %p68 = por %p66, %p67
    %p69 = scmp.ne.s32.totalorder %s60, %s61
    %p70 = scmp.eq.s32.totalorder %s17, 0
    %p71 = por %p69, %p70
    %p72 = scmp.ne.s32.totalorder %s60, %s61
    %p73 = scmp.eq.s32.totalorder %s18, 3
    %p74 = por %p72, %p73
    %p76 = scmp.ne.s32.totalorder %s61, %s75
    %p77 = scmp.eq.s32.totalorder %s18, 0
    %p78 = por %p76, %p77
    %s80 = sadd.s32 %s79, 1
    %p83 = scmp.eq.s32.totalorder %s12, 3
    %p84 = scmp.ne.s32.totalorder %s79, %s81
    %p85 = scmp.eq.s32.totalorder %s12, 0
    %p86 = por %p84, %p85
    %p87 = scmp.ne.s32.totalorder %s79, %s81
    %p88 = scmp.eq.s32.totalorder %s17, 3
    %p89 = por %p87, %p88
    %p90 = scmp.ne.s32.totalorder %s81, %s82
    %p91 = scmp.eq.s32.totalorder %s17, 0
    %p92 = por %p90, %p91
    %p93 = scmp.ne.s32.totalorder %s81, %s82
    %p94 = scmp.eq.s32.totalorder %s18, 3
    %p95 = por %p93, %p94
    %p97 = scmp.ne.s32.totalorder %s82, %s96
    %p98 = scmp.eq.s32.totalorder %s18, 0
    %p99 = por %p97, %p98
    %s101 = sadd.s32 %s100, 1
    %p104 = scmp.eq.s32.totalorder %s12, 3
    %p105 = scmp.ne.s32.totalorder %s100, %s102
    %p106 = scmp.eq.s32.totalorder %s12, 0
    %p107 = por %p105, %p106
    %p108 = scmp.ne.s32.totalorder %s100, %s102
    %p109 = scmp.eq.s32.totalorder %s17, 3
    %p110 = por %p108, %p109
    %p111 = scmp.ne.s32.totalorder %s102, %s103
    %p112 = scmp.eq.s32.totalorder %s17, 0
    %p113 = por %p111, %p112
    %p114 = scmp.ne.s32.totalorder %s102, %s103
    %p115 = scmp.eq.s32.totalorder %s18, 3
    %p116 = por %p114, %p115
    %p118 = scmp.ne.s32.totalorder %s103, %s117
    %p119 = scmp.eq.s32.totalorder %s18, 0
    %p120 = por %p118, %p119
    %s121 = ssub.s32 %s19, %s31
    %s122 = ssub.s32 %s20, %s27
    %s123 = sor.u32 %s121, %s122
    %p124 = scmp.eq.s32.totalorder %s123, 0
    %s126 = sadd.s32 %s125, 1
    %s127 = scalar_select %p124, %s125, %s126
    %p130 = pneg %p124
    %p131 = scmp.eq.s32.totalorder %s12, 3
    %p132 = por %p130, %p131
    %p133 = scmp.ne.s32.totalorder %s125, %s128
    %p134 = scmp.eq.s32.totalorder %s12, 0
    %p135 = por %p133, %p134
    %p136 = scmp.ne.s32.totalorder %s125, %s128
    %p137 = scmp.eq.s32.totalorder %s17, 3
    %p138 = por %p136, %p137
    %p139 = scmp.ne.s32.totalorder %s128, %s129
    %p140 = scmp.eq.s32.totalorder %s17, 0
    %p141 = por %p139, %p140
    %p142 = scmp.ne.s32.totalorder %s128, %s129
    %p143 = scmp.eq.s32.totalorder %s18, 3
    %p144 = por %p142, %p143
    %p146 = scmp.ne.s32.totalorder %s129, %s145
    %p147 = scmp.eq.s32.totalorder %s18, 0
    %p148 = por %p146, %p147
    %s149 = ssub.s32 %s19, %s31
    %p150 = scmp.eq.s32.totalorder %s149, 0
    %s152 = sadd.s32 %s151, 1
    %s153 = scalar_select %p150, %s151, %s152
    %p156 = pneg %p150
    %p157 = scmp.eq.s32.totalorder %s12, 3
    %p158 = por %p156, %p157
    %p159 = scmp.ne.s32.totalorder %s151, %s154
    %p160 = scmp.eq.s32.totalorder %s12, 0
    %p161 = por %p159, %p160
    %p162 = scmp.ne.s32.totalorder %s151, %s154
    %p163 = scmp.eq.s32.totalorder %s17, 3
    %p164 = por %p162, %p163
    %p165 = scmp.ne.s32.totalorder %s154, %s155
    %p166 = scmp.eq.s32.totalorder %s17, 0
    %p167 = por %p165, %p166
    %p168 = scmp.ne.s32.totalorder %s154, %s155
    %p169 = scmp.eq.s32.totalorder %s18, 3
    %p170 = por %p168, %p169
    %p172 = scmp.ne.s32.totalorder %s155, %s171
    %p173 = scmp.eq.s32.totalorder %s18, 0
    %p174 = por %p172, %p173
    %p175 = scmp.le.s32.totalorder 1, %s12
    %p176 = scmp.lt.s32.totalorder %s12, 5
    %p177 = pnand %p175, %p176
    %p178 = pneg %p177
    // Predicated region
    $region9: #{basic_block_forward.4} parent=5 // pred_check
      _
    $region10: #{basic_block_forward.4} parent=5 // pred_check_branch
      %180 = sbr.rel (%p177) target = $region12
    $region11: #{basic_block_forward.4} parent=5 // pred_region
      %s181 = ssub.s32 %s12, 1
      // Predicated region
      $region13: #{basic_block_forward.4} parent=11 // pred_check
        %p182 = pneg %p71
      $region14: #{basic_block_forward.4} parent=11 // pred_check_branch
        %184 = sbr.rel (%p182) target = $region16
      $region15: #{basic_block_forward.4} parent=11 // pred_region
        _
      $region16: #{basic_block_forward.4} parent=11 // pred_fallthru
        _
      // Predicated region
      $region17: #{basic_block_forward.4} parent=11 // pred_check
        %p185 = pneg %p92
      $region18: #{basic_block_forward.4} parent=11 // pred_check_branch
        %187 = sbr.rel (%p185) target = $region20
      $region19: #{basic_block_forward.4} parent=11 // pred_region
        _
      $region20: #{basic_block_forward.4} parent=11 // pred_fallthru
        _
      // Predicated region
      $region21: #{basic_block_forward.4} parent=11 // pred_check
        %p188 = pneg %p113
      $region22: #{basic_block_forward.4} parent=11 // pred_check_branch
        %190 = sbr.rel (%p188) target = $region24
      $region23: #{basic_block_forward.4} parent=11 // pred_region
        _
      $region24: #{basic_block_forward.4} parent=11 // pred_fallthru
        _
    $region12: #{basic_block_forward.4} parent=5 // pred_fallthru
      _
    %p191 = scmp.lt.s32.totalorder %s12, 4
    // Predicated region
    $region25: #{basic_block_forward.4} parent=5 // pred_check
      %p192 = pneg %p191
    $region26: #{basic_block_forward.4} parent=5 // pred_check_branch
      %194 = sbr.rel (%p192) target = $region28
    $region27: #{basic_block_forward.4} parent=5 // pred_region
      // Predicated region
      $region29: #{basic_block_forward.4} parent=27 // pred_check
        %p195 = pneg %p44
      $region30: #{basic_block_forward.4} parent=27 // pred_check_branch
        %197 = sbr.rel (%p195) target = $region32
      $region31: #{basic_block_forward.4} parent=27 // pred_region
        %p198 = scmp.lt.s32.totalorder %s19, 1
        %s199 = scalar_select %p198, %s19, 1
        %s200 = smul.addr %s199, 32
        %s201 = smul.addr %s200, 4
        %s202 = scalar_lea.vmem %s0, %s201
      $region32: #{basic_block_forward.4} parent=27 // pred_fallthru
        _
    $region28: #{basic_block_forward.4} parent=5 // pred_fallthru
      _
    %p203 = scmp.le.s32.totalorder 1, %s12
    %p204 = scmp.lt.s32.totalorder %s12, 5
    %p205 = pnand %p203, %p204
    %p206 = pneg %p205
    // Predicated region
    $region33: #{basic_block_forward.4} parent=5 // pred_check
      _
    $region34: #{basic_block_forward.4} parent=5 // pred_check_branch
      %208 = sbr.rel (%p205) target = $region36
    $region35: #{basic_block_forward.4} parent=5 // pred_region
      %s209 = ssub.s32 %s12, 1
      %p210 = scmp.lt.s32.totalorder %s21, 1
      %s211 = scalar_select %p210, %s21, 1
      %s212 = smul.addr %s211, 32
      %s213 = smul.addr %s212, 4
      %s214 = scalar_lea.vmem %s0, %s213
      %p215 = pneg %p50
      %p216 = pneg %p47
      %p217 = pneg %p71
      %p218 = pneg %p68
      %p219 = pneg %p92
      %p220 = pneg %p89
      %p221 = pneg %p113
      %p222 = pneg %p110
      %p223 = pneg %p141
      %p224 = pneg %p138
      %s225 = smul.u32 8, %s22
      %p226 = scmp.lt.s32.totalorder %s21, 1
      %s227 = scalar_select %p226, %s21, 1
      %p228 = scmp.lt.s32.totalorder %s225, 15
      %s229 = scalar_select %p228, %s225, 15
      %s230 = smul.addr %s229, 2
      %s231 = smul.addr %s227, 32
      %s232 = sadd.s32 %s230, %s231
      %s233 = smul.addr %s232, 4
      %s234 = scalar_lea.vmem %s4, %s233
      %p235 = pneg %p167
      %p236 = pneg %p164
      %p237 = scmp.lt.s32.totalorder %s21, 1
      %s238 = scalar_select %p237, %s21, 1
      %s239 = smul.addr %s238, 2
      %s240 = scalar_lea.vmem %s5, %s239
      %p241 = scmp.lt.s32.totalorder %s21, 1
      %s242 = scalar_select %p241, %s21, 1
      %s243 = smul.addr %s242, 32
      %s244 = smul.addr %s243, 4
      %s245 = scalar_lea.vmem %s0, %s244
      %s246 = smul.u32 8, %s22
      %p247 = scmp.lt.s32.totalorder %s21, 1
      %s248 = scalar_select %p247, %s21, 1
      %p249 = scmp.lt.s32.totalorder %s246, 15
      %s250 = scalar_select %p249, %s246, 15
      %s251 = smul.addr %s250, 2
      %s252 = smul.addr %s248, 32
      %s253 = sadd.s32 %s251, %s252
      %s254 = smul.addr %s253, 4
      %s255 = scalar_lea.vmem %s4, %s254
      %s256 = smul.u32 8, %s22
      %p257 = scmp.lt.s32.totalorder %s21, 1
      %s258 = scalar_select %p257, %s21, 1
      %s259 = smul.addr %s258, 2
      %s260 = scalar_lea.vmem %s5, %s259
      %p262 = scmp.eq.s32.totalorder %s22, 0
      // Predicated region
      $region37: #{basic_block_forward.4} parent=35 // pred_check
        %p263 = pneg %p262
      $region38: #{basic_block_forward.4} parent=35 // pred_check_branch
        %265 = sbr.rel (%p263) target = $region40
      $region39: #{basic_block_forward.4} parent=35 // pred_region
        %vm266 = vcmask 58368
        %267 = vst.msk [vmem:[%s260] sm:$0x3] %vm266, 0.0
        %v268 = vld [vmem:[%s245] sm:$0xf]
        %v269 = vld [vmem:[%s245 + $0x4] sm:$0xf]
        %v270 = vld [vmem:[%s245 + $0x8] sm:$0xf]
        %v271 = vld [vmem:[%s245 + $0xc] sm:$0xf]
        %v272 = vld [vmem:[%s245 + $0x10] sm:$0xf]
        %v273 = vld [vmem:[%s245 + $0x14] sm:$0xf]
        %v274 = vld [vmem:[%s245 + $0x18] sm:$0xf]
        %v275 = vld [vmem:[%s245 + $0x1c] sm:$0xf]
        %v276 = vld [vmem:[%s245 + $0x20] sm:$0xf]
        %v277 = vld [vmem:[%s245 + $0x24] sm:$0xf]
        %v278 = vld [vmem:[%s245 + $0x28] sm:$0xf]
        %v279 = vld [vmem:[%s245 + $0x2c] sm:$0xf]
        %v280 = vld [vmem:[%s245 + $0x30] sm:$0xf]
        %v281 = vld [vmem:[%s245 + $0x34] sm:$0xf]
        %v282 = vld [vmem:[%s245 + $0x38] sm:$0xf]
        %v283 = vld [vmem:[%s245 + $0x3c] sm:$0xf]
        %v284 = vld [vmem:[%s245 + $0x40] sm:$0xf]
        %v285 = vld [vmem:[%s245 + $0x44] sm:$0xf]
        %v286 = vld [vmem:[%s245 + $0x48] sm:$0xf]
        %v287 = vld [vmem:[%s245 + $0x4c] sm:$0xf]
        %v288 = vld [vmem:[%s245 + $0x50] sm:$0xf]
        %v289 = vld [vmem:[%s245 + $0x54] sm:$0xf]
        %v290 = vld [vmem:[%s245 + $0x58] sm:$0xf]
        %v291 = vld [vmem:[%s245 + $0x5c] sm:$0xf]
        %v292 = vld [vmem:[%s245 + $0x60] sm:$0xf]
        %v293 = vld [vmem:[%s245 + $0x64] sm:$0xf]
        %v294 = vld [vmem:[%s245 + $0x68] sm:$0xf]
        %v295 = vld [vmem:[%s245 + $0x6c] sm:$0xf]
        %v296 = vld [vmem:[%s245 + $0x70] sm:$0xf]
        %v297 = vld [vmem:[%s245 + $0x74] sm:$0xf]
        %v298 = vld [vmem:[%s245 + $0x78] sm:$0xf]
        %v299 = vld [vmem:[%s245 + $0x7c] sm:$0xf]
        %v300 = vunpack.c.l.bf16 %v268
        %v301 = vunpack.c.l.bf16 %v269
        %v302 = vunpack.c.l.bf16 %v270
        %v303 = vunpack.c.l.bf16 %v271
        %v304 = vunpack.c.l.bf16 %v272
        %v305 = vunpack.c.l.bf16 %v273
        %v306 = vunpack.c.l.bf16 %v274
        %v307 = vunpack.c.l.bf16 %v275
        %v308 = vunpack.c.l.bf16 %v276
        %v309 = vunpack.c.l.bf16 %v277
        %v310 = vunpack.c.l.bf16 %v278
        %v311 = vunpack.c.l.bf16 %v279
        %v312 = vunpack.c.l.bf16 %v280
        %v313 = vunpack.c.l.bf16 %v281
        %v314 = vunpack.c.l.bf16 %v282
        %v315 = vunpack.c.l.bf16 %v283
        %v316 = vunpack.c.l.bf16 %v284
        %v317 = vunpack.c.l.bf16 %v285
        %v318 = vunpack.c.l.bf16 %v286
        %v319 = vunpack.c.l.bf16 %v287
        %v320 = vunpack.c.l.bf16 %v288
        %v321 = vunpack.c.l.bf16 %v289
        %v322 = vunpack.c.l.bf16 %v290
        %v323 = vunpack.c.l.bf16 %v291
        %v324 = vunpack.c.l.bf16 %v292
        %v325 = vunpack.c.l.bf16 %v293
        %v326 = vunpack.c.l.bf16 %v294
        %v327 = vunpack.c.l.bf16 %v295
        %v328 = vunpack.c.l.bf16 %v296
        %v329 = vunpack.c.l.bf16 %v297
        %v330 = vunpack.c.l.bf16 %v298
        %v331 = vunpack.c.l.bf16 %v299
        %v332 = vld [vmem:[%s1] sm:$0x1]
        %v334 = vlaneseq
        %v335 = vshrl.u32 %v334, 7
        %v336 = vsub.s32 0, %v335
        %v337 = vrot.slane %v332, %v336
        %v339 = vmul.f32 %v300, %v337
        %v340 = vmul.f32 %v301, %v337
        %v341 = vmul.f32 %v302, %v337
        %v342 = vmul.f32 %v303, %v337
        %v343 = vmul.f32 %v304, %v337
        %v344 = vmul.f32 %v305, %v337
        %v345 = vmul.f32 %v306, %v337
        %v346 = vmul.f32 %v307, %v337
        %v347 = vmul.f32 %v308, %v337
        %v348 = vmul.f32 %v309, %v337
        %v349 = vmul.f32 %v310, %v337
        %v350 = vmul.f32 %v311, %v337
        %v351 = vmul.f32 %v312, %v337
        %v352 = vmul.f32 %v313, %v337
        %v353 = vmul.f32 %v314, %v337
        %v354 = vmul.f32 %v315, %v337
        %v355 = vmul.f32 %v316, %v337
        %v356 = vmul.f32 %v317, %v337
        %v357 = vmul.f32 %v318, %v337
        %v358 = vmul.f32 %v319, %v337
        %v359 = vmul.f32 %v320, %v337
        %v360 = vmul.f32 %v321, %v337
        %v361 = vmul.f32 %v322, %v337
        %v362 = vmul.f32 %v323, %v337
        %v363 = vmul.f32 %v324, %v337
        %v364 = vmul.f32 %v325, %v337
        %v365 = vmul.f32 %v326, %v337
        %v366 = vmul.f32 %v327, %v337
        %v367 = vmul.f32 %v328, %v337
        %v368 = vmul.f32 %v329, %v337
        %v369 = vmul.f32 %v330, %v337
        %v370 = vmul.f32 %v331, %v337
        %v371 = vld [vmem:[%s2] sm:$0x1]
        %v373 = vlaneseq
        %v374 = vshrl.u32 %v373, 7
        %v375 = vsub.s32 0, %v374
        %v376 = vrot.slane %v371, %v375
        %v378 = vadd.f32 %v339, %v376
        %v379 = vadd.f32 %v340, %v376
        %v380 = vadd.f32 %v341, %v376
        %v381 = vadd.f32 %v342, %v376
        %v382 = vadd.f32 %v343, %v376
        %v383 = vadd.f32 %v344, %v376
        %v384 = vadd.f32 %v345, %v376
        %v385 = vadd.f32 %v346, %v376
        %v386 = vadd.f32 %v347, %v376
        %v387 = vadd.f32 %v348, %v376
        %v388 = vadd.f32 %v349, %v376
        %v389 = vadd.f32 %v350, %v376
        %v390 = vadd.f32 %v351, %v376
        %v391 = vadd.f32 %v352, %v376
        %v392 = vadd.f32 %v353, %v376
        %v393 = vadd.f32 %v354, %v376
        %v394 = vadd.f32 %v355, %v376
        %v395 = vadd.f32 %v356, %v376
        %v396 = vadd.f32 %v357, %v376
        %v397 = vadd.f32 %v358, %v376
        %v398 = vadd.f32 %v359, %v376
        %v399 = vadd.f32 %v360, %v376
        %v400 = vadd.f32 %v361, %v376
        %v401 = vadd.f32 %v362, %v376
        %v402 = vadd.f32 %v363, %v376
        %v403 = vadd.f32 %v364, %v376
        %v404 = vadd.f32 %v365, %v376
        %v405 = vadd.f32 %v366, %v376
        %v406 = vadd.f32 %v367, %v376
        %v407 = vadd.f32 %v368, %v376
        %v408 = vadd.f32 %v369, %v376
        %v409 = vadd.f32 %v370, %v376
        %v410 = vmax.f32 %v378, 0.0
        %v411 = vmax.f32 %v379, 0.0
        %v412 = vmax.f32 %v380, 0.0
        %v413 = vmax.f32 %v381, 0.0
        %v414 = vmax.f32 %v382, 0.0
        %v415 = vmax.f32 %v383, 0.0
        %v416 = vmax.f32 %v384, 0.0
        %v417 = vmax.f32 %v385, 0.0
        %v418 = vmax.f32 %v386, 0.0
        %v419 = vmax.f32 %v387, 0.0
        %v420 = vmax.f32 %v388, 0.0
        %v421 = vmax.f32 %v389, 0.0
        %v422 = vmax.f32 %v390, 0.0
        %v423 = vmax.f32 %v391, 0.0
        %v424 = vmax.f32 %v392, 0.0
        %v425 = vmax.f32 %v393, 0.0
        %v426 = vmax.f32 %v394, 0.0
        %v427 = vmax.f32 %v395, 0.0
        %v428 = vmax.f32 %v396, 0.0
        %v429 = vmax.f32 %v397, 0.0
        %v430 = vmax.f32 %v398, 0.0
        %v431 = vmax.f32 %v399, 0.0
        %v432 = vmax.f32 %v400, 0.0
        %v433 = vmax.f32 %v401, 0.0
        %v434 = vmax.f32 %v402, 0.0
        %v435 = vmax.f32 %v403, 0.0
        %v436 = vmax.f32 %v404, 0.0
        %v437 = vmax.f32 %v405, 0.0
        %v438 = vmax.f32 %v406, 0.0
        %v439 = vmax.f32 %v407, 0.0
        %v440 = vmax.f32 %v408, 0.0
        %v441 = vmax.f32 %v409, 0.0
        %v442 = vpack.c.bf16 %v411, %v410
        %v443 = vpack.c.bf16 %v413, %v412
        %v444 = vpack.c.bf16 %v415, %v414
        %v445 = vpack.c.bf16 %v417, %v416
        %v446 = vpack.c.bf16 %v419, %v418
        %v447 = vpack.c.bf16 %v421, %v420
        %v448 = vpack.c.bf16 %v423, %v422
        %v449 = vpack.c.bf16 %v425, %v424
        %v450 = vpack.c.bf16 %v427, %v426
        %v451 = vpack.c.bf16 %v429, %v428
        %v452 = vpack.c.bf16 %v431, %v430
        %v453 = vpack.c.bf16 %v433, %v432
        %v454 = vpack.c.bf16 %v435, %v434
        %v455 = vpack.c.bf16 %v437, %v436
        %v456 = vpack.c.bf16 %v439, %v438
        %v457 = vpack.c.bf16 %v441, %v440
        %v459 = vshrl.u32 0, 16
        %v461 = vrot.slane %v459, 7
        %v462 = vshll.u32 0, 16
        %v464 = vor.u32 %v461, %v462
        %v466 = vshrl.u32 %v442, 16
        %v468 = vrot.slane %v466, 7
        %v469 = vshll.u32 %v442, 16
        %v471 = vor.u32 %v468, %v469
        %v473 = vshrl.u32 %v443, 16
        %v475 = vrot.slane %v473, 7
        %v476 = vshll.u32 %v443, 16
        %v478 = vor.u32 %v475, %v476
        %v480 = vshrl.u32 %v444, 16
        %v482 = vrot.slane %v480, 7
        %v483 = vshll.u32 %v444, 16
        %v485 = vor.u32 %v482, %v483
        %v487 = vshrl.u32 %v445, 16
        %v489 = vrot.slane %v487, 7
        %v490 = vshll.u32 %v445, 16
        %v492 = vor.u32 %v489, %v490
        %v494 = vshrl.u32 %v446, 16
        %v496 = vrot.slane %v494, 7
        %v497 = vshll.u32 %v446, 16
        %v499 = vor.u32 %v496, %v497
        %v501 = vshrl.u32 %v447, 16
        %v503 = vrot.slane %v501, 7
        %v504 = vshll.u32 %v447, 16
        %v506 = vor.u32 %v503, %v504
        %v508 = vshrl.u32 %v448, 16
        %v510 = vrot.slane %v508, 7
        %v511 = vshll.u32 %v448, 16
        %v513 = vor.u32 %v510, %v511
        %v515 = vshrl.u32 %v449, 16
        %v517 = vrot.slane %v515, 7
        %v518 = vshll.u32 %v449, 16
        %v520 = vor.u32 %v517, %v518
        %v522 = vshrl.u32 %v450, 16
        %v524 = vrot.slane %v522, 7
        %v525 = vshll.u32 %v450, 16
        %v527 = vor.u32 %v524, %v525
        %v529 = vshrl.u32 %v451, 16
        %v531 = vrot.slane %v529, 7
        %v532 = vshll.u32 %v451, 16
        %v534 = vor.u32 %v531, %v532
        %v536 = vshrl.u32 %v452, 16
        %v538 = vrot.slane %v536, 7
        %v539 = vshll.u32 %v452, 16
        %v541 = vor.u32 %v538, %v539
        %v543 = vshrl.u32 %v453, 16
        %v545 = vrot.slane %v543, 7
        %v546 = vshll.u32 %v453, 16
        %v548 = vor.u32 %v545, %v546
        %v550 = vshrl.u32 %v454, 16
        %v552 = vrot.slane %v550, 7
        %v553 = vshll.u32 %v454, 16
        %v555 = vor.u32 %v552, %v553
        %v557 = vshrl.u32 %v455, 16
        %v559 = vrot.slane %v557, 7
        %v560 = vshll.u32 %v455, 16
        %v562 = vor.u32 %v559, %v560
        %v564 = vshrl.u32 %v456, 16
        %v566 = vrot.slane %v564, 7
        %v567 = vshll.u32 %v456, 16
        %v569 = vor.u32 %v566, %v567
        %v571 = vshrl.u32 %v457, 16
        %v573 = vrot.slane %v571, 7
        %v574 = vshll.u32 %v457, 16
        %v576 = vor.u32 %v573, %v574
        %vm611 = vcmask 1040384
        %vm612 = vsmask.f32 256
        %vm613 = vmand %vm611, %vm612
        %v614 = vsel %vm613, 0, %v464
        %v615 = vsel %vm613, 0, %v471
        %v616 = vsel %vm613, 0, %v478
        %v617 = vsel %vm613, 0, %v485
        %v618 = vsel %vm613, 0, %v492
        %v619 = vsel %vm613, 0, %v499
        %v620 = vsel %vm613, 0, %v506
        %v621 = vsel %vm613, 0, %v513
        %v622 = vsel %vm613, 0, %v520
        %v623 = vsel %vm613, 0, %v527
        %v624 = vsel %vm613, 0, %v534
        %v625 = vsel %vm613, 0, %v541
        %v626 = vsel %vm613, 0, %v548
        %v627 = vsel %vm613, 0, %v555
        %v628 = vsel %vm613, 0, %v562
        %v629 = vsel %vm613, 0, %v569
        %v630 = vsel %vm613, 0, %v576
        %v631 = vsel %vm613, %v461, 0
        %v632 = vsel %vm613, %v468, 0
        %v633 = vsel %vm613, %v475, 0
        %v634 = vsel %vm613, %v482, 0
        %v635 = vsel %vm613, %v489, 0
        %v636 = vsel %vm613, %v496, 0
        %v637 = vsel %vm613, %v503, 0
        %v638 = vsel %vm613, %v510, 0
        %v639 = vsel %vm613, %v517, 0
        %v640 = vsel %vm613, %v524, 0
        %v641 = vsel %vm613, %v531, 0
        %v642 = vsel %vm613, %v538, 0
        %v643 = vsel %vm613, %v545, 0
        %v644 = vsel %vm613, %v552, 0
        %v645 = vsel %vm613, %v559, 0
        %v646 = vsel %vm613, %v566, 0
        %v647 = vsel %vm613, %v573, 0
        %v682 = vunpack.c.l.b16 %v614
        %v683 = vunpack.c.h.b16 %v614
        %v684 = vunpack.c.l.b16 %v631
        %v685 = vunpack.c.l.b16 %v615
        %v686 = vunpack.c.h.b16 %v615
        %v687 = vunpack.c.l.b16 %v632
        %v688 = vunpack.c.l.b16 %v616
        %v689 = vunpack.c.h.b16 %v616
        %v690 = vunpack.c.l.b16 %v633
        %v691 = vunpack.c.l.b16 %v617
        %v692 = vunpack.c.h.b16 %v617
        %v693 = vunpack.c.l.b16 %v634
        %v694 = vunpack.c.l.b16 %v618
        %v695 = vunpack.c.h.b16 %v618
        %v696 = vunpack.c.l.b16 %v635
        %v697 = vunpack.c.l.b16 %v619
        %v698 = vunpack.c.h.b16 %v619
        %v699 = vunpack.c.l.b16 %v636
        %v700 = vunpack.c.l.b16 %v620
        %v701 = vunpack.c.h.b16 %v620
        %v702 = vunpack.c.l.b16 %v637
        %v703 = vunpack.c.l.b16 %v621
        %v704 = vunpack.c.h.b16 %v621
        %v705 = vunpack.c.l.b16 %v638
        %v706 = vunpack.c.l.b16 %v622
        %v707 = vunpack.c.h.b16 %v622
        %v708 = vunpack.c.l.b16 %v639
        %v709 = vunpack.c.l.b16 %v623
        %v710 = vunpack.c.h.b16 %v623
        %v711 = vunpack.c.l.b16 %v640
        %v712 = vunpack.c.l.b16 %v624
        %v713 = vunpack.c.h.b16 %v624
        %v714 = vunpack.c.l.b16 %v641
        %v715 = vunpack.c.l.b16 %v625
        %v716 = vunpack.c.h.b16 %v625
        %v717 = vunpack.c.l.b16 %v642
        %v718 = vunpack.c.l.b16 %v626
        %v719 = vunpack.c.h.b16 %v626
        %v720 = vunpack.c.l.b16 %v643
        %v721 = vunpack.c.l.b16 %v627
        %v722 = vunpack.c.h.b16 %v627
        %v723 = vunpack.c.l.b16 %v644
        %v724 = vunpack.c.l.b16 %v628
        %v725 = vunpack.c.h.b16 %v628
        %v726 = vunpack.c.l.b16 %v645
        %v727 = vunpack.c.l.b16 %v629
        %v728 = vunpack.c.h.b16 %v629
        %v729 = vunpack.c.l.b16 %v646
        %v730 = vunpack.c.l.b16 %v630
        %v731 = vunpack.c.h.b16 %v630
        %v732 = vunpack.c.l.b16 %v647
        %v733 = vpack.c.b16 %v682, %v682
        %v734 = vpack.c.b16 %v683, %v683
        %v735 = vpack.c.b16 %v684, %v684
        %v736 = vpack.c.b16 %v685, %v685
        %v737 = vpack.c.b16 %v686, %v686
        %v738 = vpack.c.b16 %v687, %v687
        %v739 = vpack.c.b16 %v688, %v688
        %v740 = vpack.c.b16 %v689, %v689
        %v741 = vpack.c.b16 %v690, %v690
        %v742 = vpack.c.b16 %v691, %v691
        %v743 = vpack.c.b16 %v692, %v692
        %v744 = vpack.c.b16 %v693, %v693
        %v745 = vpack.c.b16 %v694, %v694
        %v746 = vpack.c.b16 %v695, %v695
        %v747 = vpack.c.b16 %v696, %v696
        %v748 = vpack.c.b16 %v697, %v697
        %v749 = vpack.c.b16 %v698, %v698
        %v750 = vpack.c.b16 %v699, %v699
        %v751 = vpack.c.b16 %v700, %v700
        %v752 = vpack.c.b16 %v701, %v701
        %v753 = vpack.c.b16 %v702, %v702
        %v754 = vpack.c.b16 %v703, %v703
        %v755 = vpack.c.b16 %v704, %v704
        %v756 = vpack.c.b16 %v705, %v705
        %v757 = vpack.c.b16 %v706, %v706
        %v758 = vpack.c.b16 %v707, %v707
        %v759 = vpack.c.b16 %v708, %v708
        %v760 = vpack.c.b16 %v709, %v709
        %v761 = vpack.c.b16 %v710, %v710
        %v762 = vpack.c.b16 %v711, %v711
        %v763 = vpack.c.b16 %v712, %v712
        %v764 = vpack.c.b16 %v713, %v713
        %v765 = vpack.c.b16 %v714, %v714
        %v766 = vpack.c.b16 %v715, %v715
        %v767 = vpack.c.b16 %v716, %v716
        %v768 = vpack.c.b16 %v717, %v717
        %v769 = vpack.c.b16 %v718, %v718
        %v770 = vpack.c.b16 %v719, %v719
        %v771 = vpack.c.b16 %v720, %v720
        %v772 = vpack.c.b16 %v721, %v721
        %v773 = vpack.c.b16 %v722, %v722
        %v774 = vpack.c.b16 %v723, %v723
        %v775 = vpack.c.b16 %v724, %v724
        %v776 = vpack.c.b16 %v725, %v725
        %v777 = vpack.c.b16 %v726, %v726
        %v778 = vpack.c.b16 %v727, %v727
        %v779 = vpack.c.b16 %v728, %v728
        %v780 = vpack.c.b16 %v729, %v729
        %v781 = vpack.c.b16 %v730, %v730
        %v782 = vpack.c.b16 %v731, %v731
        %v783 = vpack.c.b16 %v732, %v732
        %vm835 = vcmask 60416
        %836 = vst.msk [vmem:[#allocation2] sm:$0xf] %vm835, %v733
        %837 = vst.msk [vmem:[#allocation2 + $0x4] sm:$0xf] %vm835, %v734
        %vm838 = vcmask 57344
        %839 = vst.msk [vmem:[#allocation2 + $0x8] sm:$0x1] %vm838, %v735
        %840 = vst.msk [vmem:[#allocation2 + $0xc] sm:$0xf] %vm835, %v736
        %841 = vst.msk [vmem:[#allocation2 + $0x10] sm:$0xf] %vm835, %v737
        %842 = vst.msk [vmem:[#allocation2 + $0x14] sm:$0x1] %vm838, %v738
        %843 = vst.msk [vmem:[#allocation2 + $0x18] sm:$0xf] %vm835, %v739
        %844 = vst.msk [vmem:[#allocation2 + $0x1c] sm:$0xf] %vm835, %v740
        %845 = vst.msk [vmem:[#allocation2 + $0x20] sm:$0x1] %vm838, %v741
        %846 = vst.msk [vmem:[#allocation2 + $0x24] sm:$0xf] %vm835, %v742
        %847 = vst.msk [vmem:[#allocation2 + $0x28] sm:$0xf] %vm835, %v743
        %848 = vst.msk [vmem:[#allocation2 + $0x2c] sm:$0x1] %vm838, %v744
        %849 = vst.msk [vmem:[#allocation2 + $0x30] sm:$0xf] %vm835, %v745
        %850 = vst.msk [vmem:[#allocation2 + $0x34] sm:$0xf] %vm835, %v746
        %851 = vst.msk [vmem:[#allocation2 + $0x38] sm:$0x1] %vm838, %v747
        %852 = vst.msk [vmem:[#allocation2 + $0x3c] sm:$0xf] %vm835, %v748
        %853 = vst.msk [vmem:[#allocation2 + $0x40] sm:$0xf] %vm835, %v749
        %854 = vst.msk [vmem:[#allocation2 + $0x44] sm:$0x1] %vm838, %v750
        %855 = vst.msk [vmem:[#allocation2 + $0x48] sm:$0xf] %vm835, %v751
        %856 = vst.msk [vmem:[#allocation2 + $0x4c] sm:$0xf] %vm835, %v752
        %857 = vst.msk [vmem:[#allocation2 + $0x50] sm:$0x1] %vm838, %v753
        %858 = vst.msk [vmem:[#allocation2 + $0x54] sm:$0xf] %vm835, %v754
        %859 = vst.msk [vmem:[#allocation2 + $0x58] sm:$0xf] %vm835, %v755
        %860 = vst.msk [vmem:[#allocation2 + $0x5c] sm:$0x1] %vm838, %v756
        %861 = vst.msk [vmem:[#allocation2 + $0x60] sm:$0xf] %vm835, %v757
        %862 = vst.msk [vmem:[#allocation2 + $0x64] sm:$0xf] %vm835, %v758
        %863 = vst.msk [vmem:[#allocation2 + $0x68] sm:$0x1] %vm838, %v759
        %864 = vst.msk [vmem:[#allocation2 + $0x6c] sm:$0xf] %vm835, %v760
        %865 = vst.msk [vmem:[#allocation2 + $0x70] sm:$0xf] %vm835, %v761
        %866 = vst.msk [vmem:[#allocation2 + $0x74] sm:$0x1] %vm838, %v762
        %867 = vst.msk [vmem:[#allocation2 + $0x78] sm:$0xf] %vm835, %v763
        %868 = vst.msk [vmem:[#allocation2 + $0x7c] sm:$0xf] %vm835, %v764
        %869 = vst.msk [vmem:[#allocation2 + $0x80] sm:$0x1] %vm838, %v765
        %870 = vst.msk [vmem:[#allocation2 + $0x84] sm:$0xf] %vm835, %v766
        %871 = vst.msk [vmem:[#allocation2 + $0x88] sm:$0xf] %vm835, %v767
        %872 = vst.msk [vmem:[#allocation2 + $0x8c] sm:$0x1] %vm838, %v768
        %873 = vst.msk [vmem:[#allocation2 + $0x90] sm:$0xf] %vm835, %v769
        %874 = vst.msk [vmem:[#allocation2 + $0x94] sm:$0xf] %vm835, %v770
        %875 = vst.msk [vmem:[#allocation2 + $0x98] sm:$0x1] %vm838, %v771
        %876 = vst.msk [vmem:[#allocation2 + $0x9c] sm:$0xf] %vm835, %v772
        %877 = vst.msk [vmem:[#allocation2 + $0xa0] sm:$0xf] %vm835, %v773
        %878 = vst.msk [vmem:[#allocation2 + $0xa4] sm:$0x1] %vm838, %v774
        %879 = vst.msk [vmem:[#allocation2 + $0xa8] sm:$0xf] %vm835, %v775
        %880 = vst.msk [vmem:[#allocation2 + $0xac] sm:$0xf] %vm835, %v776
        %881 = vst.msk [vmem:[#allocation2 + $0xb0] sm:$0x1] %vm838, %v777
        %882 = vst.msk [vmem:[#allocation2 + $0xb4] sm:$0xf] %vm835, %v778
        %883 = vst.msk [vmem:[#allocation2 + $0xb8] sm:$0xf] %vm835, %v779
        %884 = vst.msk [vmem:[#allocation2 + $0xbc] sm:$0x1] %vm838, %v780
        %885 = vst.msk [vmem:[#allocation2 + $0xc0] sm:$0xf] %vm835, %v781
        %886 = vst.msk [vmem:[#allocation2 + $0xc4] sm:$0xf] %vm835, %v782
        %887 = vst.msk [vmem:[#allocation2 + $0xc8] sm:$0x1] %vm838, %v783
        %888 = vst.msk [vmem:[#allocation2 + $0xcc] sm:$0xf] %vm835, %v733
        %889 = vst.msk [vmem:[#allocation2 + $0xd0] sm:$0xf] %vm835, %v734
        %890 = vst.msk [vmem:[#allocation2 + $0xd4] sm:$0x1] %vm838, %v735
      $region40: #{basic_block_forward.4} parent=35 // pred_fallthru
        _
      %s891 = smul.u32 %s22, 8
      %s892 = smul.u32 %s891, 3
      %s893 = smul.addr %s892, 4
      %s894 = scalar_lea.vmem [#allocation2], %s893
      %v895 = vld [vmem:[%s894] sm:$0xf]
      %v896 = vld [vmem:[%s894 + $0x4] sm:$0xf]
      %v897 = vld [vmem:[%s894 + $0x8] sm:$0x1]
      %v898 = vld [vmem:[%s894 + $0xc] sm:$0xf]
      %v899 = vld [vmem:[%s894 + $0x10] sm:$0xf]
      %v900 = vld [vmem:[%s894 + $0x14] sm:$0x1]
      %v901 = vld [vmem:[%s894 + $0x18] sm:$0xf]
      %v902 = vld [vmem:[%s894 + $0x1c] sm:$0xf]
      %v903 = vld [vmem:[%s894 + $0x20] sm:$0x1]
      %v904 = vld [vmem:[%s894 + $0x24] sm:$0xf]
      %v905 = vld [vmem:[%s894 + $0x28] sm:$0xf]
      %v906 = vld [vmem:[%s894 + $0x2c] sm:$0x1]
      %v907 = vld [vmem:[%s894 + $0x30] sm:$0xf]
      %v908 = vld [vmem:[%s894 + $0x34] sm:$0xf]
      %v909 = vld [vmem:[%s894 + $0x38] sm:$0x1]
      %v910 = vld [vmem:[%s894 + $0x3c] sm:$0xf]
      %v911 = vld [vmem:[%s894 + $0x40] sm:$0xf]
      %v912 = vld [vmem:[%s894 + $0x44] sm:$0x1]
      %v913 = vld [vmem:[%s894 + $0x48] sm:$0xf]
      %v914 = vld [vmem:[%s894 + $0x4c] sm:$0xf]
      %v915 = vld [vmem:[%s894 + $0x50] sm:$0x1]
      %v916 = vld [vmem:[%s894 + $0x54] sm:$0xf]
      %v917 = vld [vmem:[%s894 + $0x58] sm:$0xf]
      %v918 = vld [vmem:[%s894 + $0x5c] sm:$0x1]
      %v919 = vld [vmem:[%s894 + $0x60] sm:$0xf]
      %v920 = vld [vmem:[%s894 + $0x64] sm:$0xf]
      %v921 = vld [vmem:[%s894 + $0x68] sm:$0x1]
      %v922 = vld [vmem:[%s894 + $0x6c] sm:$0xf]
      %v923 = vld [vmem:[%s894 + $0x70] sm:$0xf]
      %v924 = vld [vmem:[%s894 + $0x74] sm:$0x1]
      %vm925 = vsmask.f32 3328
      %vm926 = vsmask.f32 7440
      %vm927 = vmor %vm925, %vm926
      %v929 = vshrl.u32 %v895, 16
      %v931 = vrot.slane %v929, 4
      %v932 = vshll.u32 %v895, 16
      %v934 = vrot.slane %v932, 5
      %v935 = vor.u32 %v931, %v934
      %v936 = vrot.slane %v935, 4
      %v938 = vshll.u32 %v896, 16
      %v940 = vrot.slane %v938, 5
      %v941 = vsel %vm927, %v936, %v940
      %v942 = vshrl.u32 %v896, 16
      %v944 = vrot.slane %v942, 4
      %v945 = vor.u32 %v944, %v940
      %v946 = vrot.slane %v945, 4
      %v948 = vshll.u32 %v897, 16
      %v950 = vrot.slane %v948, 5
      %v951 = vsel %vm927, %v946, %v950
      %v953 = vshrl.u32 %v898, 16
      %v955 = vrot.slane %v953, 4
      %v956 = vshll.u32 %v898, 16
      %v958 = vrot.slane %v956, 5
      %v959 = vor.u32 %v955, %v958
      %v960 = vrot.slane %v959, 4
      %v962 = vshll.u32 %v899, 16
      %v964 = vrot.slane %v962, 5
      %v965 = vsel %vm927, %v960, %v964
      %v966 = vshrl.u32 %v899, 16
      %v968 = vrot.slane %v966, 4
      %v969 = vor.u32 %v968, %v964
      %v970 = vrot.slane %v969, 4
      %v972 = vshll.u32 %v900, 16
      %v974 = vrot.slane %v972, 5
      %v975 = vsel %vm927, %v970, %v974
      %v977 = vshrl.u32 %v901, 16
      %v979 = vrot.slane %v977, 4
      %v980 = vshll.u32 %v901, 16
      %v982 = vrot.slane %v980, 5
      %v983 = vor.u32 %v979, %v982
      %v984 = vrot.slane %v983, 4
      %v986 = vshll.u32 %v902, 16
      %v988 = vrot.slane %v986, 5
      %v989 = vsel %vm927, %v984, %v988
      %v990 = vshrl.u32 %v902, 16
      %v992 = vrot.slane %v990, 4
      %v993 = vor.u32 %v992, %v988
      %v994 = vrot.slane %v993, 4
      %v996 = vshll.u32 %v903, 16
      %v998 = vrot.slane %v996, 5
      %v999 = vsel %vm927, %v994, %v998
      %v1001 = vshrl.u32 %v904, 16
      %v1003 = vrot.slane %v1001, 4
      %v1004 = vshll.u32 %v904, 16
      %v1006 = vrot.slane %v1004, 5
      %v1007 = vor.u32 %v1003, %v1006
      %v1008 = vrot.slane %v1007, 4
      %v1010 = vshll.u32 %v905, 16
      %v1012 = vrot.slane %v1010, 5
      %v1013 = vsel %vm927, %v1008, %v1012
      %v1014 = vshrl.u32 %v905, 16
      %v1016 = vrot.slane %v1014, 4
      %v1017 = vor.u32 %v1016, %v1012
      %v1018 = vrot.slane %v1017, 4
      %v1020 = vshll.u32 %v906, 16
      %v1022 = vrot.slane %v1020, 5
      %v1023 = vsel %vm927, %v1018, %v1022
      %v1025 = vshrl.u32 %v907, 16
      %v1027 = vrot.slane %v1025, 4
      %v1028 = vshll.u32 %v907, 16
      %v1030 = vrot.slane %v1028, 5
      %v1031 = vor.u32 %v1027, %v1030
      %v1032 = vrot.slane %v1031, 4
      %v1034 = vshll.u32 %v908, 16
      %v1036 = vrot.slane %v1034, 5
      %v1037 = vsel %vm927, %v1032, %v1036
      %v1038 = vshrl.u32 %v908, 16
      %v1040 = vrot.slane %v1038, 4
      %v1041 = vor.u32 %v1040, %v1036
      %v1042 = vrot.slane %v1041, 4
      %v1044 = vshll.u32 %v909, 16
      %v1046 = vrot.slane %v1044, 5
      %v1047 = vsel %vm927, %v1042, %v1046
      %v1049 = vshrl.u32 %v910, 16
      %v1051 = vrot.slane %v1049, 4
      %v1052 = vshll.u32 %v910, 16
      %v1054 = vrot.slane %v1052, 5
      %v1055 = vor.u32 %v1051, %v1054
      %v1056 = vrot.slane %v1055, 4
      %v1058 = vshll.u32 %v911, 16
      %v1060 = vrot.slane %v1058, 5
      %v1061 = vsel %vm927, %v1056, %v1060
      %v1062 = vshrl.u32 %v911, 16
      %v1064 = vrot.slane %v1062, 4
      %v1065 = vor.u32 %v1064, %v1060
      %v1066 = vrot.slane %v1065, 4
      %v1068 = vshll.u32 %v912, 16
      %v1070 = vrot.slane %v1068, 5
      %v1071 = vsel %vm927, %v1066, %v1070
      %v1073 = vshrl.u32 %v913, 16
      %v1075 = vrot.slane %v1073, 4
      %v1076 = vshll.u32 %v913, 16
      %v1078 = vrot.slane %v1076, 5
      %v1079 = vor.u32 %v1075, %v1078
      %v1080 = vrot.slane %v1079, 4
      %v1082 = vshll.u32 %v914, 16
      %v1084 = vrot.slane %v1082, 5
      %v1085 = vsel %vm927, %v1080, %v1084
      %v1086 = vshrl.u32 %v914, 16
      %v1088 = vrot.slane %v1086, 4
      %v1089 = vor.u32 %v1088, %v1084
      %v1090 = vrot.slane %v1089, 4
      %v1092 = vshll.u32 %v915, 16
      %v1094 = vrot.slane %v1092, 5
      %v1095 = vsel %vm927, %v1090, %v1094
      %v1097 = vshrl.u32 %v916, 16
      %v1099 = vrot.slane %v1097, 4
      %v1100 = vshll.u32 %v916, 16
      %v1102 = vrot.slane %v1100, 5
      %v1103 = vor.u32 %v1099, %v1102
      %v1104 = vrot.slane %v1103, 4
      %v1106 = vshll.u32 %v917, 16
      %v1108 = vrot.slane %v1106, 5
      %v1109 = vsel %vm927, %v1104, %v1108
      %v1110 = vshrl.u32 %v917, 16
      %v1112 = vrot.slane %v1110, 4
      %v1113 = vor.u32 %v1112, %v1108
      %v1114 = vrot.slane %v1113, 4
      %v1116 = vshll.u32 %v918, 16
      %v1118 = vrot.slane %v1116, 5
      %v1119 = vsel %vm927, %v1114, %v1118
      %vm1144 = vcmask 1042432
      %vm1145 = vcmask 1046532
      %vm1146 = vmor %vm1144, %vm1145
      %v1147 = vrot.slane %v895, 5
      %v1148 = vrot.slane %v1147, 4
      %v1149 = vrot.slane %v896, 5
      %v1150 = vsel %vm1146, %v1148, %v1149
      %v1151 = vrot.slane %v1149, 4
      %v1152 = vrot.slane %v897, 5
      %v1153 = vsel %vm1146, %v1151, %v1152
      %v1154 = vrot.slane %v898, 5
      %v1155 = vrot.slane %v1154, 4
      %v1156 = vrot.slane %v899, 5
      %v1157 = vsel %vm1146, %v1155, %v1156
      %v1158 = vrot.slane %v1156, 4
      %v1159 = vrot.slane %v900, 5
      %v1160 = vsel %vm1146, %v1158, %v1159
      %v1161 = vrot.slane %v901, 5
      %v1162 = vrot.slane %v1161, 4
      %v1163 = vrot.slane %v902, 5
      %v1164 = vsel %vm1146, %v1162, %v1163
      %v1165 = vrot.slane %v1163, 4
      %v1166 = vrot.slane %v903, 5
      %v1167 = vsel %vm1146, %v1165, %v1166
      %v1168 = vrot.slane %v904, 5
      %v1169 = vrot.slane %v1168, 4
      %v1170 = vrot.slane %v905, 5
      %v1171 = vsel %vm1146, %v1169, %v1170
      %v1172 = vrot.slane %v1170, 4
      %v1173 = vrot.slane %v906, 5
      %v1174 = vsel %vm1146, %v1172, %v1173
      %v1175 = vrot.slane %v907, 5
      %v1176 = vrot.slane %v1175, 4
      %v1177 = vrot.slane %v908, 5
      %v1178 = vsel %vm1146, %v1176, %v1177
      %v1179 = vrot.slane %v1177, 4
      %v1180 = vrot.slane %v909, 5
      %v1181 = vsel %vm1146, %v1179, %v1180
      %v1182 = vrot.slane %v910, 5
      %v1183 = vrot.slane %v1182, 4
      %v1184 = vrot.slane %v911, 5
      %v1185 = vsel %vm1146, %v1183, %v1184
      %v1186 = vrot.slane %v1184, 4
      %v1187 = vrot.slane %v912, 5
      %v1188 = vsel %vm1146, %v1186, %v1187
      %v1189 = vrot.slane %v913, 5
      %v1190 = vrot.slane %v1189, 4
      %v1191 = vrot.slane %v914, 5
      %v1192 = vsel %vm1146, %v1190, %v1191
      %v1193 = vrot.slane %v1191, 4
      %v1194 = vrot.slane %v915, 5
      %v1195 = vsel %vm1146, %v1193, %v1194
      %v1196 = vrot.slane %v916, 5
      %v1197 = vrot.slane %v1196, 4
      %v1198 = vrot.slane %v917, 5
      %v1199 = vsel %vm1146, %v1197, %v1198
      %v1200 = vrot.slane %v1198, 4
      %v1201 = vrot.slane %v918, 5
      %v1202 = vsel %vm1146, %v1200, %v1201
      %v1204 = vshrl.u32 %v919, 16
      %v1206 = vrot.slane %v1204, 4
      %v1207 = vshll.u32 %v919, 16
      %v1209 = vrot.slane %v1207, 5
      %v1210 = vor.u32 %v1206, %v1209
      %v1211 = vrot.slane %v1210, 4
      %v1213 = vshll.u32 %v920, 16
      %v1215 = vrot.slane %v1213, 5
      %v1216 = vsel %vm927, %v1211, %v1215
      %v1217 = vshrl.u32 %v920, 16
      %v1219 = vrot.slane %v1217, 4
      %v1220 = vor.u32 %v1219, %v1215
      %v1221 = vrot.slane %v1220, 4
      %v1223 = vshll.u32 %v921, 16
      %v1225 = vrot.slane %v1223, 5
      %v1226 = vsel %vm927, %v1221, %v1225
      %v1230 = vrot.slane %v919, 5
      %v1231 = vrot.slane %v1230, 4
      %v1232 = vrot.slane %v920, 5
      %v1233 = vsel %vm1146, %v1231, %v1232
      %v1234 = vrot.slane %v1232, 4
      %v1235 = vrot.slane %v921, 5
      %v1236 = vsel %vm1146, %v1234, %v1235
      %v1238 = vshrl.u32 %v922, 16
      %v1240 = vrot.slane %v1238, 4
      %v1241 = vshll.u32 %v922, 16
      %v1243 = vrot.slane %v1241, 5
      %v1244 = vor.u32 %v1240, %v1243
      %v1245 = vrot.slane %v1244, 4
      %v1247 = vshll.u32 %v923, 16
      %v1249 = vrot.slane %v1247, 5
      %v1250 = vsel %vm927, %v1245, %v1249
      %v1251 = vshrl.u32 %v923, 16
      %v1253 = vrot.slane %v1251, 4
      %v1254 = vor.u32 %v1253, %v1249
      %v1255 = vrot.slane %v1254, 4
      %v1257 = vshll.u32 %v924, 16
      %v1259 = vrot.slane %v1257, 5
      %v1260 = vsel %vm927, %v1255, %v1259
      %v1264 = vrot.slane %v922, 5
      %v1265 = vrot.slane %v1264, 4
      %v1266 = vrot.slane %v923, 5
      %v1267 = vsel %vm1146, %v1265, %v1266
      %v1268 = vrot.slane %v1266, 4
      %v1269 = vrot.slane %v924, 5
      %v1270 = vsel %vm1146, %v1268, %v1269
      %v1271 = vunpack.c.l.b16 %v895
      %v1272 = vunpack.c.l.b16 %v896
      %v1273 = vunpack.c.l.b16 %v898
      %v1274 = vunpack.c.l.b16 %v899
      %v1275 = vunpack.c.l.b16 %v901
      %v1276 = vunpack.c.l.b16 %v902
      %v1277 = vunpack.c.l.b16 %v904
      %v1278 = vunpack.c.l.b16 %v905
      %v1279 = vunpack.c.l.b16 %v907
      %v1280 = vunpack.c.l.b16 %v908
      %v1281 = vunpack.c.l.b16 %v910
      %v1282 = vunpack.c.l.b16 %v911
      %v1283 = vunpack.c.l.b16 %v913
      %v1284 = vunpack.c.l.b16 %v914
      %v1285 = vunpack.c.l.b16 %v916
      %v1286 = vunpack.c.l.b16 %v917
      %v1287 = vpack.c.b16 %v1272, %v1271
      %v1288 = vpack.c.b16 %v1274, %v1273
      %v1289 = vpack.c.b16 %v1276, %v1275
      %v1290 = vpack.c.b16 %v1278, %v1277
      %v1291 = vpack.c.b16 %v1280, %v1279
      %v1292 = vpack.c.b16 %v1282, %v1281
      %v1293 = vpack.c.b16 %v1284, %v1283
      %v1294 = vpack.c.b16 %v1286, %v1285
      %v1295 = vunpack.c.l.b16 %v941
      %v1296 = vunpack.c.l.b16 %v951
      %v1297 = vunpack.c.l.b16 %v965
      %v1298 = vunpack.c.l.b16 %v975
      %v1299 = vunpack.c.l.b16 %v989
      %v1300 = vunpack.c.l.b16 %v999
      %v1301 = vunpack.c.l.b16 %v1013
      %v1302 = vunpack.c.l.b16 %v1023
      %v1303 = vunpack.c.l.b16 %v1037
      %v1304 = vunpack.c.l.b16 %v1047
      %v1305 = vunpack.c.l.b16 %v1061
      %v1306 = vunpack.c.l.b16 %v1071
      %v1307 = vunpack.c.l.b16 %v1085
      %v1308 = vunpack.c.l.b16 %v1095
      %v1309 = vunpack.c.l.b16 %v1109
      %v1310 = vunpack.c.l.b16 %v1119
      %v1311 = vpack.c.b16 %v1296, %v1295
      %v1312 = vpack.c.b16 %v1298, %v1297
      %v1313 = vpack.c.b16 %v1300, %v1299
      %v1314 = vpack.c.b16 %v1302, %v1301
      %v1315 = vpack.c.b16 %v1304, %v1303
      %v1316 = vpack.c.b16 %v1306, %v1305
      %v1317 = vpack.c.b16 %v1308, %v1307
      %v1318 = vpack.c.b16 %v1310, %v1309
      %1319 = vrot.lane.b32.xlu0 %v1311, 8
      %v1320 = vpop.permute.xlu0 %1319
      %1321 = vrot.lane.b32.xlu0 %v1312, 8
      %v1322 = vpop.permute.xlu0 %1321
      %1323 = vrot.lane.b32.xlu0 %v1313, 8
      %v1324 = vpop.permute.xlu0 %1323
      %1325 = vrot.lane.b32.xlu0 %v1314, 8
      %v1326 = vpop.permute.xlu0 %1325
      %1327 = vrot.lane.b32.xlu0 %v1315, 8
      %v1328 = vpop.permute.xlu0 %1327
      %1329 = vrot.lane.b32.xlu0 %v1316, 8
      %v1330 = vpop.permute.xlu0 %1329
      %1331 = vrot.lane.b32.xlu0 %v1317, 8
      %v1332 = vpop.permute.xlu0 %1331
      %1333 = vrot.lane.b32.xlu0 %v1318, 8
      %v1334 = vpop.permute.xlu0 %1333
      %v1335 = vunpack.c.l.b16 %v1150
      %v1336 = vunpack.c.l.b16 %v1153
      %v1337 = vunpack.c.l.b16 %v1157
      %v1338 = vunpack.c.l.b16 %v1160
      %v1339 = vunpack.c.l.b16 %v1164
      %v1340 = vunpack.c.l.b16 %v1167
      %v1341 = vunpack.c.l.b16 %v1171
      %v1342 = vunpack.c.l.b16 %v1174
      %v1343 = vunpack.c.l.b16 %v1178
      %v1344 = vunpack.c.l.b16 %v1181
      %v1345 = vunpack.c.l.b16 %v1185
      %v1346 = vunpack.c.l.b16 %v1188
      %v1347 = vunpack.c.l.b16 %v1192
      %v1348 = vunpack.c.l.b16 %v1195
      %v1349 = vunpack.c.l.b16 %v1199
      %v1350 = vunpack.c.l.b16 %v1202
      %v1351 = vpack.c.b16 %v1336, %v1335
      %v1352 = vpack.c.b16 %v1338, %v1337
      %v1353 = vpack.c.b16 %v1340, %v1339
      %v1354 = vpack.c.b16 %v1342, %v1341
      %v1355 = vpack.c.b16 %v1344, %v1343
      %v1356 = vpack.c.b16 %v1346, %v1345
      %v1357 = vpack.c.b16 %v1348, %v1347
      %v1358 = vpack.c.b16 %v1350, %v1349
      %1359 = vrot.lane.b32.xlu0 %v1351, 16
      %v1360 = vpop.permute.xlu0 %1359
      %1361 = vrot.lane.b32.xlu0 %v1352, 16
      %v1362 = vpop.permute.xlu0 %1361
      %1363 = vrot.lane.b32.xlu0 %v1353, 16
      %v1364 = vpop.permute.xlu0 %1363
      %1365 = vrot.lane.b32.xlu0 %v1354, 16
      %v1366 = vpop.permute.xlu0 %1365
      %1367 = vrot.lane.b32.xlu0 %v1355, 16
      %v1368 = vpop.permute.xlu0 %1367
      %1369 = vrot.lane.b32.xlu0 %v1356, 16
      %v1370 = vpop.permute.xlu0 %1369
      %1371 = vrot.lane.b32.xlu0 %v1357, 16
      %v1372 = vpop.permute.xlu0 %1371
      %1373 = vrot.lane.b32.xlu0 %v1358, 16
      %v1374 = vpop.permute.xlu0 %1373
      %v1375 = vunpack.c.l.b16 %v919
      %v1376 = vunpack.c.l.b16 %v920
      %v1377 = vpack.c.b16 %v1376, %v1375
      %1378 = vrot.lane.b32.xlu0 %v1288, 24
      %v1379 = vpop.permute.xlu0 %1378
      %1380 = vrot.lane.b32.xlu0 %v1289, 24
      %v1381 = vpop.permute.xlu0 %1380
      %1382 = vrot.lane.b32.xlu0 %v1290, 24
      %v1383 = vpop.permute.xlu0 %1382
      %1384 = vrot.lane.b32.xlu0 %v1291, 24
      %v1385 = vpop.permute.xlu0 %1384
      %1386 = vrot.lane.b32.xlu0 %v1292, 24
      %v1387 = vpop.permute.xlu0 %1386
      %1388 = vrot.lane.b32.xlu0 %v1293, 24
      %v1389 = vpop.permute.xlu0 %1388
      %1390 = vrot.lane.b32.xlu0 %v1294, 24
      %v1391 = vpop.permute.xlu0 %1390
      %1392 = vrot.lane.b32.xlu0 %v1377, 24
      %v1393 = vpop.permute.xlu0 %1392
      %v1394 = vunpack.c.l.b16 %v1216
      %v1395 = vunpack.c.l.b16 %v1226
      %v1396 = vpack.c.b16 %v1395, %v1394
      %1397 = vrot.lane.b32.xlu0 %v1312, 32
      %v1398 = vpop.permute.xlu0 %1397
      %1399 = vrot.lane.b32.xlu0 %v1313, 32
      %v1400 = vpop.permute.xlu0 %1399
      %1401 = vrot.lane.b32.xlu0 %v1314, 32
      %v1402 = vpop.permute.xlu0 %1401
      %1403 = vrot.lane.b32.xlu0 %v1315, 32
      %v1404 = vpop.permute.xlu0 %1403
      %1405 = vrot.lane.b32.xlu0 %v1316, 32
      %v1406 = vpop.permute.xlu0 %1405
      %1407 = vrot.lane.b32.xlu0 %v1317, 32
      %v1408 = vpop.permute.xlu0 %1407
      %1409 = vrot.lane.b32.xlu0 %v1318, 32
      %v1410 = vpop.permute.xlu0 %1409
      %1411 = vrot.lane.b32.xlu0 %v1396, 32
      %v1412 = vpop.permute.xlu0 %1411
      %v1413 = vunpack.c.l.b16 %v1233
      %v1414 = vunpack.c.l.b16 %v1236
      %v1415 = vpack.c.b16 %v1414, %v1413
      %1416 = vrot.lane.b32.xlu0 %v1352, 40
      %v1417 = vpop.permute.xlu0 %1416
      %1418 = vrot.lane.b32.xlu0 %v1353, 40
      %v1419 = vpop.permute.xlu0 %1418
      %1420 = vrot.lane.b32.xlu0 %v1354, 40
      %v1421 = vpop.permute.xlu0 %1420
      %1422 = vrot.lane.b32.xlu0 %v1355, 40
      %v1423 = vpop.permute.xlu0 %1422
      %1424 = vrot.lane.b32.xlu0 %v1356, 40
      %v1425 = vpop.permute.xlu0 %1424
      %1426 = vrot.lane.b32.xlu0 %v1357, 40
      %v1427 = vpop.permute.xlu0 %1426
      %1428 = vrot.lane.b32.xlu0 %v1358, 40
      %v1429 = vpop.permute.xlu0 %1428
      %1430 = vrot.lane.b32.xlu0 %v1415, 40
      %v1431 = vpop.permute.xlu0 %1430
      %v1432 = vunpack.c.l.b16 %v922
      %v1433 = vunpack.c.l.b16 %v923
      %v1434 = vpack.c.b16 %v1433, %v1432
      %1435 = vrot.lane.b32.xlu0 %v1289, 48
      %v1436 = vpop.permute.xlu0 %1435
      %1437 = vrot.lane.b32.xlu0 %v1290, 48
      %v1438 = vpop.permute.xlu0 %1437
      %1439 = vrot.lane.b32.xlu0 %v1291, 48
      %v1440 = vpop.permute.xlu0 %1439
      %1441 = vrot.lane.b32.xlu0 %v1292, 48
      %v1442 = vpop.permute.xlu0 %1441
      %1443 = vrot.lane.b32.xlu0 %v1293, 48
      %v1444 = vpop.permute.xlu0 %1443
      %1445 = vrot.lane.b32.xlu0 %v1294, 48
      %v1446 = vpop.permute.xlu0 %1445
      %1447 = vrot.lane.b32.xlu0 %v1377, 48
      %v1448 = vpop.permute.xlu0 %1447
      %1449 = vrot.lane.b32.xlu0 %v1434, 48
      %v1450 = vpop.permute.xlu0 %1449
      %v1451 = vunpack.c.l.b16 %v1250
      %v1452 = vunpack.c.l.b16 %v1260
      %v1453 = vpack.c.b16 %v1452, %v1451
      %1454 = vrot.lane.b32.xlu0 %v1313, 56
      %v1455 = vpop.permute.xlu0 %1454
      %1456 = vrot.lane.b32.xlu0 %v1314, 56
      %v1457 = vpop.permute.xlu0 %1456
      %1458 = vrot.lane.b32.xlu0 %v1315, 56
      %v1459 = vpop.permute.xlu0 %1458
      %1460 = vrot.lane.b32.xlu0 %v1316, 56
      %v1461 = vpop.permute.xlu0 %1460
      %1462 = vrot.lane.b32.xlu0 %v1317, 56
      %v1463 = vpop.permute.xlu0 %1462
      %1464 = vrot.lane.b32.xlu0 %v1318, 56
      %v1465 = vpop.permute.xlu0 %1464
      %1466 = vrot.lane.b32.xlu0 %v1396, 56
      %v1467 = vpop.permute.xlu0 %1466
      %1468 = vrot.lane.b32.xlu0 %v1453, 56
      %v1469 = vpop.permute.xlu0 %1468
      %v1470 = vunpack.c.l.b16 %v1267
      %v1471 = vunpack.c.l.b16 %v1270
      %v1472 = vpack.c.b16 %v1471, %v1470
      %1473 = vrot.lane.b32.xlu0 %v1353, 64
      %v1474 = vpop.permute.xlu0 %1473
      %1475 = vrot.lane.b32.xlu0 %v1354, 64
      %v1476 = vpop.permute.xlu0 %1475
      %1477 = vrot.lane.b32.xlu0 %v1355, 64
      %v1478 = vpop.permute.xlu0 %1477
      %1479 = vrot.lane.b32.xlu0 %v1356, 64
      %v1480 = vpop.permute.xlu0 %1479
      %1481 = vrot.lane.b32.xlu0 %v1357, 64
      %v1482 = vpop.permute.xlu0 %1481
      %1483 = vrot.lane.b32.xlu0 %v1358, 64
      %v1484 = vpop.permute.xlu0 %1483
      %1485 = vrot.lane.b32.xlu0 %v1415, 64
      %v1486 = vpop.permute.xlu0 %1485
      %1487 = vrot.lane.b32.xlu0 %v1472, 64
      %v1488 = vpop.permute.xlu0 %1487
      %vm1489 = vcmask 64512
      %v1492 = vsel %vm1489, %v1287, %v1320
      %v1495 = vsel %vm1489, %v1288, %v1322
      %v1498 = vsel %vm1489, %v1289, %v1324
      %v1501 = vsel %vm1489, %v1290, %v1326
      %v1504 = vsel %vm1489, %v1291, %v1328
      %v1507 = vsel %vm1489, %v1292, %v1330
      %v1510 = vsel %vm1489, %v1293, %v1332
      %v1513 = vsel %vm1489, %v1294, %v1334
      %vm1514 = vcmask 130048
      %v1516 = vsel %vm1514, %v1492, %v1360
      %v1518 = vsel %vm1514, %v1495, %v1362
      %v1520 = vsel %vm1514, %v1498, %v1364
      %v1522 = vsel %vm1514, %v1501, %v1366
      %v1524 = vsel %vm1514, %v1504, %v1368
      %v1526 = vsel %vm1514, %v1507, %v1370
      %v1528 = vsel %vm1514, %v1510, %v1372
      %v1530 = vsel %vm1514, %v1513, %v1374
      %vm1531 = vcmask 195584
      %v1533 = vsel %vm1531, %v1516, %v1379
      %v1535 = vsel %vm1531, %v1518, %v1381
      %v1537 = vsel %vm1531, %v1520, %v1383
      %v1539 = vsel %vm1531, %v1522, %v1385
      %v1541 = vsel %vm1531, %v1524, %v1387
      %v1543 = vsel %vm1531, %v1526, %v1389
      %v1545 = vsel %vm1531, %v1528, %v1391
      %v1547 = vsel %vm1531, %v1530, %v1393
      %vm1548 = vcmask 261120
      %v1550 = vsel %vm1548, %v1533, %v1398
      %v1552 = vsel %vm1548, %v1535, %v1400
      %v1554 = vsel %vm1548, %v1537, %v1402
      %v1556 = vsel %vm1548, %v1539, %v1404
      %v1558 = vsel %vm1548, %v1541, %v1406
      %v1560 = vsel %vm1548, %v1543, %v1408
      %v1562 = vsel %vm1548, %v1545, %v1410
      %v1564 = vsel %vm1548, %v1547, %v1412
      %vm1565 = vcmask 326656
      %v1567 = vsel %vm1565, %v1550, %v1417
      %v1569 = vsel %vm1565, %v1552, %v1419
      %v1571 = vsel %vm1565, %v1554, %v1421
      %v1573 = vsel %vm1565, %v1556, %v1423
      %v1575 = vsel %vm1565, %v1558, %v1425
      %v1577 = vsel %vm1565, %v1560, %v1427
      %v1579 = vsel %vm1565, %v1562, %v1429
      %v1581 = vsel %vm1565, %v1564, %v1431
      %vm1582 = vcmask 392192
      %v1584 = vsel %vm1582, %v1567, %v1436
      %v1586 = vsel %vm1582, %v1569, %v1438
      %v1588 = vsel %vm1582, %v1571, %v1440
      %v1590 = vsel %vm1582, %v1573, %v1442
      %v1592 = vsel %vm1582, %v1575, %v1444
      %v1594 = vsel %vm1582, %v1577, %v1446
      %v1596 = vsel %vm1582, %v1579, %v1448
      %v1598 = vsel %vm1582, %v1581, %v1450
      %vm1599 = vcmask 457728
      %v1601 = vsel %vm1599, %v1584, %v1455
      %v1603 = vsel %vm1599, %v1586, %v1457
      %v1605 = vsel %vm1599, %v1588, %v1459
      %v1607 = vsel %vm1599, %v1590, %v1461
      %v1609 = vsel %vm1599, %v1592, %v1463
      %v1611 = vsel %vm1599, %v1594, %v1465
      %v1613 = vsel %vm1599, %v1596, %v1467
      %v1615 = vsel %vm1599, %v1598, %v1469
      %vm1616 = vcmask 523264
      %v1618 = vsel %vm1616, %v1601, %v1474
      %v1620 = vsel %vm1616, %v1603, %v1476
      %v1622 = vsel %vm1616, %v1605, %v1478
      %v1624 = vsel %vm1616, %v1607, %v1480
      %v1626 = vsel %vm1616, %v1609, %v1482
      %v1628 = vsel %vm1616, %v1611, %v1484
      %v1630 = vsel %vm1616, %v1613, %v1486
      %v1632 = vsel %vm1616, %v1615, %v1488
      %v1633 = vld [vmem:[%s3] sm:$0xf]
      %v1634 = vld [vmem:[%s3 + $0x4] sm:$0xf]
      %v1635 = vld [vmem:[%s3 + $0x8] sm:$0xf]
      %v1636 = vld [vmem:[%s3 + $0xc] sm:$0xf]
      %v1637 = vld [vmem:[%s3 + $0x10] sm:$0xf]
      %v1638 = vld [vmem:[%s3 + $0x14] sm:$0xf]
      %v1639 = vld [vmem:[%s3 + $0x18] sm:$0xf]
      %v1640 = vld [vmem:[%s3 + $0x1c] sm:$0xf]
      %v1641 = vld [vmem:[%s3 + $0x20] sm:$0xf]
      %v1651 = vunpack.c.l.b16 %v1633
      %v1652 = vunpack.c.l.b16 %v1634
      %v1653 = vunpack.c.l.b16 %v1635
      %v1654 = vunpack.c.l.b16 %v1636
      %v1655 = vunpack.c.l.b16 %v1637
      %v1656 = vunpack.c.l.b16 %v1638
      %v1657 = vunpack.c.l.b16 %v1639
      %v1658 = vunpack.c.l.b16 %v1640
      %v1659 = vunpack.c.l.b16 %v1641
      %v1660 = vpack.c.b16 %v1652, %v1651
      %v1661 = vpack.c.b16 %v1654, %v1653
      %v1662 = vpack.c.b16 %v1656, %v1655
      %v1663 = vpack.c.b16 %v1658, %v1657
      %v1664 = vpack.c.b16 %v1659, %v1659
      %vm1669 = vcmask 588800
      %v1670 = vsel %vm1669, %v1618, 0
      %v1672 = vsel %vm1669, %v1620, 0
      %v1674 = vsel %vm1669, %v1622, 0
      %v1676 = vsel %vm1669, %v1624, 0
      %v1678 = vsel %vm1669, %v1626, 0
      %v1680 = vsel %vm1669, %v1628, 0
      %v1682 = vsel %vm1669, %v1630, 0
      %v1684 = vsel %vm1669, %v1632, 0
      %vm1686 = vcmask 1043456
      %v1688 = vsel %vm1686, %v1664, 0
      %1690 = vmatprep.subr.bf16.mxu0 0
      %1691 = vmatpush1.bf16.msra.mxu0 %v1660
      %1692 = vmatprep.subr.bf16.mxu0 0
      %1693 = vmatpush1.bf16.msra.mxu0 %v1661
      %1694 = vmatprep.subr.bf16.mxu0 0
      %1695 = vmatpush1.bf16.msra.mxu0 %v1662
      %1696 = vmatprep.subr.bf16.mxu0 0
      %1697 = vmatpush1.bf16.msra.mxu0 %v1663
      %1698 = vmatprep.subr.bf16.mxu0 0
      %1699 = vmatpush1.bf16.msra.mxu0 %v1688
      %1700 = vmatprep.subr.bf16.mxu0 0
      %1701 = vmatpush1.bf16.msra.mxu0 0
      %1702 = vmatprep.subr.bf16.mxu0 0
      %1703 = vmatpush1.bf16.msra.mxu0 0
      %1704 = vmatprep.subr.bf16.mxu0 0
      %1705 = vmatpush1.bf16.msra.mxu0 0
      %1706 = vmatprep.subr.bf16.mxu0 0
      %1707 = vmatpush1.bf16.msra.mxu0 0
      %1708 = vmatprep.subr.bf16.mxu0 0
      %1709 = vmatpush1.bf16.msra.mxu0 0
      %1710 = vmatprep.subr.bf16.mxu0 0
      %1711 = vmatpush1.bf16.msra.mxu0 0
      %1712 = vmatprep.subr.bf16.mxu0 0
      %1713 = vmatpush1.bf16.msra.mxu0 0
      %1714 = vmatprep.subr.bf16.mxu0 0
      %1715 = vmatpush1.bf16.msra.mxu0 0
      %1716 = vmatprep.subr.bf16.mxu0 0
      %1717 = vmatpush1.bf16.msra.mxu0 0
      %1718 = vmatprep.subr.bf16.mxu0 0
      %1719 = vmatpush1.bf16.msra.mxu0 0
      %1720 = vmatprep.subr.bf16.mxu0 0
      %1721 = vmatpush1.bf16.msra.mxu0 0
      %1722 = vmatprep.mubr.bf16.mxu0 0
      %1723 = vmatmul.mubr.bf16.gmra.mrb[0].mxu0 %v1670
      %v1724 = vpop.f32.mrb[0].mxu0
      %v1725 = vadd.f32 0.0, %v1724
      %v1726 = vpop.f32.mrb[0].mxu0
      %v1727 = vpop.f32.mrb[0].mxu0
      %v1728 = vadd.f32 0.0, %v1727
      %v1729 = vpop.f32.mrb[0].mxu0
      %1730 = vmatprep.mubr.bf16.mxu0 0
      %1731 = vmatmul.mubr.bf16.gmra.mrb[0].mxu0 %v1672
      %v1732 = vpop.f32.mrb[0].mxu0
      %v1733 = vadd.f32 0.0, %v1732
      %v1734 = vpop.f32.mrb[0].mxu0
      %v1735 = vpop.f32.mrb[0].mxu0
      %v1736 = vadd.f32 0.0, %v1735
      %v1737 = vpop.f32.mrb[0].mxu0
      %1738 = vmatprep.mubr.bf16.mxu0 0
      %1739 = vmatmul.mubr.bf16.gmra.mrb[0].mxu0 %v1674
      %v1740 = vpop.f32.mrb[0].mxu0
      %v1741 = vadd.f32 0.0, %v1740
      %v1742 = vpop.f32.mrb[0].mxu0
      %v1743 = vpop.f32.mrb[0].mxu0
      %v1744 = vadd.f32 0.0, %v1743
      %v1745 = vpop.f32.mrb[0].mxu0
      %1746 = vmatprep.mubr.bf16.mxu0 0
      %1747 = vmatmul.mubr.bf16.gmra.mrb[0].mxu0 %v1676
      %v1748 = vpop.f32.mrb[0].mxu0
      %v1749 = vadd.f32 0.0, %v1748
      %v1750 = vpop.f32.mrb[0].mxu0
      %v1751 = vpop.f32.mrb[0].mxu0
      %v1752 = vadd.f32 0.0, %v1751
      %v1753 = vpop.f32.mrb[0].mxu0
      %1754 = vmatprep.mubr.bf16.mxu0 0
      %1755 = vmatmul.mubr.bf16.gmra.mrb[0].mxu0 %v1678
      %v1756 = vpop.f32.mrb[0].mxu0
      %v1757 = vadd.f32 0.0, %v1756
      %v1758 = vpop.f32.mrb[0].mxu0
      %v1759 = vpop.f32.mrb[0].mxu0
      %v1760 = vadd.f32 0.0, %v1759
      %v1761 = vpop.f32.mrb[0].mxu0
      %1762 = vmatprep.mubr.bf16.mxu0 0
      %1763 = vmatmul.mubr.bf16.gmra.mrb[0].mxu0 %v1680
      %v1764 = vpop.f32.mrb[0].mxu0
      %v1765 = vadd.f32 0.0, %v1764
      %v1766 = vpop.f32.mrb[0].mxu0
      %v1767 = vpop.f32.mrb[0].mxu0
      %v1768 = vadd.f32 0.0, %v1767
      %v1769 = vpop.f32.mrb[0].mxu0
      %1770 = vmatprep.mubr.bf16.mxu0 0
      %1771 = vmatmul.mubr.bf16.gmra.mrb[0].mxu0 %v1682
      %v1772 = vpop.f32.mrb[0].mxu0
      %v1773 = vadd.f32 0.0, %v1772
      %v1774 = vpop.f32.mrb[0].mxu0
      %v1775 = vpop.f32.mrb[0].mxu0
      %v1776 = vadd.f32 0.0, %v1775
      %v1777 = vpop.f32.mrb[0].mxu0
      %1778 = vmatprep.mubr.bf16.mxu0 0
      %1779 = vmatmul.mubr.bf16.gmra.mrb[0].mxu0 %v1684
      %v1780 = vpop.f32.mrb[0].mxu0
      %v1781 = vadd.f32 0.0, %v1780
      %v1782 = vpop.f32.mrb[0].mxu0
      %v1783 = vpop.f32.mrb[0].mxu0
      %v1784 = vadd.f32 0.0, %v1783
      %v1785 = vpop.f32.mrb[0].mxu0
      %1786 = vdwg.mxu0
      %v1787 = vld [vmem:[%s260] sm:$0x3]
      %v1788 = vsel %vm1489, %v1725, 0.0
      %v1789 = vsel %vm1489, %v1728, 0.0
      %v1790 = vadd.f32 %v1788, %v1789
      %v1791 = vsel %vm1489, %v1733, 0.0
      %v1792 = vadd.f32 %v1790, %v1791
      %v1793 = vsel %vm1489, %v1736, 0.0
      %v1794 = vadd.f32 %v1792, %v1793
      %v1795 = vsel %vm1489, %v1741, 0.0
      %v1796 = vadd.f32 %v1794, %v1795
      %v1797 = vsel %vm1489, %v1744, 0.0
      %v1798 = vadd.f32 %v1796, %v1797
      %v1799 = vsel %vm1489, %v1749, 0.0
      %v1800 = vadd.f32 %v1798, %v1799
      %v1801 = vsel %vm1489, %v1752, 0.0
      %v1802 = vadd.f32 %v1800, %v1801
      %v1803 = vsel %vm1489, %v1757, 0.0
      %v1804 = vadd.f32 %v1802, %v1803
      %v1805 = vsel %vm1489, %v1760, 0.0
      %v1806 = vadd.f32 %v1804, %v1805
      %v1807 = vsel %vm1489, %v1765, 0.0
      %v1808 = vadd.f32 %v1806, %v1807
      %v1809 = vsel %vm1489, %v1768, 0.0
      %v1810 = vadd.f32 %v1808, %v1809
      %v1811 = vsel %vm1489, %v1773, 0.0
      %v1812 = vadd.f32 %v1810, %v1811
      %v1813 = vsel %vm1489, %v1776, 0.0
      %v1814 = vadd.f32 %v1812, %v1813
      %v1815 = vsel %vm1489, %v1781, 0.0
      %v1816 = vadd.f32 %v1814, %v1815
      %v1817 = vsel %vm1489, %v1784, 0.0
      %v1818 = vadd.f32 %v1816, %v1817
      %v1819 = vrot.slane %v1818, 4
      %v1820 = vadd.f32 %v1818, %v1819
      %v1821 = vrot.slane %v1820, 2
      %v1822 = vadd.f32 %v1820, %v1821
      %v1823 = vrot.slane %v1822, 1
      %v1824 = vadd.f32 %v1822, %v1823
      %v1825 = vmul.f32 %v1725, %v1725
      %v1826 = vmul.f32 %v1728, %v1728
      %v1827 = vmul.f32 %v1733, %v1733
      %v1828 = vmul.f32 %v1736, %v1736
      %v1829 = vmul.f32 %v1741, %v1741
      %v1830 = vmul.f32 %v1744, %v1744
      %v1831 = vmul.f32 %v1749, %v1749
      %v1832 = vmul.f32 %v1752, %v1752
      %v1833 = vmul.f32 %v1757, %v1757
      %v1834 = vmul.f32 %v1760, %v1760
      %v1835 = vmul.f32 %v1765, %v1765
      %v1836 = vmul.f32 %v1768, %v1768
      %v1837 = vmul.f32 %v1773, %v1773
      %v1838 = vmul.f32 %v1776, %v1776
      %v1839 = vmul.f32 %v1781, %v1781
      %v1840 = vmul.f32 %v1784, %v1784
      %v1841 = vsel %vm1489, %v1825, 0.0
      %v1842 = vsel %vm1489, %v1826, 0.0
      %v1843 = vadd.f32 %v1841, %v1842
      %v1844 = vsel %vm1489, %v1827, 0.0
      %v1845 = vadd.f32 %v1843, %v1844
      %v1846 = vsel %vm1489, %v1828, 0.0
      %v1847 = vadd.f32 %v1845, %v1846
      %v1848 = vsel %vm1489, %v1829, 0.0
      %v1849 = vadd.f32 %v1847, %v1848
      %v1850 = vsel %vm1489, %v1830, 0.0
      %v1851 = vadd.f32 %v1849, %v1850
      %v1852 = vsel %vm1489, %v1831, 0.0
      %v1853 = vadd.f32 %v1851, %v1852
      %v1854 = vsel %vm1489, %v1832, 0.0
      %v1855 = vadd.f32 %v1853, %v1854
      %v1856 = vsel %vm1489, %v1833, 0.0
      %v1857 = vadd.f32 %v1855, %v1856
      %v1858 = vsel %vm1489, %v1834, 0.0
      %v1859 = vadd.f32 %v1857, %v1858
      %v1860 = vsel %vm1489, %v1835, 0.0
      %v1861 = vadd.f32 %v1859, %v1860
      %v1862 = vsel %vm1489, %v1836, 0.0
      %v1863 = vadd.f32 %v1861, %v1862
      %v1864 = vsel %vm1489, %v1837, 0.0
      %v1865 = vadd.f32 %v1863, %v1864
      %v1866 = vsel %vm1489, %v1838, 0.0
      %v1867 = vadd.f32 %v1865, %v1866
      %v1868 = vsel %vm1489, %v1839, 0.0
      %v1869 = vadd.f32 %v1867, %v1868
      %v1870 = vsel %vm1489, %v1840, 0.0
      %v1871 = vadd.f32 %v1869, %v1870
      %v1872 = vrot.slane %v1871, 4
      %v1873 = vadd.f32 %v1871, %v1872
      %v1874 = vrot.slane %v1873, 2
      %v1875 = vadd.f32 %v1873, %v1874
      %v1876 = vrot.slane %v1875, 1
      %v1877 = vadd.f32 %v1875, %v1876
      %vm1878 = vcmask 1040384
      %v1879 = vsel %vm1878, %v1824, %v1877
      %v1880 = vadd.f32 %v1787, %v1879
      %vm1881 = vcmask 58368
      %1882 = vst.msk [vmem:[%s260] sm:$0x3] %vm1881, %v1880
      %v1883 = vpack.c.bf16 %v1728, %v1725
      %v1884 = vpack.c.bf16 %v1736, %v1733
      %v1885 = vpack.c.bf16 %v1744, %v1741
      %v1886 = vpack.c.bf16 %v1752, %v1749
      %v1887 = vpack.c.bf16 %v1760, %v1757
      %v1888 = vpack.c.bf16 %v1768, %v1765
      %v1889 = vpack.c.bf16 %v1776, %v1773
      %v1890 = vpack.c.bf16 %v1784, %v1781
      %v1899 = vunpack.c.l.b16 %v1883
      %v1900 = vunpack.c.h.b16 %v1883
      %v1901 = vunpack.c.l.b16 %v1884
      %v1902 = vunpack.c.h.b16 %v1884
      %v1903 = vunpack.c.l.b16 %v1885
      %v1904 = vunpack.c.h.b16 %v1885
      %v1905 = vunpack.c.l.b16 %v1886
      %v1906 = vunpack.c.h.b16 %v1886
      %v1907 = vunpack.c.l.b16 %v1887
      %v1908 = vunpack.c.h.b16 %v1887
      %v1909 = vunpack.c.l.b16 %v1888
      %v1910 = vunpack.c.h.b16 %v1888
      %v1911 = vunpack.c.l.b16 %v1889
      %v1912 = vunpack.c.h.b16 %v1889
      %v1913 = vunpack.c.l.b16 %v1890
      %v1914 = vunpack.c.h.b16 %v1890
      %v1915 = vpack.c.b16 %v1899, %v1899
      %v1916 = vpack.c.b16 %v1900, %v1900
      %v1917 = vpack.c.b16 %v1901, %v1901
      %v1918 = vpack.c.b16 %v1902, %v1902
      %v1919 = vpack.c.b16 %v1903, %v1903
      %v1920 = vpack.c.b16 %v1904, %v1904
      %v1921 = vpack.c.b16 %v1905, %v1905
      %v1922 = vpack.c.b16 %v1906, %v1906
      %v1923 = vpack.c.b16 %v1907, %v1907
      %v1924 = vpack.c.b16 %v1908, %v1908
      %v1925 = vpack.c.b16 %v1909, %v1909
      %v1926 = vpack.c.b16 %v1910, %v1910
      %v1927 = vpack.c.b16 %v1911, %v1911
      %v1928 = vpack.c.b16 %v1912, %v1912
      %v1929 = vpack.c.b16 %v1913, %v1913
      %v1930 = vpack.c.b16 %v1914, %v1914
      %vm1947 = vcmask 60416
      %1948 = vst.msk [vmem:[%s255] sm:$0xf] %vm1947, %v1915
      %1949 = vst.msk [vmem:[%s255 + $0x4] sm:$0xf] %vm1947, %v1916
      %1950 = vst.msk [vmem:[%s255 + $0x8] sm:$0xf] %vm1947, %v1917
      %1951 = vst.msk [vmem:[%s255 + $0xc] sm:$0xf] %vm1947, %v1918
      %1952 = vst.msk [vmem:[%s255 + $0x10] sm:$0xf] %vm1947, %v1919
      %1953 = vst.msk [vmem:[%s255 + $0x14] sm:$0xf] %vm1947, %v1920
      %1954 = vst.msk [vmem:[%s255 + $0x18] sm:$0xf] %vm1947, %v1921
      %1955 = vst.msk [vmem:[%s255 + $0x1c] sm:$0xf] %vm1947, %v1922
      %1956 = vst.msk [vmem:[%s255 + $0x20] sm:$0xf] %vm1947, %v1923
      %1957 = vst.msk [vmem:[%s255 + $0x24] sm:$0xf] %vm1947, %v1924
      %1958 = vst.msk [vmem:[%s255 + $0x28] sm:$0xf] %vm1947, %v1925
      %1959 = vst.msk [vmem:[%s255 + $0x2c] sm:$0xf] %vm1947, %v1926
      %1960 = vst.msk [vmem:[%s255 + $0x30] sm:$0xf] %vm1947, %v1927
      %1961 = vst.msk [vmem:[%s255 + $0x34] sm:$0xf] %vm1947, %v1928
      %1962 = vst.msk [vmem:[%s255 + $0x38] sm:$0xf] %vm1947, %v1929
      %1963 = vst.msk [vmem:[%s255 + $0x3c] sm:$0xf] %vm1947, %v1930
      %s1964 = smul.u32 8, %s22
      %p1965 = scmp.lt.s32.totalorder %s21, 1
      %s1966 = scalar_select %p1965, %s21, 1
      %p1967 = scmp.lt.s32.totalorder %s1964, 15
      %s1968 = scalar_select %p1967, %s1964, 15
      %s1969 = smul.addr %s1968, 2
      %s1970 = smul.addr %s1966, 32
      %s1971 = sadd.s32 %s1969, %s1970
      %s1972 = smul.addr %s1971, 4
      %s1973 = scalar_lea.vmem %s4, %s1972
      %p1974 = scmp.lt.s32.totalorder %s21, 1
      %s1975 = scalar_select %p1974, %s21, 1
      %s1976 = smul.addr %s1975, 2
      %s1977 = scalar_lea.vmem %s5, %s1976
      // Predicated region
      $region41: #{basic_block_forward.4} parent=35 // pred_check
        %p1978 = pneg %p138
      $region42: #{basic_block_forward.4} parent=35 // pred_check_branch
        %1980 = sbr.rel (%p1978) target = $region44
      $region43: #{basic_block_forward.4} parent=35 // pred_region
        %s1981 = smul.u32 8, %s22
      $region44: #{basic_block_forward.4} parent=35 // pred_fallthru
        _
      // Predicated region
      $region45: #{basic_block_forward.4} parent=35 // pred_check
        %p1982 = pneg %p164
      $region46: #{basic_block_forward.4} parent=35 // pred_check_branch
        %1984 = sbr.rel (%p1982) target = $region48
      $region47: #{basic_block_forward.4} parent=35 // pred_region
        _
      $region48: #{basic_block_forward.4} parent=35 // pred_fallthru
        _
    $region36: #{basic_block_forward.4} parent=5 // pred_fallthru
      _
    %p1985 = scmp.le.s32.totalorder 2, %s12
    // Predicated region
    $region49: #{basic_block_forward.4} parent=5 // pred_check
      %p1986 = pneg %p1985
    $region50: #{basic_block_forward.4} parent=5 // pred_check_branch
      %1988 = sbr.rel (%p1986) target = $region52
    $region51: #{basic_block_forward.4} parent=5 // pred_region
      %s1989 = ssub.s32 %s12, 2
      // Predicated region
      $region53: #{basic_block_forward.4} parent=51 // pred_check
        %p1990 = pneg %p144
      $region54: #{basic_block_forward.4} parent=51 // pred_check_branch
        %1992 = sbr.rel (%p1990) target = $region56
      $region55: #{basic_block_forward.4} parent=51 // pred_region
        %s1993 = smul.u32 8, %s24
        %p1994 = scmp.lt.s32.totalorder %s23, 1
        %s1995 = scalar_select %p1994, %s23, 1
        %p1996 = scmp.lt.s32.totalorder %s1993, 15
        %s1997 = scalar_select %p1996, %s1993, 15
        %s1998 = smul.addr %s1997, 2
        %s1999 = smul.addr %s1995, 32
        %s2000 = sadd.s32 %s1998, %s1999
        %s2001 = smul.addr %s2000, 4
        %s2002 = scalar_lea.vmem %s4, %s2001
      $region56: #{basic_block_forward.4} parent=51 // pred_fallthru
        _
      // Predicated region
      $region57: #{basic_block_forward.4} parent=51 // pred_check
        %p2003 = pneg %p170
      $region58: #{basic_block_forward.4} parent=51 // pred_check_branch
        %2005 = sbr.rel (%p2003) target = $region60
      $region59: #{basic_block_forward.4} parent=51 // pred_region
        %p2006 = scmp.lt.s32.totalorder %s23, 1
        %s2007 = scalar_select %p2006, %s23, 1
        %s2008 = smul.addr %s2007, 2
        %s2009 = scalar_lea.vmem %s5, %s2008
      $region60: #{basic_block_forward.4} parent=51 // pred_fallthru
        _
    $region52: #{basic_block_forward.4} parent=5 // pred_fallthru
      _
  $region6: #{basic_block_forward.4} parent=0 // loop_footer
    %s16 = sadd.s32 1, %s12
  $region7: #{basic_block_forward.4} parent=0 // loop_footer_branch
    %11 = sbr.rel target = $region3
  $region8: #{basic_block_forward.4} parent=0 // loop_exit
    _

// kernel: basic_block_forward.3
$region0: #{basic_block_forward.3}
  #allocation0 [shape = 'u32[]', space=smem, size = 0x4, offset = 0x4, fixed_abs, tag = 'smem constant byte address 0x4 - core index']
  #allocation1 [shape = 'u32[144,128]{1,0:T(1,128)}', space=vmem, size = 0x12000, scoped, tag = 'internal scratch']
  #allocation2 [shape = 'bf16[18,18,8]{2,1,0:T(8,128)(2,1)}', space=vmem, size = 0x1b000, scoped, tag = 'scratch operand']
  %s0 = inlined_call_operand.vmem [shape: f32[2,16,16,8], index: 0, kind: input, shape index: {}]
  %s1 = inlined_call_operand.vmem [shape: bf16[72,8], index: 1, kind: input, shape index: {}]
  %s2 = inlined_call_operand.vmem [shape: bf16[2,16,16,8], index: 2, kind: output, shape index: {0}]
  %s3 = inlined_call_operand.vmem [shape: f32[2,2,8], index: 3, kind: output, shape index: {1}]
  %4 = xla_tuple %s2, %s3
  %s5 = sld [smem:[#allocation0]]
  $region53: #{basic_block_forward.3} parent=0
    _
  %s7 = ssub.s32 1, %s5
  %s8 = scalar_select 0, %s7, %s5
  loop: start=0, step=1, limit=6
  $region2: #{basic_block_forward.3} parent=0 // loop_pre_header
    _
  $region3: #{basic_block_forward.3} parent=0 // loop_header
    %s10 = sphi 0, %s14
    %p11 = scmp.ge.s32.totalorder %s10, 6
    %s17 = sphi 0, %s29
    %s18 = sphi 0, %s25
    %s19 = sphi 0, %s17
    %s20 = sphi 0, %s18
    %s21 = sphi 0, %s19
    %s22 = sphi 0, %s20
    %s32 = sphi 0, %s34
    %s35 = sphi 0, %s32
    %s36 = sphi 0, %s35
    %s52 = sphi 0, %s36
    %s56 = sphi 0, %s56
    %s58 = sphi 0, %s56
    %s59 = sphi 0, %s58
    %s73 = sphi 0, %s59
    %s81 = sphi 0, %s83
    %s84 = sphi 0, %s81
    %s85 = sphi 0, %s84
    %s101 = sphi 0, %s85
    %s107 = sphi 0, %s109
    %s110 = sphi 0, %s107
    %s111 = sphi 0, %s110
    %s127 = sphi 0, %s111
  $region4: #{basic_block_forward.3} parent=0 // loop_header_branch
    %13 = sbr.rel (%p11) target = $region8
  $region5: #{basic_block_forward.3} parent=0 // loop_body
    %s15 = ssub.s32 %s10, 1
    %s16 = ssub.s32 %s10, 2
    %s23 = sadd.s32 1, %s18
    %p24 = scmp.ge.s32.totalorder %s23, 2
    %s25 = scalar_select %p24, 0, %s23
    %s26 = sadd.s32 1, %s17
    %s27 = scalar_select %p24, %s26, %s17
    %p28 = scmp.ge.s32.totalorder %s27, 2
    %s29 = scalar_select %p28, 0, %s27
    %s30 = ssub.s32 %s17, %s29
    %p31 = scmp.eq.s32.totalorder %s30, 0
    %s33 = sadd.s32 %s32, 1
    %s34 = scalar_select %p31, %s32, %s33
    %p37 = pneg %p31
    %p38 = scmp.eq.s32.totalorder %s10, 3
    %p39 = por %p37, %p38
    %p40 = scmp.ne.s32.totalorder %s32, %s35
    %p41 = scmp.eq.s32.totalorder %s10, 0
    %p42 = por %p40, %p41
    %p43 = scmp.ne.s32.totalorder %s32, %s35
    %p44 = scmp.eq.s32.totalorder %s15, 3
    %p45 = por %p43, %p44
    %p46 = scmp.ne.s32.totalorder %s35, %s36
    %p47 = scmp.eq.s32.totalorder %s15, 0
    %p48 = por %p46, %p47
    %p49 = scmp.ne.s32.totalorder %s35, %s36
    %p50 = scmp.eq.s32.totalorder %s16, 3
    %p51 = por %p49, %p50
    %p53 = scmp.ne.s32.totalorder %s36, %s52
    %p54 = scmp.eq.s32.totalorder %s16, 0
    %p55 = por %p53, %p54
    %s57 = sadd.s32 %s56, 1
    %p60 = scmp.eq.s32.totalorder %s10, 3
    %p61 = scmp.ne.s32.totalorder %s56, %s58
    %p62 = scmp.eq.s32.totalorder %s10, 0
    %p63 = por %p61, %p62
    %p64 = scmp.ne.s32.totalorder %s56, %s58
    %p65 = scmp.eq.s32.totalorder %s15, 3
    %p66 = por %p64, %p65
    %p67 = scmp.ne.s32.totalorder %s58, %s59
    %p68 = scmp.eq.s32.totalorder %s15, 0
    %p69 = por %p67, %p68
    %p70 = scmp.ne.s32.totalorder %s58, %s59
    %p71 = scmp.eq.s32.totalorder %s16, 3
    %p72 = por %p70, %p71
    %p74 = scmp.ne.s32.totalorder %s59, %s73
    %p75 = scmp.eq.s32.totalorder %s16, 0
    %p76 = por %p74, %p75
    %s77 = ssub.s32 %s17, %s29
    %s78 = ssub.s32 %s18, %s25
    %s79 = sor.u32 %s77, %s78
    %p80 = scmp.eq.s32.totalorder %s79, 0
    %s82 = sadd.s32 %s81, 1
    %s83 = scalar_select %p80, %s81, %s82
    %p86 = pneg %p80
    %p87 = scmp.eq.s32.totalorder %s10, 3
    %p88 = por %p86, %p87
    %p89 = scmp.ne.s32.totalorder %s81, %s84
    %p90 = scmp.eq.s32.totalorder %s10, 0
    %p91 = por %p89, %p90
    %p92 = scmp.ne.s32.totalorder %s81, %s84
    %p93 = scmp.eq.s32.totalorder %s15, 3
    %p94 = por %p92, %p93
    %p95 = scmp.ne.s32.totalorder %s84, %s85
    %p96 = scmp.eq.s32.totalorder %s15, 0
    %p97 = por %p95, %p96
    %p98 = scmp.ne.s32.totalorder %s84, %s85
    %p99 = scmp.eq.s32.totalorder %s16, 3
    %p100 = por %p98, %p99
    %p102 = scmp.ne.s32.totalorder %s85, %s101
    %p103 = scmp.eq.s32.totalorder %s16, 0
    %p104 = por %p102, %p103
    %s105 = ssub.s32 %s17, %s29
    %p106 = scmp.eq.s32.totalorder %s105, 0
    %s108 = sadd.s32 %s107, 1
    %s109 = scalar_select %p106, %s107, %s108
    %p112 = pneg %p106
    %p113 = scmp.eq.s32.totalorder %s10, 3
    %p114 = por %p112, %p113
    %p115 = scmp.ne.s32.totalorder %s107, %s110
    %p116 = scmp.eq.s32.totalorder %s10, 0
    %p117 = por %p115, %p116
    %p118 = scmp.ne.s32.totalorder %s107, %s110
    %p119 = scmp.eq.s32.totalorder %s15, 3
    %p120 = por %p118, %p119
    %p121 = scmp.ne.s32.totalorder %s110, %s111
    %p122 = scmp.eq.s32.totalorder %s15, 0
    %p123 = por %p121, %p122
    %p124 = scmp.ne.s32.totalorder %s110, %s111
    %p125 = scmp.eq.s32.totalorder %s16, 3
    %p126 = por %p124, %p125
    %p128 = scmp.ne.s32.totalorder %s111, %s127
    %p129 = scmp.eq.s32.totalorder %s16, 0
    %p130 = por %p128, %p129
    %p131 = scmp.le.s32.totalorder 1, %s10
    %p132 = scmp.lt.s32.totalorder %s10, 5
    %p133 = pnand %p131, %p132
    %p134 = pneg %p133
    // Predicated region
    $region9: #{basic_block_forward.3} parent=5 // pred_check
      _
    $region10: #{basic_block_forward.3} parent=5 // pred_check_branch
      %136 = sbr.rel (%p133) target = $region12
    $region11: #{basic_block_forward.3} parent=5 // pred_region
      %s137 = ssub.s32 %s10, 1
      // Predicated region
      $region13: #{basic_block_forward.3} parent=11 // pred_check
        %p138 = pneg %p69
      $region14: #{basic_block_forward.3} parent=11 // pred_check_branch
        %140 = sbr.rel (%p138) target = $region16
      $region15: #{basic_block_forward.3} parent=11 // pred_region
        _
      $region16: #{basic_block_forward.3} parent=11 // pred_fallthru
        _
    $region12: #{basic_block_forward.3} parent=5 // pred_fallthru
      _
    %p141 = scmp.lt.s32.totalorder %s10, 4
    // Predicated region
    $region17: #{basic_block_forward.3} parent=5 // pred_check
      %p142 = pneg %p141
    $region18: #{basic_block_forward.3} parent=5 // pred_check_branch
      %144 = sbr.rel (%p142) target = $region20
    $region19: #{basic_block_forward.3} parent=5 // pred_region
      // Predicated region
      $region21: #{basic_block_forward.3} parent=19 // pred_check
        %p145 = pneg %p42
      $region22: #{basic_block_forward.3} parent=19 // pred_check_branch
        %147 = sbr.rel (%p145) target = $region24
      $region23: #{basic_block_forward.3} parent=19 // pred_region
        %p148 = scmp.lt.s32.totalorder %s17, 1
        %s149 = scalar_select %p148, %s17, 1
        %s150 = smul.addr %s149, 32
        %s151 = smul.addr %s150, 8
        %s152 = scalar_lea.vmem %s0, %s151
      $region24: #{basic_block_forward.3} parent=19 // pred_fallthru
        _
    $region20: #{basic_block_forward.3} parent=5 // pred_fallthru
      _
    %p153 = scmp.le.s32.totalorder 1, %s10
    %p154 = scmp.lt.s32.totalorder %s10, 5
    %p155 = pnand %p153, %p154
    %p156 = pneg %p155
    // Predicated region
    $region25: #{basic_block_forward.3} parent=5 // pred_check
      _
    $region26: #{basic_block_forward.3} parent=5 // pred_check_branch
      %158 = sbr.rel (%p155) target = $region28
    $region27: #{basic_block_forward.3} parent=5 // pred_region
      %s159 = ssub.s32 %s10, 1
      %p160 = scmp.lt.s32.totalorder %s19, 1
      %s161 = scalar_select %p160, %s19, 1
      %s162 = smul.addr %s161, 32
      %s163 = smul.addr %s162, 8
      %s164 = scalar_lea.vmem %s0, %s163
      %p165 = pneg %p48
      %p166 = pneg %p45
      %p167 = pneg %p69
      %p168 = pneg %p66
      %p169 = pneg %p97
      %p170 = pneg %p94
      %s171 = smul.u32 8, %s20
      %p172 = scmp.lt.s32.totalorder %s19, 1
      %s173 = scalar_select %p172, %s19, 1
      %p174 = scmp.lt.s32.totalorder %s171, 15
      %s175 = scalar_select %p174, %s171, 15
      %s176 = smul.addr %s175, 2
      %s177 = smul.addr %s173, 32
      %s178 = sadd.s32 %s176, %s177
      %s179 = smul.addr %s178, 4
      %s180 = scalar_lea.vmem %s2, %s179
      %p181 = pneg %p123
      %p182 = pneg %p120
      %p183 = scmp.lt.s32.totalorder %s19, 1
      %s184 = scalar_select %p183, %s19, 1
      %s185 = smul.addr %s184, 2
      %s186 = scalar_lea.vmem %s3, %s185
      %p187 = scmp.lt.s32.totalorder %s19, 1
      %s188 = scalar_select %p187, %s19, 1
      %s189 = smul.addr %s188, 32
      %s190 = smul.addr %s189, 8
      %s191 = scalar_lea.vmem %s0, %s190
      %s192 = smul.u32 8, %s20
      %p193 = scmp.lt.s32.totalorder %s19, 1
      %s194 = scalar_select %p193, %s19, 1
      %p195 = scmp.lt.s32.totalorder %s192, 15
      %s196 = scalar_select %p195, %s192, 15
      %s197 = smul.addr %s196, 2
      %s198 = smul.addr %s194, 32
      %s199 = sadd.s32 %s197, %s198
      %s200 = smul.addr %s199, 4
      %s201 = scalar_lea.vmem %s2, %s200
      %s202 = smul.u32 8, %s20
      %p203 = scmp.lt.s32.totalorder %s19, 1
      %s204 = scalar_select %p203, %s19, 1
      %s205 = smul.addr %s204, 2
      %s206 = scalar_lea.vmem %s3, %s205
      %p208 = scmp.eq.s32.totalorder %s20, 0
      // Predicated region
      $region29: #{basic_block_forward.3} parent=27 // pred_check
        %p209 = pneg %p208
      $region30: #{basic_block_forward.3} parent=27 // pred_check_branch
        %211 = sbr.rel (%p209) target = $region32
      $region31: #{basic_block_forward.3} parent=27 // pred_region
        %vm212 = vcmask 58368
        %213 = vst.msk [vmem:[%s206] sm:$0x3] %vm212, 0.0
        %v214 = vld [vmem:[%s191] sm:$0xff]
        %v215 = vld [vmem:[%s191 + $0x8] sm:$0xff]
        %v216 = vld [vmem:[%s191 + $0x10] sm:$0xff]
        %v217 = vld [vmem:[%s191 + $0x18] sm:$0xff]
        %v218 = vld [vmem:[%s191 + $0x20] sm:$0xff]
        %v219 = vld [vmem:[%s191 + $0x28] sm:$0xff]
        %v220 = vld [vmem:[%s191 + $0x30] sm:$0xff]
        %v221 = vld [vmem:[%s191 + $0x38] sm:$0xff]
        %v222 = vld [vmem:[%s191 + $0x40] sm:$0xff]
        %v223 = vld [vmem:[%s191 + $0x48] sm:$0xff]
        %v224 = vld [vmem:[%s191 + $0x50] sm:$0xff]
        %v225 = vld [vmem:[%s191 + $0x58] sm:$0xff]
        %v226 = vld [vmem:[%s191 + $0x60] sm:$0xff]
        %v227 = vld [vmem:[%s191 + $0x68] sm:$0xff]
        %v228 = vld [vmem:[%s191 + $0x70] sm:$0xff]
        %v229 = vld [vmem:[%s191 + $0x78] sm:$0xff]
        %v230 = vld [vmem:[%s191 + $0x80] sm:$0xff]
        %v231 = vld [vmem:[%s191 + $0x88] sm:$0xff]
        %v232 = vld [vmem:[%s191 + $0x90] sm:$0xff]
        %v233 = vld [vmem:[%s191 + $0x98] sm:$0xff]
        %v234 = vld [vmem:[%s191 + $0xa0] sm:$0xff]
        %v235 = vld [vmem:[%s191 + $0xa8] sm:$0xff]
        %v236 = vld [vmem:[%s191 + $0xb0] sm:$0xff]
        %v237 = vld [vmem:[%s191 + $0xb8] sm:$0xff]
        %v238 = vld [vmem:[%s191 + $0xc0] sm:$0xff]
        %v239 = vld [vmem:[%s191 + $0xc8] sm:$0xff]
        %v240 = vld [vmem:[%s191 + $0xd0] sm:$0xff]
        %v241 = vld [vmem:[%s191 + $0xd8] sm:$0xff]
        %v242 = vld [vmem:[%s191 + $0xe0] sm:$0xff]
        %v243 = vld [vmem:[%s191 + $0xe8] sm:$0xff]
        %v244 = vld [vmem:[%s191 + $0xf0] sm:$0xff]
        %v245 = vld [vmem:[%s191 + $0xf8] sm:$0xff]
        %v246 = vpack.c.bf16 %v215, %v214
        %v247 = vpack.c.bf16 %v217, %v216
        %v248 = vpack.c.bf16 %v219, %v218
        %v249 = vpack.c.bf16 %v221, %v220
        %v250 = vpack.c.bf16 %v223, %v222
        %v251 = vpack.c.bf16 %v225, %v224
        %v252 = vpack.c.bf16 %v227, %v226
        %v253 = vpack.c.bf16 %v229, %v228
        %v254 = vpack.c.bf16 %v231, %v230
        %v255 = vpack.c.bf16 %v233, %v232
        %v256 = vpack.c.bf16 %v235, %v234
        %v257 = vpack.c.bf16 %v237, %v236
        %v258 = vpack.c.bf16 %v239, %v238
        %v259 = vpack.c.bf16 %v241, %v240
        %v260 = vpack.c.bf16 %v243, %v242
        %v261 = vpack.c.bf16 %v245, %v244
        %v263 = vshrl.u32 0, 16
        %v265 = vrot.slane %v263, 7
        %v266 = vshll.u32 0, 16
        %v268 = vor.u32 %v265, %v266
        %v270 = vshrl.u32 %v246, 16
        %v272 = vrot.slane %v270, 7
        %v273 = vshll.u32 %v246, 16
        %v275 = vor.u32 %v272, %v273
        %v277 = vshrl.u32 %v247, 16
        %v279 = vrot.slane %v277, 7
        %v280 = vshll.u32 %v247, 16
        %v282 = vor.u32 %v279, %v280
        %v284 = vshrl.u32 %v248, 16
        %v286 = vrot.slane %v284, 7
        %v287 = vshll.u32 %v248, 16
        %v289 = vor.u32 %v286, %v287
        %v291 = vshrl.u32 %v249, 16
        %v293 = vrot.slane %v291, 7
        %v294 = vshll.u32 %v249, 16
        %v296 = vor.u32 %v293, %v294
        %v298 = vshrl.u32 %v250, 16
        %v300 = vrot.slane %v298, 7
        %v301 = vshll.u32 %v250, 16
        %v303 = vor.u32 %v300, %v301
        %v305 = vshrl.u32 %v251, 16
        %v307 = vrot.slane %v305, 7
        %v308 = vshll.u32 %v251, 16
        %v310 = vor.u32 %v307, %v308
        %v312 = vshrl.u32 %v252, 16
        %v314 = vrot.slane %v312, 7
        %v315 = vshll.u32 %v252, 16
        %v317 = vor.u32 %v314, %v315
        %v319 = vshrl.u32 %v253, 16
        %v321 = vrot.slane %v319, 7
        %v322 = vshll.u32 %v253, 16
        %v324 = vor.u32 %v321, %v322
        %v326 = vshrl.u32 %v254, 16
        %v328 = vrot.slane %v326, 7
        %v329 = vshll.u32 %v254, 16
        %v331 = vor.u32 %v328, %v329
        %v333 = vshrl.u32 %v255, 16
        %v335 = vrot.slane %v333, 7
        %v336 = vshll.u32 %v255, 16
        %v338 = vor.u32 %v335, %v336
        %v340 = vshrl.u32 %v256, 16
        %v342 = vrot.slane %v340, 7
        %v343 = vshll.u32 %v256, 16
        %v345 = vor.u32 %v342, %v343
        %v347 = vshrl.u32 %v257, 16
        %v349 = vrot.slane %v347, 7
        %v350 = vshll.u32 %v257, 16
        %v352 = vor.u32 %v349, %v350
        %v354 = vshrl.u32 %v258, 16
        %v356 = vrot.slane %v354, 7
        %v357 = vshll.u32 %v258, 16
        %v359 = vor.u32 %v356, %v357
        %v361 = vshrl.u32 %v259, 16
        %v363 = vrot.slane %v361, 7
        %v364 = vshll.u32 %v259, 16
        %v366 = vor.u32 %v363, %v364
        %v368 = vshrl.u32 %v260, 16
        %v370 = vrot.slane %v368, 7
        %v371 = vshll.u32 %v260, 16
        %v373 = vor.u32 %v370, %v371
        %v375 = vshrl.u32 %v261, 16
        %v377 = vrot.slane %v375, 7
        %v378 = vshll.u32 %v261, 16
        %v380 = vor.u32 %v377, %v378
        %vm415 = vcmask 1040384
        %vm416 = vsmask.f32 256
        %vm417 = vmand %vm415, %vm416
        %v418 = vsel %vm417, 0, %v268
        %v419 = vsel %vm417, 0, %v275
        %v420 = vsel %vm417, 0, %v282
        %v421 = vsel %vm417, 0, %v289
        %v422 = vsel %vm417, 0, %v296
        %v423 = vsel %vm417, 0, %v303
        %v424 = vsel %vm417, 0, %v310
        %v425 = vsel %vm417, 0, %v317
        %v426 = vsel %vm417, 0, %v324
        %v427 = vsel %vm417, 0, %v331
        %v428 = vsel %vm417, 0, %v338
        %v429 = vsel %vm417, 0, %v345
        %v430 = vsel %vm417, 0, %v352
        %v431 = vsel %vm417, 0, %v359
        %v432 = vsel %vm417, 0, %v366
        %v433 = vsel %vm417, 0, %v373
        %v434 = vsel %vm417, 0, %v380
        %v435 = vsel %vm417, %v265, 0
        %v436 = vsel %vm417, %v272, 0
        %v437 = vsel %vm417, %v279, 0
        %v438 = vsel %vm417, %v286, 0
        %v439 = vsel %vm417, %v293, 0
        %v440 = vsel %vm417, %v300, 0
        %v441 = vsel %vm417, %v307, 0
        %v442 = vsel %vm417, %v314, 0
        %v443 = vsel %vm417, %v321, 0
        %v444 = vsel %vm417, %v328, 0
        %v445 = vsel %vm417, %v335, 0
        %v446 = vsel %vm417, %v342, 0
        %v447 = vsel %vm417, %v349, 0
        %v448 = vsel %vm417, %v356, 0
        %v449 = vsel %vm417, %v363, 0
        %v450 = vsel %vm417, %v370, 0
        %v451 = vsel %vm417, %v377, 0
        %v486 = vunpack.c.l.b16 %v418
        %v487 = vunpack.c.h.b16 %v418
        %v488 = vunpack.c.l.b16 %v435
        %v489 = vunpack.c.l.b16 %v419
        %v490 = vunpack.c.h.b16 %v419
        %v491 = vunpack.c.l.b16 %v436
        %v492 = vunpack.c.l.b16 %v420
        %v493 = vunpack.c.h.b16 %v420
        %v494 = vunpack.c.l.b16 %v437
        %v495 = vunpack.c.l.b16 %v421
        %v496 = vunpack.c.h.b16 %v421
        %v497 = vunpack.c.l.b16 %v438
        %v498 = vunpack.c.l.b16 %v422
        %v499 = vunpack.c.h.b16 %v422
        %v500 = vunpack.c.l.b16 %v439
        %v501 = vunpack.c.l.b16 %v423
        %v502 = vunpack.c.h.b16 %v423
        %v503 = vunpack.c.l.b16 %v440
        %v504 = vunpack.c.l.b16 %v424
        %v505 = vunpack.c.h.b16 %v424
        %v506 = vunpack.c.l.b16 %v441
        %v507 = vunpack.c.l.b16 %v425
        %v508 = vunpack.c.h.b16 %v425
        %v509 = vunpack.c.l.b16 %v442
        %v510 = vunpack.c.l.b16 %v426
        %v511 = vunpack.c.h.b16 %v426
        %v512 = vunpack.c.l.b16 %v443
        %v513 = vunpack.c.l.b16 %v427
        %v514 = vunpack.c.h.b16 %v427
        %v515 = vunpack.c.l.b16 %v444
        %v516 = vunpack.c.l.b16 %v428
        %v517 = vunpack.c.h.b16 %v428
        %v518 = vunpack.c.l.b16 %v445
        %v519 = vunpack.c.l.b16 %v429
        %v520 = vunpack.c.h.b16 %v429
        %v521 = vunpack.c.l.b16 %v446
        %v522 = vunpack.c.l.b16 %v430
        %v523 = vunpack.c.h.b16 %v430
        %v524 = vunpack.c.l.b16 %v447
        %v525 = vunpack.c.l.b16 %v431
        %v526 = vunpack.c.h.b16 %v431
        %v527 = vunpack.c.l.b16 %v448
        %v528 = vunpack.c.l.b16 %v432
        %v529 = vunpack.c.h.b16 %v432
        %v530 = vunpack.c.l.b16 %v449
        %v531 = vunpack.c.l.b16 %v433
        %v532 = vunpack.c.h.b16 %v433
        %v533 = vunpack.c.l.b16 %v450
        %v534 = vunpack.c.l.b16 %v434
        %v535 = vunpack.c.h.b16 %v434
        %v536 = vunpack.c.l.b16 %v451
        %v537 = vpack.c.b16 %v486, %v486
        %v538 = vpack.c.b16 %v487, %v487
        %v539 = vpack.c.b16 %v488, %v488
        %v540 = vpack.c.b16 %v489, %v489
        %v541 = vpack.c.b16 %v490, %v490
        %v542 = vpack.c.b16 %v491, %v491
        %v543 = vpack.c.b16 %v492, %v492
        %v544 = vpack.c.b16 %v493, %v493
        %v545 = vpack.c.b16 %v494, %v494
        %v546 = vpack.c.b16 %v495, %v495
        %v547 = vpack.c.b16 %v496, %v496
        %v548 = vpack.c.b16 %v497, %v497
        %v549 = vpack.c.b16 %v498, %v498
        %v550 = vpack.c.b16 %v499, %v499
        %v551 = vpack.c.b16 %v500, %v500
        %v552 = vpack.c.b16 %v501, %v501
        %v553 = vpack.c.b16 %v502, %v502
        %v554 = vpack.c.b16 %v503, %v503
        %v555 = vpack.c.b16 %v504, %v504
        %v556 = vpack.c.b16 %v505, %v505
        %v557 = vpack.c.b16 %v506, %v506
        %v558 = vpack.c.b16 %v507, %v507
        %v559 = vpack.c.b16 %v508, %v508
        %v560 = vpack.c.b16 %v509, %v509
        %v561 = vpack.c.b16 %v510, %v510
        %v562 = vpack.c.b16 %v511, %v511
        %v563 = vpack.c.b16 %v512, %v512
        %v564 = vpack.c.b16 %v513, %v513
        %v565 = vpack.c.b16 %v514, %v514
        %v566 = vpack.c.b16 %v515, %v515
        %v567 = vpack.c.b16 %v516, %v516
        %v568 = vpack.c.b16 %v517, %v517
        %v569 = vpack.c.b16 %v518, %v518
        %v570 = vpack.c.b16 %v519, %v519
        %v571 = vpack.c.b16 %v520, %v520
        %v572 = vpack.c.b16 %v521, %v521
        %v573 = vpack.c.b16 %v522, %v522
        %v574 = vpack.c.b16 %v523, %v523
        %v575 = vpack.c.b16 %v524, %v524
        %v576 = vpack.c.b16 %v525, %v525
        %v577 = vpack.c.b16 %v526, %v526
        %v578 = vpack.c.b16 %v527, %v527
        %v579 = vpack.c.b16 %v528, %v528
        %v580 = vpack.c.b16 %v529, %v529
        %v581 = vpack.c.b16 %v530, %v530
        %v582 = vpack.c.b16 %v531, %v531
        %v583 = vpack.c.b16 %v532, %v532
        %v584 = vpack.c.b16 %v533, %v533
        %v585 = vpack.c.b16 %v534, %v534
        %v586 = vpack.c.b16 %v535, %v535
        %v587 = vpack.c.b16 %v536, %v536
        %vm639 = vcmask 60416
        %640 = vst.msk [vmem:[#allocation2] sm:$0xf] %vm639, %v537
        %641 = vst.msk [vmem:[#allocation2 + $0x4] sm:$0xf] %vm639, %v538
        %vm642 = vcmask 57344
        %643 = vst.msk [vmem:[#allocation2 + $0x8] sm:$0x1] %vm642, %v539
        %644 = vst.msk [vmem:[#allocation2 + $0xc] sm:$0xf] %vm639, %v540
        %645 = vst.msk [vmem:[#allocation2 + $0x10] sm:$0xf] %vm639, %v541
        %646 = vst.msk [vmem:[#allocation2 + $0x14] sm:$0x1] %vm642, %v542
        %647 = vst.msk [vmem:[#allocation2 + $0x18] sm:$0xf] %vm639, %v543
        %648 = vst.msk [vmem:[#allocation2 + $0x1c] sm:$0xf] %vm639, %v544
        %649 = vst.msk [vmem:[#allocation2 + $0x20] sm:$0x1] %vm642, %v545
        %650 = vst.msk [vmem:[#allocation2 + $0x24] sm:$0xf] %vm639, %v546
        %651 = vst.msk [vmem:[#allocation2 + $0x28] sm:$0xf] %vm639, %v547
        %652 = vst.msk [vmem:[#allocation2 + $0x2c] sm:$0x1] %vm642, %v548
        %653 = vst.msk [vmem:[#allocation2 + $0x30] sm:$0xf] %vm639, %v549
        %654 = vst.msk [vmem:[#allocation2 + $0x34] sm:$0xf] %vm639, %v550
        %655 = vst.msk [vmem:[#allocation2 + $0x38] sm:$0x1] %vm642, %v551
        %656 = vst.msk [vmem:[#allocation2 + $0x3c] sm:$0xf] %vm639, %v552
        %657 = vst.msk [vmem:[#allocation2 + $0x40] sm:$0xf] %vm639, %v553
        %658 = vst.msk [vmem:[#allocation2 + $0x44] sm:$0x1] %vm642, %v554
        %659 = vst.msk [vmem:[#allocation2 + $0x48] sm:$0xf] %vm639, %v555
        %660 = vst.msk [vmem:[#allocation2 + $0x4c] sm:$0xf] %vm639, %v556
        %661 = vst.msk [vmem:[#allocation2 + $0x50] sm:$0x1] %vm642, %v557
        %662 = vst.msk [vmem:[#allocation2 + $0x54] sm:$0xf] %vm639, %v558
        %663 = vst.msk [vmem:[#allocation2 + $0x58] sm:$0xf] %vm639, %v559
        %664 = vst.msk [vmem:[#allocation2 + $0x5c] sm:$0x1] %vm642, %v560
        %665 = vst.msk [vmem:[#allocation2 + $0x60] sm:$0xf] %vm639, %v561
        %666 = vst.msk [vmem:[#allocation2 + $0x64] sm:$0xf] %vm639, %v562
        %667 = vst.msk [vmem:[#allocation2 + $0x68] sm:$0x1] %vm642, %v563
        %668 = vst.msk [vmem:[#allocation2 + $0x6c] sm:$0xf] %vm639, %v564
        %669 = vst.msk [vmem:[#allocation2 + $0x70] sm:$0xf] %vm639, %v565
        %670 = vst.msk [vmem:[#allocation2 + $0x74] sm:$0x1] %vm642, %v566
        %671 = vst.msk [vmem:[#allocation2 + $0x78] sm:$0xf] %vm639, %v567
        %672 = vst.msk [vmem:[#allocation2 + $0x7c] sm:$0xf] %vm639, %v568
        %673 = vst.msk [vmem:[#allocation2 + $0x80] sm:$0x1] %vm642, %v569
        %674 = vst.msk [vmem:[#allocation2 + $0x84] sm:$0xf] %vm639, %v570
        %675 = vst.msk [vmem:[#allocation2 + $0x88] sm:$0xf] %vm639, %v571
        %676 = vst.msk [vmem:[#allocation2 + $0x8c] sm:$0x1] %vm642, %v572
        %677 = vst.msk [vmem:[#allocation2 + $0x90] sm:$0xf] %vm639, %v573
        %678 = vst.msk [vmem:[#allocation2 + $0x94] sm:$0xf] %vm639, %v574
        %679 = vst.msk [vmem:[#allocation2 + $0x98] sm:$0x1] %vm642, %v575
        %680 = vst.msk [vmem:[#allocation2 + $0x9c] sm:$0xf] %vm639, %v576
        %681 = vst.msk [vmem:[#allocation2 + $0xa0] sm:$0xf] %vm639, %v577
        %682 = vst.msk [vmem:[#allocation2 + $0xa4] sm:$0x1] %vm642, %v578
        %683 = vst.msk [vmem:[#allocation2 + $0xa8] sm:$0xf] %vm639, %v579
        %684 = vst.msk [vmem:[#allocation2 + $0xac] sm:$0xf] %vm639, %v580
        %685 = vst.msk [vmem:[#allocation2 + $0xb0] sm:$0x1] %vm642, %v581
        %686 = vst.msk [vmem:[#allocation2 + $0xb4] sm:$0xf] %vm639, %v582
        %687 = vst.msk [vmem:[#allocation2 + $0xb8] sm:$0xf] %vm639, %v583
        %688 = vst.msk [vmem:[#allocation2 + $0xbc] sm:$0x1] %vm642, %v584
        %689 = vst.msk [vmem:[#allocation2 + $0xc0] sm:$0xf] %vm639, %v585
        %690 = vst.msk [vmem:[#allocation2 + $0xc4] sm:$0xf] %vm639, %v586
        %691 = vst.msk [vmem:[#allocation2 + $0xc8] sm:$0x1] %vm642, %v587
        %692 = vst.msk [vmem:[#allocation2 + $0xcc] sm:$0xf] %vm639, %v537
        %693 = vst.msk [vmem:[#allocation2 + $0xd0] sm:$0xf] %vm639, %v538
        %694 = vst.msk [vmem:[#allocation2 + $0xd4] sm:$0x1] %vm642, %v539
      $region32: #{basic_block_forward.3} parent=27 // pred_fallthru
        _
      %s695 = smul.u32 %s20, 8
      %s696 = smul.u32 %s695, 3
      %s697 = smul.addr %s696, 4
      %s698 = scalar_lea.vmem [#allocation2], %s697
      %v699 = vld [vmem:[%s698] sm:$0xf]
      %v700 = vld [vmem:[%s698 + $0x4] sm:$0xf]
      %v701 = vld [vmem:[%s698 + $0x8] sm:$0x1]
      %v702 = vld [vmem:[%s698 + $0xc] sm:$0xf]
      %v703 = vld [vmem:[%s698 + $0x10] sm:$0xf]
      %v704 = vld [vmem:[%s698 + $0x14] sm:$0x1]
      %v705 = vld [vmem:[%s698 + $0x18] sm:$0xf]
      %v706 = vld [vmem:[%s698 + $0x1c] sm:$0xf]
      %v707 = vld [vmem:[%s698 + $0x20] sm:$0x1]
      %v708 = vld [vmem:[%s698 + $0x24] sm:$0xf]
      %v709 = vld [vmem:[%s698 + $0x28] sm:$0xf]
      %v710 = vld [vmem:[%s698 + $0x2c] sm:$0x1]
      %v711 = vld [vmem:[%s698 + $0x30] sm:$0xf]
      %v712 = vld [vmem:[%s698 + $0x34] sm:$0xf]
      %v713 = vld [vmem:[%s698 + $0x38] sm:$0x1]
      %v714 = vld [vmem:[%s698 + $0x3c] sm:$0xf]
      %v715 = vld [vmem:[%s698 + $0x40] sm:$0xf]
      %v716 = vld [vmem:[%s698 + $0x44] sm:$0x1]
      %v717 = vld [vmem:[%s698 + $0x48] sm:$0xf]
      %v718 = vld [vmem:[%s698 + $0x4c] sm:$0xf]
      %v719 = vld [vmem:[%s698 + $0x50] sm:$0x1]
      %v720 = vld [vmem:[%s698 + $0x54] sm:$0xf]
      %v721 = vld [vmem:[%s698 + $0x58] sm:$0xf]
      %v722 = vld [vmem:[%s698 + $0x5c] sm:$0x1]
      %v723 = vld [vmem:[%s698 + $0x60] sm:$0xf]
      %v724 = vld [vmem:[%s698 + $0x64] sm:$0xf]
      %v725 = vld [vmem:[%s698 + $0x68] sm:$0x1]
      %v726 = vld [vmem:[%s698 + $0x6c] sm:$0xf]
      %v727 = vld [vmem:[%s698 + $0x70] sm:$0xf]
      %v728 = vld [vmem:[%s698 + $0x74] sm:$0x1]
      %vm729 = vsmask.f32 3328
      %vm730 = vsmask.f32 7440
      %vm731 = vmor %vm729, %vm730
      %v733 = vshrl.u32 %v699, 16
      %v735 = vrot.slane %v733, 4
      %v736 = vshll.u32 %v699, 16
      %v738 = vrot.slane %v736, 5
      %v739 = vor.u32 %v735, %v738
      %v740 = vrot.slane %v739, 4
      %v742 = vshll.u32 %v700, 16
      %v744 = vrot.slane %v742, 5
      %v745 = vsel %vm731, %v740, %v744
      %v746 = vshrl.u32 %v700, 16
      %v748 = vrot.slane %v746, 4
      %v749 = vor.u32 %v748, %v744
      %v750 = vrot.slane %v749, 4
      %v752 = vshll.u32 %v701, 16
      %v754 = vrot.slane %v752, 5
      %v755 = vsel %vm731, %v750, %v754
      %v757 = vshrl.u32 %v702, 16
      %v759 = vrot.slane %v757, 4
      %v760 = vshll.u32 %v702, 16
      %v762 = vrot.slane %v760, 5
      %v763 = vor.u32 %v759, %v762
      %v764 = vrot.slane %v763, 4
      %v766 = vshll.u32 %v703, 16
      %v768 = vrot.slane %v766, 5
      %v769 = vsel %vm731, %v764, %v768
      %v770 = vshrl.u32 %v703, 16
      %v772 = vrot.slane %v770, 4
      %v773 = vor.u32 %v772, %v768
      %v774 = vrot.slane %v773, 4
      %v776 = vshll.u32 %v704, 16
      %v778 = vrot.slane %v776, 5
      %v779 = vsel %vm731, %v774, %v778
      %v781 = vshrl.u32 %v705, 16
      %v783 = vrot.slane %v781, 4
      %v784 = vshll.u32 %v705, 16
      %v786 = vrot.slane %v784, 5
      %v787 = vor.u32 %v783, %v786
      %v788 = vrot.slane %v787, 4
      %v790 = vshll.u32 %v706, 16
      %v792 = vrot.slane %v790, 5
      %v793 = vsel %vm731, %v788, %v792
      %v794 = vshrl.u32 %v706, 16
      %v796 = vrot.slane %v794, 4
      %v797 = vor.u32 %v796, %v792
      %v798 = vrot.slane %v797, 4
      %v800 = vshll.u32 %v707, 16
      %v802 = vrot.slane %v800, 5
      %v803 = vsel %vm731, %v798, %v802
      %v805 = vshrl.u32 %v708, 16
      %v807 = vrot.slane %v805, 4
      %v808 = vshll.u32 %v708, 16
      %v810 = vrot.slane %v808, 5
      %v811 = vor.u32 %v807, %v810
      %v812 = vrot.slane %v811, 4
      %v814 = vshll.u32 %v709, 16
      %v816 = vrot.slane %v814, 5
      %v817 = vsel %vm731, %v812, %v816
      %v818 = vshrl.u32 %v709, 16
      %v820 = vrot.slane %v818, 4
      %v821 = vor.u32 %v820, %v816
      %v822 = vrot.slane %v821, 4
      %v824 = vshll.u32 %v710, 16
      %v826 = vrot.slane %v824, 5
      %v827 = vsel %vm731, %v822, %v826
      %v829 = vshrl.u32 %v711, 16
      %v831 = vrot.slane %v829, 4
      %v832 = vshll.u32 %v711, 16
      %v834 = vrot.slane %v832, 5
      %v835 = vor.u32 %v831, %v834
      %v836 = vrot.slane %v835, 4
      %v838 = vshll.u32 %v712, 16
      %v840 = vrot.slane %v838, 5
      %v841 = vsel %vm731, %v836, %v840
      %v842 = vshrl.u32 %v712, 16
      %v844 = vrot.slane %v842, 4
      %v845 = vor.u32 %v844, %v840
      %v846 = vrot.slane %v845, 4
      %v848 = vshll.u32 %v713, 16
      %v850 = vrot.slane %v848, 5
      %v851 = vsel %vm731, %v846, %v850
      %v853 = vshrl.u32 %v714, 16
      %v855 = vrot.slane %v853, 4
      %v856 = vshll.u32 %v714, 16
      %v858 = vrot.slane %v856, 5
      %v859 = vor.u32 %v855, %v858
      %v860 = vrot.slane %v859, 4
      %v862 = vshll.u32 %v715, 16
      %v864 = vrot.slane %v862, 5
      %v865 = vsel %vm731, %v860, %v864
      %v866 = vshrl.u32 %v715, 16
      %v868 = vrot.slane %v866, 4
      %v869 = vor.u32 %v868, %v864
      %v870 = vrot.slane %v869, 4
      %v872 = vshll.u32 %v716, 16
      %v874 = vrot.slane %v872, 5
      %v875 = vsel %vm731, %v870, %v874
      %v877 = vshrl.u32 %v717, 16
      %v879 = vrot.slane %v877, 4
      %v880 = vshll.u32 %v717, 16
      %v882 = vrot.slane %v880, 5
      %v883 = vor.u32 %v879, %v882
      %v884 = vrot.slane %v883, 4
      %v886 = vshll.u32 %v718, 16
      %v888 = vrot.slane %v886, 5
      %v889 = vsel %vm731, %v884, %v888
      %v890 = vshrl.u32 %v718, 16
      %v892 = vrot.slane %v890, 4
      %v893 = vor.u32 %v892, %v888
      %v894 = vrot.slane %v893, 4
      %v896 = vshll.u32 %v719, 16
      %v898 = vrot.slane %v896, 5
      %v899 = vsel %vm731, %v894, %v898
      %v901 = vshrl.u32 %v720, 16
      %v903 = vrot.slane %v901, 4
      %v904 = vshll.u32 %v720, 16
      %v906 = vrot.slane %v904, 5
      %v907 = vor.u32 %v903, %v906
      %v908 = vrot.slane %v907, 4
      %v910 = vshll.u32 %v721, 16
      %v912 = vrot.slane %v910, 5
      %v913 = vsel %vm731, %v908, %v912
      %v914 = vshrl.u32 %v721, 16
      %v916 = vrot.slane %v914, 4
      %v917 = vor.u32 %v916, %v912
      %v918 = vrot.slane %v917, 4
      %v920 = vshll.u32 %v722, 16
      %v922 = vrot.slane %v920, 5
      %v923 = vsel %vm731, %v918, %v922
      %vm948 = vcmask 1042432
      %vm949 = vcmask 1046532
      %vm950 = vmor %vm948, %vm949
      %v951 = vrot.slane %v699, 5
      %v952 = vrot.slane %v951, 4
      %v953 = vrot.slane %v700, 5
      %v954 = vsel %vm950, %v952, %v953
      %v955 = vrot.slane %v953, 4
      %v956 = vrot.slane %v701, 5
      %v957 = vsel %vm950, %v955, %v956
      %v958 = vrot.slane %v702, 5
      %v959 = vrot.slane %v958, 4
      %v960 = vrot.slane %v703, 5
      %v961 = vsel %vm950, %v959, %v960
      %v962 = vrot.slane %v960, 4
      %v963 = vrot.slane %v704, 5
      %v964 = vsel %vm950, %v962, %v963
      %v965 = vrot.slane %v705, 5
      %v966 = vrot.slane %v965, 4
      %v967 = vrot.slane %v706, 5
      %v968 = vsel %vm950, %v966, %v967
      %v969 = vrot.slane %v967, 4
      %v970 = vrot.slane %v707, 5
      %v971 = vsel %vm950, %v969, %v970
      %v972 = vrot.slane %v708, 5
      %v973 = vrot.slane %v972, 4
      %v974 = vrot.slane %v709, 5
      %v975 = vsel %vm950, %v973, %v974
      %v976 = vrot.slane %v974, 4
      %v977 = vrot.slane %v710, 5
      %v978 = vsel %vm950, %v976, %v977
      %v979 = vrot.slane %v711, 5
      %v980 = vrot.slane %v979, 4
      %v981 = vrot.slane %v712, 5
      %v982 = vsel %vm950, %v980, %v981
      %v983 = vrot.slane %v981, 4
      %v984 = vrot.slane %v713, 5
      %v985 = vsel %vm950, %v983, %v984
      %v986 = vrot.slane %v714, 5
      %v987 = vrot.slane %v986, 4
      %v988 = vrot.slane %v715, 5
      %v989 = vsel %vm950, %v987, %v988
      %v990 = vrot.slane %v988, 4
      %v991 = vrot.slane %v716, 5
      %v992 = vsel %vm950, %v990, %v991
      %v993 = vrot.slane %v717, 5
      %v994 = vrot.slane %v993, 4
      %v995 = vrot.slane %v718, 5
      %v996 = vsel %vm950, %v994, %v995
      %v997 = vrot.slane %v995, 4
      %v998 = vrot.slane %v719, 5
      %v999 = vsel %vm950, %v997, %v998
      %v1000 = vrot.slane %v720, 5
      %v1001 = vrot.slane %v1000, 4
      %v1002 = vrot.slane %v721, 5
      %v1003 = vsel %vm950, %v1001, %v1002
      %v1004 = vrot.slane %v1002, 4
      %v1005 = vrot.slane %v722, 5
      %v1006 = vsel %vm950, %v1004, %v1005
      %v1008 = vshrl.u32 %v723, 16
      %v1010 = vrot.slane %v1008, 4
      %v1011 = vshll.u32 %v723, 16
      %v1013 = vrot.slane %v1011, 5
      %v1014 = vor.u32 %v1010, %v1013
      %v1015 = vrot.slane %v1014, 4
      %v1017 = vshll.u32 %v724, 16
      %v1019 = vrot.slane %v1017, 5
      %v1020 = vsel %vm731, %v1015, %v1019
      %v1021 = vshrl.u32 %v724, 16
      %v1023 = vrot.slane %v1021, 4
      %v1024 = vor.u32 %v1023, %v1019
      %v1025 = vrot.slane %v1024, 4
      %v1027 = vshll.u32 %v725, 16
      %v1029 = vrot.slane %v1027, 5
      %v1030 = vsel %vm731, %v1025, %v1029
      %v1034 = vrot.slane %v723, 5
      %v1035 = vrot.slane %v1034, 4
      %v1036 = vrot.slane %v724, 5
      %v1037 = vsel %vm950, %v1035, %v1036
      %v1038 = vrot.slane %v1036, 4
      %v1039 = vrot.slane %v725, 5
      %v1040 = vsel %vm950, %v1038, %v1039
      %v1042 = vshrl.u32 %v726, 16
      %v1044 = vrot.slane %v1042, 4
      %v1045 = vshll.u32 %v726, 16
      %v1047 = vrot.slane %v1045, 5
      %v1048 = vor.u32 %v1044, %v1047
      %v1049 = vrot.slane %v1048, 4
      %v1051 = vshll.u32 %v727, 16
      %v1053 = vrot.slane %v1051, 5
      %v1054 = vsel %vm731, %v1049, %v1053
      %v1055 = vshrl.u32 %v727, 16
      %v1057 = vrot.slane %v1055, 4
      %v1058 = vor.u32 %v1057, %v1053
      %v1059 = vrot.slane %v1058, 4
      %v1061 = vshll.u32 %v728, 16
      %v1063 = vrot.slane %v1061, 5
      %v1064 = vsel %vm731, %v1059, %v1063
      %v1068 = vrot.slane %v726, 5
      %v1069 = vrot.slane %v1068, 4
      %v1070 = vrot.slane %v727, 5
      %v1071 = vsel %vm950, %v1069, %v1070
      %v1072 = vrot.slane %v1070, 4
      %v1073 = vrot.slane %v728, 5
      %v1074 = vsel %vm950, %v1072, %v1073
      %v1075 = vunpack.c.l.b16 %v699
      %v1076 = vunpack.c.l.b16 %v700
      %v1077 = vunpack.c.l.b16 %v702
      %v1078 = vunpack.c.l.b16 %v703
      %v1079 = vunpack.c.l.b16 %v705
      %v1080 = vunpack.c.l.b16 %v706
      %v1081 = vunpack.c.l.b16 %v708
      %v1082 = vunpack.c.l.b16 %v709
      %v1083 = vunpack.c.l.b16 %v711
      %v1084 = vunpack.c.l.b16 %v712
      %v1085 = vunpack.c.l.b16 %v714
      %v1086 = vunpack.c.l.b16 %v715
      %v1087 = vunpack.c.l.b16 %v717
      %v1088 = vunpack.c.l.b16 %v718
      %v1089 = vunpack.c.l.b16 %v720
      %v1090 = vunpack.c.l.b16 %v721
      %v1091 = vpack.c.b16 %v1076, %v1075
      %v1092 = vpack.c.b16 %v1078, %v1077
      %v1093 = vpack.c.b16 %v1080, %v1079
      %v1094 = vpack.c.b16 %v1082, %v1081
      %v1095 = vpack.c.b16 %v1084, %v1083
      %v1096 = vpack.c.b16 %v1086, %v1085
      %v1097 = vpack.c.b16 %v1088, %v1087
      %v1098 = vpack.c.b16 %v1090, %v1089
      %v1099 = vunpack.c.l.b16 %v745
      %v1100 = vunpack.c.l.b16 %v755
      %v1101 = vunpack.c.l.b16 %v769
      %v1102 = vunpack.c.l.b16 %v779
      %v1103 = vunpack.c.l.b16 %v793
      %v1104 = vunpack.c.l.b16 %v803
      %v1105 = vunpack.c.l.b16 %v817
      %v1106 = vunpack.c.l.b16 %v827
      %v1107 = vunpack.c.l.b16 %v841
      %v1108 = vunpack.c.l.b16 %v851
      %v1109 = vunpack.c.l.b16 %v865
      %v1110 = vunpack.c.l.b16 %v875
      %v1111 = vunpack.c.l.b16 %v889
      %v1112 = vunpack.c.l.b16 %v899
      %v1113 = vunpack.c.l.b16 %v913
      %v1114 = vunpack.c.l.b16 %v923
      %v1115 = vpack.c.b16 %v1100, %v1099
      %v1116 = vpack.c.b16 %v1102, %v1101
      %v1117 = vpack.c.b16 %v1104, %v1103
      %v1118 = vpack.c.b16 %v1106, %v1105
      %v1119 = vpack.c.b16 %v1108, %v1107
      %v1120 = vpack.c.b16 %v1110, %v1109
      %v1121 = vpack.c.b16 %v1112, %v1111
      %v1122 = vpack.c.b16 %v1114, %v1113
      %1123 = vrot.lane.b32.xlu0 %v1115, 8
      %v1124 = vpop.permute.xlu0 %1123
      %1125 = vrot.lane.b32.xlu0 %v1116, 8
      %v1126 = vpop.permute.xlu0 %1125
      %1127 = vrot.lane.b32.xlu0 %v1117, 8
      %v1128 = vpop.permute.xlu0 %1127
      %1129 = vrot.lane.b32.xlu0 %v1118, 8
      %v1130 = vpop.permute.xlu0 %1129
      %1131 = vrot.lane.b32.xlu0 %v1119, 8
      %v1132 = vpop.permute.xlu0 %1131
      %1133 = vrot.lane.b32.xlu0 %v1120, 8
      %v1134 = vpop.permute.xlu0 %1133
      %1135 = vrot.lane.b32.xlu0 %v1121, 8
      %v1136 = vpop.permute.xlu0 %1135
      %1137 = vrot.lane.b32.xlu0 %v1122, 8
      %v1138 = vpop.permute.xlu0 %1137
      %v1139 = vunpack.c.l.b16 %v954
      %v1140 = vunpack.c.l.b16 %v957
      %v1141 = vunpack.c.l.b16 %v961
      %v1142 = vunpack.c.l.b16 %v964
      %v1143 = vunpack.c.l.b16 %v968
      %v1144 = vunpack.c.l.b16 %v971
      %v1145 = vunpack.c.l.b16 %v975
      %v1146 = vunpack.c.l.b16 %v978
      %v1147 = vunpack.c.l.b16 %v982
      %v1148 = vunpack.c.l.b16 %v985
      %v1149 = vunpack.c.l.b16 %v989
      %v1150 = vunpack.c.l.b16 %v992
      %v1151 = vunpack.c.l.b16 %v996
      %v1152 = vunpack.c.l.b16 %v999
      %v1153 = vunpack.c.l.b16 %v1003
      %v1154 = vunpack.c.l.b16 %v1006
      %v1155 = vpack.c.b16 %v1140, %v1139
      %v1156 = vpack.c.b16 %v1142, %v1141
      %v1157 = vpack.c.b16 %v1144, %v1143
      %v1158 = vpack.c.b16 %v1146, %v1145
      %v1159 = vpack.c.b16 %v1148, %v1147
      %v1160 = vpack.c.b16 %v1150, %v1149
      %v1161 = vpack.c.b16 %v1152, %v1151
      %v1162 = vpack.c.b16 %v1154, %v1153
      %1163 = vrot.lane.b32.xlu0 %v1155, 16
      %v1164 = vpop.permute.xlu0 %1163
      %1165 = vrot.lane.b32.xlu0 %v1156, 16
      %v1166 = vpop.permute.xlu0 %1165
      %1167 = vrot.lane.b32.xlu0 %v1157, 16
      %v1168 = vpop.permute.xlu0 %1167
      %1169 = vrot.lane.b32.xlu0 %v1158, 16
      %v1170 = vpop.permute.xlu0 %1169
      %1171 = vrot.lane.b32.xlu0 %v1159, 16
      %v1172 = vpop.permute.xlu0 %1171
      %1173 = vrot.lane.b32.xlu0 %v1160, 16
      %v1174 = vpop.permute.xlu0 %1173
      %1175 = vrot.lane.b32.xlu0 %v1161, 16
      %v1176 = vpop.permute.xlu0 %1175
      %1177 = vrot.lane.b32.xlu0 %v1162, 16
      %v1178 = vpop.permute.xlu0 %1177
      %v1179 = vunpack.c.l.b16 %v723
      %v1180 = vunpack.c.l.b16 %v724
      %v1181 = vpack.c.b16 %v1180, %v1179
      %1182 = vrot.lane.b32.xlu0 %v1092, 24
      %v1183 = vpop.permute.xlu0 %1182
      %1184 = vrot.lane.b32.xlu0 %v1093, 24
      %v1185 = vpop.permute.xlu0 %1184
      %1186 = vrot.lane.b32.xlu0 %v1094, 24
      %v1187 = vpop.permute.xlu0 %1186
      %1188 = vrot.lane.b32.xlu0 %v1095, 24
      %v1189 = vpop.permute.xlu0 %1188
      %1190 = vrot.lane.b32.xlu0 %v1096, 24
      %v1191 = vpop.permute.xlu0 %1190
      %1192 = vrot.lane.b32.xlu0 %v1097, 24
      %v1193 = vpop.permute.xlu0 %1192
      %1194 = vrot.lane.b32.xlu0 %v1098, 24
      %v1195 = vpop.permute.xlu0 %1194
      %1196 = vrot.lane.b32.xlu0 %v1181, 24
      %v1197 = vpop.permute.xlu0 %1196
      %v1198 = vunpack.c.l.b16 %v1020
      %v1199 = vunpack.c.l.b16 %v1030
      %v1200 = vpack.c.b16 %v1199, %v1198
      %1201 = vrot.lane.b32.xlu0 %v1116, 32
      %v1202 = vpop.permute.xlu0 %1201
      %1203 = vrot.lane.b32.xlu0 %v1117, 32
      %v1204 = vpop.permute.xlu0 %1203
      %1205 = vrot.lane.b32.xlu0 %v1118, 32
      %v1206 = vpop.permute.xlu0 %1205
      %1207 = vrot.lane.b32.xlu0 %v1119, 32
      %v1208 = vpop.permute.xlu0 %1207
      %1209 = vrot.lane.b32.xlu0 %v1120, 32
      %v1210 = vpop.permute.xlu0 %1209
      %1211 = vrot.lane.b32.xlu0 %v1121, 32
      %v1212 = vpop.permute.xlu0 %1211
      %1213 = vrot.lane.b32.xlu0 %v1122, 32
      %v1214 = vpop.permute.xlu0 %1213
      %1215 = vrot.lane.b32.xlu0 %v1200, 32
      %v1216 = vpop.permute.xlu0 %1215
      %v1217 = vunpack.c.l.b16 %v1037
      %v1218 = vunpack.c.l.b16 %v1040
      %v1219 = vpack.c.b16 %v1218, %v1217
      %1220 = vrot.lane.b32.xlu0 %v1156, 40
      %v1221 = vpop.permute.xlu0 %1220
      %1222 = vrot.lane.b32.xlu0 %v1157, 40
      %v1223 = vpop.permute.xlu0 %1222
      %1224 = vrot.lane.b32.xlu0 %v1158, 40
      %v1225 = vpop.permute.xlu0 %1224
      %1226 = vrot.lane.b32.xlu0 %v1159, 40
      %v1227 = vpop.permute.xlu0 %1226
      %1228 = vrot.lane.b32.xlu0 %v1160, 40
      %v1229 = vpop.permute.xlu0 %1228
      %1230 = vrot.lane.b32.xlu0 %v1161, 40
      %v1231 = vpop.permute.xlu0 %1230
      %1232 = vrot.lane.b32.xlu0 %v1162, 40
      %v1233 = vpop.permute.xlu0 %1232
      %1234 = vrot.lane.b32.xlu0 %v1219, 40
      %v1235 = vpop.permute.xlu0 %1234
      %v1236 = vunpack.c.l.b16 %v726
      %v1237 = vunpack.c.l.b16 %v727
      %v1238 = vpack.c.b16 %v1237, %v1236
      %1239 = vrot.lane.b32.xlu0 %v1093, 48
      %v1240 = vpop.permute.xlu0 %1239
      %1241 = vrot.lane.b32.xlu0 %v1094, 48
      %v1242 = vpop.permute.xlu0 %1241
      %1243 = vrot.lane.b32.xlu0 %v1095, 48
      %v1244 = vpop.permute.xlu0 %1243
      %1245 = vrot.lane.b32.xlu0 %v1096, 48
      %v1246 = vpop.permute.xlu0 %1245
      %1247 = vrot.lane.b32.xlu0 %v1097, 48
      %v1248 = vpop.permute.xlu0 %1247
      %1249 = vrot.lane.b32.xlu0 %v1098, 48
      %v1250 = vpop.permute.xlu0 %1249
      %1251 = vrot.lane.b32.xlu0 %v1181, 48
      %v1252 = vpop.permute.xlu0 %1251
      %1253 = vrot.lane.b32.xlu0 %v1238, 48
      %v1254 = vpop.permute.xlu0 %1253
      %v1255 = vunpack.c.l.b16 %v1054
      %v1256 = vunpack.c.l.b16 %v1064
      %v1257 = vpack.c.b16 %v1256, %v1255
      %1258 = vrot.lane.b32.xlu0 %v1117, 56
      %v1259 = vpop.permute.xlu0 %1258
      %1260 = vrot.lane.b32.xlu0 %v1118, 56
      %v1261 = vpop.permute.xlu0 %1260
      %1262 = vrot.lane.b32.xlu0 %v1119, 56
      %v1263 = vpop.permute.xlu0 %1262
      %1264 = vrot.lane.b32.xlu0 %v1120, 56
      %v1265 = vpop.permute.xlu0 %1264
      %1266 = vrot.lane.b32.xlu0 %v1121, 56
      %v1267 = vpop.permute.xlu0 %1266
      %1268 = vrot.lane.b32.xlu0 %v1122, 56
      %v1269 = vpop.permute.xlu0 %1268
      %1270 = vrot.lane.b32.xlu0 %v1200, 56
      %v1271 = vpop.permute.xlu0 %1270
      %1272 = vrot.lane.b32.xlu0 %v1257, 56
      %v1273 = vpop.permute.xlu0 %1272
      %v1274 = vunpack.c.l.b16 %v1071
      %v1275 = vunpack.c.l.b16 %v1074
      %v1276 = vpack.c.b16 %v1275, %v1274
      %1277 = vrot.lane.b32.xlu0 %v1157, 64
      %v1278 = vpop.permute.xlu0 %1277
      %1279 = vrot.lane.b32.xlu0 %v1158, 64
      %v1280 = vpop.permute.xlu0 %1279
      %1281 = vrot.lane.b32.xlu0 %v1159, 64
      %v1282 = vpop.permute.xlu0 %1281
      %1283 = vrot.lane.b32.xlu0 %v1160, 64
      %v1284 = vpop.permute.xlu0 %1283
      %1285 = vrot.lane.b32.xlu0 %v1161, 64
      %v1286 = vpop.permute.xlu0 %1285
      %1287 = vrot.lane.b32.xlu0 %v1162, 64
      %v1288 = vpop.permute.xlu0 %1287
      %1289 = vrot.lane.b32.xlu0 %v1219, 64
      %v1290 = vpop.permute.xlu0 %1289
      %1291 = vrot.lane.b32.xlu0 %v1276, 64
      %v1292 = vpop.permute.xlu0 %1291
      %vm1293 = vcmask 64512
      %v1296 = vsel %vm1293, %v1091, %v1124
      %v1299 = vsel %vm1293, %v1092, %v1126
      %v1302 = vsel %vm1293, %v1093, %v1128
      %v1305 = vsel %vm1293, %v1094, %v1130
      %v1308 = vsel %vm1293, %v1095, %v1132
      %v1311 = vsel %vm1293, %v1096, %v1134
      %v1314 = vsel %vm1293, %v1097, %v1136
      %v1317 = vsel %vm1293, %v1098, %v1138
      %vm1318 = vcmask 130048
      %v1320 = vsel %vm1318, %v1296, %v1164
      %v1322 = vsel %vm1318, %v1299, %v1166
      %v1324 = vsel %vm1318, %v1302, %v1168
      %v1326 = vsel %vm1318, %v1305, %v1170
      %v1328 = vsel %vm1318, %v1308, %v1172
      %v1330 = vsel %vm1318, %v1311, %v1174
      %v1332 = vsel %vm1318, %v1314, %v1176
      %v1334 = vsel %vm1318, %v1317, %v1178
      %vm1335 = vcmask 195584
      %v1337 = vsel %vm1335, %v1320, %v1183
      %v1339 = vsel %vm1335, %v1322, %v1185
      %v1341 = vsel %vm1335, %v1324, %v1187
      %v1343 = vsel %vm1335, %v1326, %v1189
      %v1345 = vsel %vm1335, %v1328, %v1191
      %v1347 = vsel %vm1335, %v1330, %v1193
      %v1349 = vsel %vm1335, %v1332, %v1195
      %v1351 = vsel %vm1335, %v1334, %v1197
      %vm1352 = vcmask 261120
      %v1354 = vsel %vm1352, %v1337, %v1202
      %v1356 = vsel %vm1352, %v1339, %v1204
      %v1358 = vsel %vm1352, %v1341, %v1206
      %v1360 = vsel %vm1352, %v1343, %v1208
      %v1362 = vsel %vm1352, %v1345, %v1210
      %v1364 = vsel %vm1352, %v1347, %v1212
      %v1366 = vsel %vm1352, %v1349, %v1214
      %v1368 = vsel %vm1352, %v1351, %v1216
      %vm1369 = vcmask 326656
      %v1371 = vsel %vm1369, %v1354, %v1221
      %v1373 = vsel %vm1369, %v1356, %v1223
      %v1375 = vsel %vm1369, %v1358, %v1225
      %v1377 = vsel %vm1369, %v1360, %v1227
      %v1379 = vsel %vm1369, %v1362, %v1229
      %v1381 = vsel %vm1369, %v1364, %v1231
      %v1383 = vsel %vm1369, %v1366, %v1233
      %v1385 = vsel %vm1369, %v1368, %v1235
      %vm1386 = vcmask 392192
      %v1388 = vsel %vm1386, %v1371, %v1240
      %v1390 = vsel %vm1386, %v1373, %v1242
      %v1392 = vsel %vm1386, %v1375, %v1244
      %v1394 = vsel %vm1386, %v1377, %v1246
      %v1396 = vsel %vm1386, %v1379, %v1248
      %v1398 = vsel %vm1386, %v1381, %v1250
      %v1400 = vsel %vm1386, %v1383, %v1252
      %v1402 = vsel %vm1386, %v1385, %v1254
      %vm1403 = vcmask 457728
      %v1405 = vsel %vm1403, %v1388, %v1259
      %v1407 = vsel %vm1403, %v1390, %v1261
      %v1409 = vsel %vm1403, %v1392, %v1263
      %v1411 = vsel %vm1403, %v1394, %v1265
      %v1413 = vsel %vm1403, %v1396, %v1267
      %v1415 = vsel %vm1403, %v1398, %v1269
      %v1417 = vsel %vm1403, %v1400, %v1271
      %v1419 = vsel %vm1403, %v1402, %v1273
      %vm1420 = vcmask 523264
      %v1422 = vsel %vm1420, %v1405, %v1278
      %v1424 = vsel %vm1420, %v1407, %v1280
      %v1426 = vsel %vm1420, %v1409, %v1282
      %v1428 = vsel %vm1420, %v1411, %v1284
      %v1430 = vsel %vm1420, %v1413, %v1286
      %v1432 = vsel %vm1420, %v1415, %v1288
      %v1434 = vsel %vm1420, %v1417, %v1290
      %v1436 = vsel %vm1420, %v1419, %v1292
      %v1437 = vld [vmem:[%s1] sm:$0xf]
      %v1438 = vld [vmem:[%s1 + $0x4] sm:$0xf]
      %v1439 = vld [vmem:[%s1 + $0x8] sm:$0xf]
      %v1440 = vld [vmem:[%s1 + $0xc] sm:$0xf]
      %v1441 = vld [vmem:[%s1 + $0x10] sm:$0xf]
      %v1442 = vld [vmem:[%s1 + $0x14] sm:$0xf]
      %v1443 = vld [vmem:[%s1 + $0x18] sm:$0xf]
      %v1444 = vld [vmem:[%s1 + $0x1c] sm:$0xf]
      %v1445 = vld [vmem:[%s1 + $0x20] sm:$0xf]
      %v1455 = vunpack.c.l.b16 %v1437
      %v1456 = vunpack.c.l.b16 %v1438
      %v1457 = vunpack.c.l.b16 %v1439
      %v1458 = vunpack.c.l.b16 %v1440
      %v1459 = vunpack.c.l.b16 %v1441
      %v1460 = vunpack.c.l.b16 %v1442
      %v1461 = vunpack.c.l.b16 %v1443
      %v1462 = vunpack.c.l.b16 %v1444
      %v1463 = vunpack.c.l.b16 %v1445
      %v1464 = vpack.c.b16 %v1456, %v1455
      %v1465 = vpack.c.b16 %v1458, %v1457
      %v1466 = vpack.c.b16 %v1460, %v1459
      %v1467 = vpack.c.b16 %v1462, %v1461
      %v1468 = vpack.c.b16 %v1463, %v1463
      %vm1473 = vcmask 588800
      %v1474 = vsel %vm1473, %v1422, 0
      %v1476 = vsel %vm1473, %v1424, 0
      %v1478 = vsel %vm1473, %v1426, 0
      %v1480 = vsel %vm1473, %v1428, 0
      %v1482 = vsel %vm1473, %v1430, 0
      %v1484 = vsel %vm1473, %v1432, 0
      %v1486 = vsel %vm1473, %v1434, 0
      %v1488 = vsel %vm1473, %v1436, 0
      %vm1490 = vcmask 1043456
      %v1492 = vsel %vm1490, %v1468, 0
      %1494 = vmatprep.subr.bf16.mxu0 0
      %1495 = vmatpush1.bf16.msra.mxu0 %v1464
      %1496 = vmatprep.subr.bf16.mxu0 0
      %1497 = vmatpush1.bf16.msra.mxu0 %v1465
      %1498 = vmatprep.subr.bf16.mxu0 0
      %1499 = vmatpush1.bf16.msra.mxu0 %v1466
      %1500 = vmatprep.subr.bf16.mxu0 0
      %1501 = vmatpush1.bf16.msra.mxu0 %v1467
      %1502 = vmatprep.subr.bf16.mxu0 0
      %1503 = vmatpush1.bf16.msra.mxu0 %v1492
      %1504 = vmatprep.subr.bf16.mxu0 0
      %1505 = vmatpush1.bf16.msra.mxu0 0
      %1506 = vmatprep.subr.bf16.mxu0 0
      %1507 = vmatpush1.bf16.msra.mxu0 0
      %1508 = vmatprep.subr.bf16.mxu0 0
      %1509 = vmatpush1.bf16.msra.mxu0 0
      %1510 = vmatprep.subr.bf16.mxu0 0
      %1511 = vmatpush1.bf16.msra.mxu0 0
      %1512 = vmatprep.subr.bf16.mxu0 0
      %1513 = vmatpush1.bf16.msra.mxu0 0
      %1514 = vmatprep.subr.bf16.mxu0 0
      %1515 = vmatpush1.bf16.msra.mxu0 0
      %1516 = vmatprep.subr.bf16.mxu0 0
      %1517 = vmatpush1.bf16.msra.mxu0 0
      %1518 = vmatprep.subr.bf16.mxu0 0
      %1519 = vmatpush1.bf16.msra.mxu0 0
      %1520 = vmatprep.subr.bf16.mxu0 0
      %1521 = vmatpush1.bf16.msra.mxu0 0
      %1522 = vmatprep.subr.bf16.mxu0 0
      %1523 = vmatpush1.bf16.msra.mxu0 0
      %1524 = vmatprep.subr.bf16.mxu0 0
      %1525 = vmatpush1.bf16.msra.mxu0 0
      %1526 = vmatprep.mubr.bf16.mxu0 0
      %1527 = vmatmul.mubr.bf16.gmra.mrb[0].mxu0 %v1474
      %v1528 = vpop.f32.mrb[0].mxu0
      %v1529 = vadd.f32 0.0, %v1528
      %v1530 = vpop.f32.mrb[0].mxu0
      %v1531 = vpop.f32.mrb[0].mxu0
      %v1532 = vadd.f32 0.0, %v1531
      %v1533 = vpop.f32.mrb[0].mxu0
      %1534 = vmatprep.mubr.bf16.mxu0 0
      %1535 = vmatmul.mubr.bf16.gmra.mrb[0].mxu0 %v1476
      %v1536 = vpop.f32.mrb[0].mxu0
      %v1537 = vadd.f32 0.0, %v1536
      %v1538 = vpop.f32.mrb[0].mxu0
      %v1539 = vpop.f32.mrb[0].mxu0
      %v1540 = vadd.f32 0.0, %v1539
      %v1541 = vpop.f32.mrb[0].mxu0
      %1542 = vmatprep.mubr.bf16.mxu0 0
      %1543 = vmatmul.mubr.bf16.gmra.mrb[0].mxu0 %v1478
      %v1544 = vpop.f32.mrb[0].mxu0
      %v1545 = vadd.f32 0.0, %v1544
      %v1546 = vpop.f32.mrb[0].mxu0
      %v1547 = vpop.f32.mrb[0].mxu0
      %v1548 = vadd.f32 0.0, %v1547
      %v1549 = vpop.f32.mrb[0].mxu0
      %1550 = vmatprep.mubr.bf16.mxu0 0
      %1551 = vmatmul.mubr.bf16.gmra.mrb[0].mxu0 %v1480
      %v1552 = vpop.f32.mrb[0].mxu0
      %v1553 = vadd.f32 0.0, %v1552
      %v1554 = vpop.f32.mrb[0].mxu0
      %v1555 = vpop.f32.mrb[0].mxu0
      %v1556 = vadd.f32 0.0, %v1555
      %v1557 = vpop.f32.mrb[0].mxu0
      %1558 = vmatprep.mubr.bf16.mxu0 0
      %1559 = vmatmul.mubr.bf16.gmra.mrb[0].mxu0 %v1482
      %v1560 = vpop.f32.mrb[0].mxu0
      %v1561 = vadd.f32 0.0, %v1560
      %v1562 = vpop.f32.mrb[0].mxu0
      %v1563 = vpop.f32.mrb[0].mxu0
      %v1564 = vadd.f32 0.0, %v1563
      %v1565 = vpop.f32.mrb[0].mxu0
      %1566 = vmatprep.mubr.bf16.mxu0 0
      %1567 = vmatmul.mubr.bf16.gmra.mrb[0].mxu0 %v1484
      %v1568 = vpop.f32.mrb[0].mxu0
      %v1569 = vadd.f32 0.0, %v1568
      %v1570 = vpop.f32.mrb[0].mxu0
      %v1571 = vpop.f32.mrb[0].mxu0
      %v1572 = vadd.f32 0.0, %v1571
      %v1573 = vpop.f32.mrb[0].mxu0
      %1574 = vmatprep.mubr.bf16.mxu0 0
      %1575 = vmatmul.mubr.bf16.gmra.mrb[0].mxu0 %v1486
      %v1576 = vpop.f32.mrb[0].mxu0
      %v1577 = vadd.f32 0.0, %v1576
      %v1578 = vpop.f32.mrb[0].mxu0
      %v1579 = vpop.f32.mrb[0].mxu0
      %v1580 = vadd.f32 0.0, %v1579
      %v1581 = vpop.f32.mrb[0].mxu0
      %1582 = vmatprep.mubr.bf16.mxu0 0
      %1583 = vmatmul.mubr.bf16.gmra.mrb[0].mxu0 %v1488
      %v1584 = vpop.f32.mrb[0].mxu0
      %v1585 = vadd.f32 0.0, %v1584
      %v1586 = vpop.f32.mrb[0].mxu0
      %v1587 = vpop.f32.mrb[0].mxu0
      %v1588 = vadd.f32 0.0, %v1587
      %v1589 = vpop.f32.mrb[0].mxu0
      %1590 = vdwg.mxu0
      %v1591 = vld [vmem:[%s206] sm:$0x3]
      %v1592 = vsel %vm1293, %v1529, 0.0
      %v1593 = vsel %vm1293, %v1532, 0.0
      %v1594 = vadd.f32 %v1592, %v1593
      %v1595 = vsel %vm1293, %v1537, 0.0
      %v1596 = vadd.f32 %v1594, %v1595
      %v1597 = vsel %vm1293, %v1540, 0.0
      %v1598 = vadd.f32 %v1596, %v1597
      %v1599 = vsel %vm1293, %v1545, 0.0
      %v1600 = vadd.f32 %v1598, %v1599
      %v1601 = vsel %vm1293, %v1548, 0.0
      %v1602 = vadd.f32 %v1600, %v1601
      %v1603 = vsel %vm1293, %v1553, 0.0
      %v1604 = vadd.f32 %v1602, %v1603
      %v1605 = vsel %vm1293, %v1556, 0.0
      %v1606 = vadd.f32 %v1604, %v1605
      %v1607 = vsel %vm1293, %v1561, 0.0
      %v1608 = vadd.f32 %v1606, %v1607
      %v1609 = vsel %vm1293, %v1564, 0.0
      %v1610 = vadd.f32 %v1608, %v1609
      %v1611 = vsel %vm1293, %v1569, 0.0
      %v1612 = vadd.f32 %v1610, %v1611
      %v1613 = vsel %vm1293, %v1572, 0.0
      %v1614 = vadd.f32 %v1612, %v1613
      %v1615 = vsel %vm1293, %v1577, 0.0
      %v1616 = vadd.f32 %v1614, %v1615
      %v1617 = vsel %vm1293, %v1580, 0.0
      %v1618 = vadd.f32 %v1616, %v1617
      %v1619 = vsel %vm1293, %v1585, 0.0
      %v1620 = vadd.f32 %v1618, %v1619
      %v1621 = vsel %vm1293, %v1588, 0.0
      %v1622 = vadd.f32 %v1620, %v1621
      %v1623 = vrot.slane %v1622, 4
      %v1624 = vadd.f32 %v1622, %v1623
      %v1625 = vrot.slane %v1624, 2
      %v1626 = vadd.f32 %v1624, %v1625
      %v1627 = vrot.slane %v1626, 1
      %v1628 = vadd.f32 %v1626, %v1627
      %v1629 = vmul.f32 %v1529, %v1529
      %v1630 = vmul.f32 %v1532, %v1532
      %v1631 = vmul.f32 %v1537, %v1537
      %v1632 = vmul.f32 %v1540, %v1540
      %v1633 = vmul.f32 %v1545, %v1545
      %v1634 = vmul.f32 %v1548, %v1548
      %v1635 = vmul.f32 %v1553, %v1553
      %v1636 = vmul.f32 %v1556, %v1556
      %v1637 = vmul.f32 %v1561, %v1561
      %v1638 = vmul.f32 %v1564, %v1564
      %v1639 = vmul.f32 %v1569, %v1569
      %v1640 = vmul.f32 %v1572, %v1572
      %v1641 = vmul.f32 %v1577, %v1577
      %v1642 = vmul.f32 %v1580, %v1580
      %v1643 = vmul.f32 %v1585, %v1585
      %v1644 = vmul.f32 %v1588, %v1588
      %v1645 = vsel %vm1293, %v1629, 0.0
      %v1646 = vsel %vm1293, %v1630, 0.0
      %v1647 = vadd.f32 %v1645, %v1646
      %v1648 = vsel %vm1293, %v1631, 0.0
      %v1649 = vadd.f32 %v1647, %v1648
      %v1650 = vsel %vm1293, %v1632, 0.0
      %v1651 = vadd.f32 %v1649, %v1650
      %v1652 = vsel %vm1293, %v1633, 0.0
      %v1653 = vadd.f32 %v1651, %v1652
      %v1654 = vsel %vm1293, %v1634, 0.0
      %v1655 = vadd.f32 %v1653, %v1654
      %v1656 = vsel %vm1293, %v1635, 0.0
      %v1657 = vadd.f32 %v1655, %v1656
      %v1658 = vsel %vm1293, %v1636, 0.0
      %v1659 = vadd.f32 %v1657, %v1658
      %v1660 = vsel %vm1293, %v1637, 0.0
      %v1661 = vadd.f32 %v1659, %v1660
      %v1662 = vsel %vm1293, %v1638, 0.0
      %v1663 = vadd.f32 %v1661, %v1662
      %v1664 = vsel %vm1293, %v1639, 0.0
      %v1665 = vadd.f32 %v1663, %v1664
      %v1666 = vsel %vm1293, %v1640, 0.0
      %v1667 = vadd.f32 %v1665, %v1666
      %v1668 = vsel %vm1293, %v1641, 0.0
      %v1669 = vadd.f32 %v1667, %v1668
      %v1670 = vsel %vm1293, %v1642, 0.0
      %v1671 = vadd.f32 %v1669, %v1670
      %v1672 = vsel %vm1293, %v1643, 0.0
      %v1673 = vadd.f32 %v1671, %v1672
      %v1674 = vsel %vm1293, %v1644, 0.0
      %v1675 = vadd.f32 %v1673, %v1674
      %v1676 = vrot.slane %v1675, 4
      %v1677 = vadd.f32 %v1675, %v1676
      %v1678 = vrot.slane %v1677, 2
      %v1679 = vadd.f32 %v1677, %v1678
      %v1680 = vrot.slane %v1679, 1
      %v1681 = vadd.f32 %v1679, %v1680
      %vm1682 = vcmask 1040384
      %v1683 = vsel %vm1682, %v1628, %v1681
      %v1684 = vadd.f32 %v1591, %v1683
      %vm1685 = vcmask 58368
      %1686 = vst.msk [vmem:[%s206] sm:$0x3] %vm1685, %v1684
      %v1687 = vpack.c.bf16 %v1532, %v1529
      %v1688 = vpack.c.bf16 %v1540, %v1537
      %v1689 = vpack.c.bf16 %v1548, %v1545
      %v1690 = vpack.c.bf16 %v1556, %v1553
      %v1691 = vpack.c.bf16 %v1564, %v1561
      %v1692 = vpack.c.bf16 %v1572, %v1569
      %v1693 = vpack.c.bf16 %v1580, %v1577
      %v1694 = vpack.c.bf16 %v1588, %v1585
      %v1703 = vunpack.c.l.b16 %v1687
      %v1704 = vunpack.c.h.b16 %v1687
      %v1705 = vunpack.c.l.b16 %v1688
      %v1706 = vunpack.c.h.b16 %v1688
      %v1707 = vunpack.c.l.b16 %v1689
      %v1708 = vunpack.c.h.b16 %v1689
      %v1709 = vunpack.c.l.b16 %v1690
      %v1710 = vunpack.c.h.b16 %v1690
      %v1711 = vunpack.c.l.b16 %v1691
      %v1712 = vunpack.c.h.b16 %v1691
      %v1713 = vunpack.c.l.b16 %v1692
      %v1714 = vunpack.c.h.b16 %v1692
      %v1715 = vunpack.c.l.b16 %v1693
      %v1716 = vunpack.c.h.b16 %v1693
      %v1717 = vunpack.c.l.b16 %v1694
      %v1718 = vunpack.c.h.b16 %v1694
      %v1719 = vpack.c.b16 %v1703, %v1703
      %v1720 = vpack.c.b16 %v1704, %v1704
      %v1721 = vpack.c.b16 %v1705, %v1705
      %v1722 = vpack.c.b16 %v1706, %v1706
      %v1723 = vpack.c.b16 %v1707, %v1707
      %v1724 = vpack.c.b16 %v1708, %v1708
      %v1725 = vpack.c.b16 %v1709, %v1709
      %v1726 = vpack.c.b16 %v1710, %v1710
      %v1727 = vpack.c.b16 %v1711, %v1711
      %v1728 = vpack.c.b16 %v1712, %v1712
      %v1729 = vpack.c.b16 %v1713, %v1713
      %v1730 = vpack.c.b16 %v1714, %v1714
      %v1731 = vpack.c.b16 %v1715, %v1715
      %v1732 = vpack.c.b16 %v1716, %v1716
      %v1733 = vpack.c.b16 %v1717, %v1717
      %v1734 = vpack.c.b16 %v1718, %v1718
      %vm1751 = vcmask 60416
      %1752 = vst.msk [vmem:[%s201] sm:$0xf] %vm1751, %v1719
      %1753 = vst.msk [vmem:[%s201 + $0x4] sm:$0xf] %vm1751, %v1720
      %1754 = vst.msk [vmem:[%s201 + $0x8] sm:$0xf] %vm1751, %v1721
      %1755 = vst.msk [vmem:[%s201 + $0xc] sm:$0xf] %vm1751, %v1722
      %1756 = vst.msk [vmem:[%s201 + $0x10] sm:$0xf] %vm1751, %v1723
      %1757 = vst.msk [vmem:[%s201 + $0x14] sm:$0xf] %vm1751, %v1724
      %1758 = vst.msk [vmem:[%s201 + $0x18] sm:$0xf] %vm1751, %v1725
      %1759 = vst.msk [vmem:[%s201 + $0x1c] sm:$0xf] %vm1751, %v1726
      %1760 = vst.msk [vmem:[%s201 + $0x20] sm:$0xf] %vm1751, %v1727
      %1761 = vst.msk [vmem:[%s201 + $0x24] sm:$0xf] %vm1751, %v1728
      %1762 = vst.msk [vmem:[%s201 + $0x28] sm:$0xf] %vm1751, %v1729
      %1763 = vst.msk [vmem:[%s201 + $0x2c] sm:$0xf] %vm1751, %v1730
      %1764 = vst.msk [vmem:[%s201 + $0x30] sm:$0xf] %vm1751, %v1731
      %1765 = vst.msk [vmem:[%s201 + $0x34] sm:$0xf] %vm1751, %v1732
      %1766 = vst.msk [vmem:[%s201 + $0x38] sm:$0xf] %vm1751, %v1733
      %1767 = vst.msk [vmem:[%s201 + $0x3c] sm:$0xf] %vm1751, %v1734
      %s1768 = smul.u32 8, %s20
      %p1769 = scmp.lt.s32.totalorder %s19, 1
      %s1770 = scalar_select %p1769, %s19, 1
      %p1771 = scmp.lt.s32.totalorder %s1768, 15
      %s1772 = scalar_select %p1771, %s1768, 15
      %s1773 = smul.addr %s1772, 2
      %s1774 = smul.addr %s1770, 32
      %s1775 = sadd.s32 %s1773, %s1774
      %s1776 = smul.addr %s1775, 4
      %s1777 = scalar_lea.vmem %s2, %s1776
      %p1778 = scmp.lt.s32.totalorder %s19, 1
      %s1779 = scalar_select %p1778, %s19, 1
      %s1780 = smul.addr %s1779, 2
      %s1781 = scalar_lea.vmem %s3, %s1780
      // Predicated region
      $region33: #{basic_block_forward.3} parent=27 // pred_check
        %p1782 = pneg %p94
      $region34: #{basic_block_forward.3} parent=27 // pred_check_branch
        %1784 = sbr.rel (%p1782) target = $region36
      $region35: #{basic_block_forward.3} parent=27 // pred_region
        %s1785 = smul.u32 8, %s20
      $region36: #{basic_block_forward.3} parent=27 // pred_fallthru
        _
      // Predicated region
      $region37: #{basic_block_forward.3} parent=27 // pred_check
        %p1786 = pneg %p120
      $region38: #{basic_block_forward.3} parent=27 // pred_check_branch
        %1788 = sbr.rel (%p1786) target = $region40
      $region39: #{basic_block_forward.3} parent=27 // pred_region
        _
      $region40: #{basic_block_forward.3} parent=27 // pred_fallthru
        _
    $region28: #{basic_block_forward.3} parent=5 // pred_fallthru
      _
    %p1789 = scmp.le.s32.totalorder 2, %s10
    // Predicated region
    $region41: #{basic_block_forward.3} parent=5 // pred_check
      %p1790 = pneg %p1789
    $region42: #{basic_block_forward.3} parent=5 // pred_check_branch
      %1792 = sbr.rel (%p1790) target = $region44
    $region43: #{basic_block_forward.3} parent=5 // pred_region
      %s1793 = ssub.s32 %s10, 2
      // Predicated region
      $region45: #{basic_block_forward.3} parent=43 // pred_check
        %p1794 = pneg %p100
      $region46: #{basic_block_forward.3} parent=43 // pred_check_branch
        %1796 = sbr.rel (%p1794) target = $region48
      $region47: #{basic_block_forward.3} parent=43 // pred_region
        %s1797 = smul.u32 8, %s22
        %p1798 = scmp.lt.s32.totalorder %s21, 1
        %s1799 = scalar_select %p1798, %s21, 1
        %p1800 = scmp.lt.s32.totalorder %s1797, 15
        %s1801 = scalar_select %p1800, %s1797, 15
        %s1802 = smul.addr %s1801, 2
        %s1803 = smul.addr %s1799, 32
        %s1804 = sadd.s32 %s1802, %s1803
        %s1805 = smul.addr %s1804, 4
        %s1806 = scalar_lea.vmem %s2, %s1805
      $region48: #{basic_block_forward.3} parent=43 // pred_fallthru
        _
      // Predicated region
      $region49: #{basic_block_forward.3} parent=43 // pred_check
        %p1807 = pneg %p126
      $region50: #{basic_block_forward.3} parent=43 // pred_check_branch
        %1809 = sbr.rel (%p1807) target = $region52
      $region51: #{basic_block_forward.3} parent=43 // pred_region
        %p1810 = scmp.lt.s32.totalorder %s21, 1
        %s1811 = scalar_select %p1810, %s21, 1
        %s1812 = smul.addr %s1811, 2
        %s1813 = scalar_lea.vmem %s3, %s1812
      $region52: #{basic_block_forward.3} parent=43 // pred_fallthru
        _
    $region44: #{basic_block_forward.3} parent=5 // pred_fallthru
      _
  $region6: #{basic_block_forward.3} parent=0 // loop_footer
    %s14 = sadd.s32 1, %s10
  $region7: #{basic_block_forward.3} parent=0 // loop_footer_branch
    %9 = sbr.rel target = $region3
  $region8: #{basic_block_forward.3} parent=0 // loop_exit
    _

</llo_original>
